<compile_context>
chip_gen: v7x
topology: tpu7x:2x2x1
jax: 0.10.0
libtpu: 0.0.40
codegen_flags: <defaults>
</compile_context>

<pallas_src>
import functools

import jax
import jax.numpy as jnp
from jax import lax
from jax.experimental import pallas as pl
from jax.experimental.pallas import tpu as pltpu


def _conv3x3_stats_kernel(xpad_ref, w_ref, out_ref, stats_ref, col_ref, *, stride):
    """3x3 conv on a block of B_blk zero-padded images as a single im2col
    matmul, plus per-step partial per-channel sum / sum-of-squares of the conv
    output (training-mode BatchNorm statistics, reduced in the wrapper)."""
    bblk, ho, wo, cout = out_ref.shape
    cin = xpad_ref.shape[3]
    m = bblk * ho * wo

    xp = xpad_ref[...]                                   # (B_blk, Hp, Wp, Cin)

    # Pack the 9 shifted views into the (M, 9*cin) column scratch.
    # TODO(synk): for stride > 1, pre-apply space-to-depth in the wrapper so the
    # in-kernel slices stay contiguous (stride=1 is the tested path here).
    h_span = (ho - 1) * stride + 1
    w_span = (wo - 1) * stride + 1
    k = 0
    for dy in range(3):
        for dx in range(3):
            patch = xp[:, dy:dy + h_span:stride, dx:dx + w_span:stride, :]
            col_ref[:, k * cin:(k + 1) * cin] = patch.reshape(m, cin)
            k += 1

    # One fat MXU push (K = 9*cin) instead of nine K = cin pushes.
    acc = jnp.dot(col_ref[...], w_ref[...],
                  preferred_element_type=jnp.float32)    # (M, Cout)

    out_ref[...] = acc.reshape(bblk, ho, wo, cout)

    # Per-grid-step partial stats -> no cross-step accumulator, batch axis can
    # stay "parallel" (safe on v7x's two TensorCores).
    s = jnp.sum(acc, axis=0, keepdims=True)              # (1, Cout)
    sq = jnp.sum(acc * acc, axis=0, keepdims=True)       # (1, Cout)
    stats_ref[0] = jnp.concatenate([s, sq], axis=0)      # (2, Cout)


def _bn_silu_color_kernel(conv_ref, scale_ref, shift_ref, cf_ref, out_ref):
    """Pure-VPU epilogue on lane-dense (B_blk, ho, wo*cout) tiles:
    BatchNorm affine -> SiLU -> + 0.2 * per-image color feature (broadcast)."""
    y = conv_ref[...]                                    # (B_blk, Ho, Wo*Cout)
    yn = y * scale_ref[...] + shift_ref[...]             # BN (pre-tiled, period cout)
    d = 1.0 + jnp.exp(-yn)
    r = pl.reciprocal(d, approx=True)                    # EUP seed ...
    r = r * (2.0 - d * r)                                # ... + 1 Newton step (f32-accurate)
    out_ref[...] = yn * r + 0.2 * cf_ref[...]            # SiLU + color broadcast


def _pick_batch_block(n, per_image_bytes, budget_bytes=4 << 20):
    """Largest divisor of n whose per-step VMEM footprint stays under budget
    (conservative so double-buffering fits the default scoped VMEM on all gens)."""
    b = int(max(1, min(n, budget_bytes // max(per_image_bytes, 1))))
    while n % b:
        b -= 1
    return b


def color_aware_conv(x_nchw, w3, gamma, beta, wc, bc, *, stride=1, eps=1e-5):
    n, cin, h, w = x_nchw.shape
    cout = w3.shape[-1]
    assert h % 8 == 0 and w % 8 == 0, "AdaptiveAvgPool2d(8) with uniform bins only"

    x = jnp.transpose(x_nchw, (0, 2, 3, 1)).astype(jnp.float32)      # NHWC
    x_pad = jnp.pad(x, ((0, 0), (1, 1), (1, 1), (0, 0)))
    hp, wp = h + 2, w + 2
    ho = (h + 2 - 3) // stride + 1
    wo = (w + 2 - 3) // stride + 1

    # --- batch blocking ------------------------------------------------------
    lane = 128                                            # lane-padded f32 estimate
    per_img = 4 * lane * (hp * wp + 2 * ho * wo)          # xpad + conv_out + im2col scratch
    b_blk = _pick_batch_block(n, per_img)
    n_blocks = n // b_blk
    m_blk = b_blk * ho * wo

    w2 = w3.reshape(9 * cin, cout).astype(jnp.float32)    # (kh*kw*cin, cout)

    # --- kernel 1: im2col conv + partial BN stats ----------------------------
    conv_out, stats = pl.pallas_call(
        functools.partial(_conv3x3_stats_kernel, stride=stride),
        out_shape=(jax.ShapeDtypeStruct((n, ho, wo, cout), jnp.float32),
                   jax.ShapeDtypeStruct((n_blocks, 2, cout), jnp.float32)),
        grid=(n_blocks,),
        in_specs=[pl.BlockSpec((b_blk, hp, wp, cin), lambda b: (b, 0, 0, 0)),
                  pl.BlockSpec((9 * cin, cout), lambda b: (0, 0))],
        out_specs=(pl.BlockSpec((b_blk, ho, wo, cout), lambda b: (b, 0, 0, 0)),
                   pl.BlockSpec((1, 2, cout), lambda b: (b, 0, 0))),
        scratch_shapes=[pltpu.VMEM((m_blk, 9 * cin), jnp.float32)],
        compiler_params=pltpu.CompilerParams(
            dimension_semantics=("parallel",)),
    )(x_pad, w2)

    # --- JAX glue: fold training-mode BN into per-channel affine -------------
    count = n * ho * wo
    sums = jnp.sum(stats, axis=0)                         # (2, cout)
    mean = sums[0] / count
    # E[x^2] - E[x]^2 can go slightly negative under cancellation; clamp.
    var = jnp.maximum(sums[1] / count - mean * mean, 0.0)
    scale = gamma / jnp.sqrt(var + eps)
    shift = beta - mean * scale

    # Color branch (a few hundred FLOPs) in plain JAX:
    # AdaptiveAvgPool2d(8) == uniform-bin reshape-mean (h, w multiples of 8),
    # then 1x1 conv, then global mean; nearest interp from 1x1 == broadcast.
    pooled = x.reshape(n, 8, h // 8, 8, w // 8, cin).mean(axis=(2, 4))   # (n,8,8,cin)
    cs = pooled.reshape(n, 64, cin) @ wc + bc[None, None, :]             # (n,64,cout)
    cf = cs.mean(axis=1)                                                 # (n,cout)

    # --- kernel 2: lane-dense BN/SiLU/color epilogue --------------------------
    lanes = wo * cout
    conv_flat = conv_out.reshape(n, ho, lanes)            # free row-major re-view
    scale_t = jnp.tile(scale, wo).reshape(1, 1, lanes)
    shift_t = jnp.tile(shift, wo).reshape(1, 1, lanes)
    cf_t = jnp.tile(cf, (1, wo)).reshape(n, 1, lanes)

    out_flat = pl.pallas_call(
        _bn_silu_color_kernel,
        out_shape=jax.ShapeDtypeStruct((n, ho, lanes), jnp.float32),
        grid=(n_blocks,),
        in_specs=[pl.BlockSpec((b_blk, ho, lanes), lambda b: (b, 0, 0)),
                  pl.BlockSpec((1, 1, lanes), lambda b: (0, 0, 0)),
                  pl.BlockSpec((1, 1, lanes), lambda b: (0, 0, 0)),
                  pl.BlockSpec((b_blk, 1, lanes), lambda b: (b, 0, 0))],
        out_specs=pl.BlockSpec((b_blk, ho, lanes), lambda b: (b, 0, 0)),
        compiler_params=pltpu.CompilerParams(
            dimension_semantics=("parallel",)),
    )(conv_flat, scale_t, shift_t, cf_t)

    out = out_flat.reshape(n, ho, wo, cout)
    return jnp.transpose(out, (0, 3, 1, 2))               # back to NCHW


def reference_nchw(x, w3, gamma, beta, wc, bc, *, stride=1, eps=1e-5):
    """Pure-JAX NCHW reference mirroring the PyTorch forward (training-mode BN)."""
    n, cin, h, w = x.shape
    w_oihw = jnp.transpose(w3, (3, 2, 0, 1))
    out = lax.conv_general_dilated(x, w_oihw, (stride, stride), ((1, 1), (1, 1)),
                                   dimension_numbers=("NCHW", "OIHW", "NCHW"))
    m = out.mean(axis=(0, 2, 3))
    v = out.var(axis=(0, 2, 3))
    out = ((out - m[None, :, None, None]) / jnp.sqrt(v + eps)[None, :, None, None]
           * gamma[None, :, None, None] + beta[None, :, None, None])
    out = out * jax.nn.sigmoid(out)
    pooled = x.reshape(n, cin, 8, h // 8, 8, w // 8).mean(axis=(3, 5))
    cs = jnp.einsum("nchw,cf->nfhw", pooled, wc) + bc[None, :, None, None]
    cf = cs.mean(axis=(2, 3), keepdims=True)              # (N, Cout, 1, 1)
    return out + 0.2 * cf                                 # nearest interp == broadcast


if __name__ == "__main__":
    N, CIN, H, W, COUT = 2, 4, 16, 16, 8
    key = jax.random.PRNGKey(0)
    k0, k1, k2, k3, k4, k5 = jax.random.split(key, 6)

    x = jax.random.normal(k0, (N, CIN, H, W), jnp.float32)
    w3 = 0.1 * jax.random.normal(k1, (3, 3, CIN, COUT), jnp.float32)   # conv3x3, no bias
    gamma = 1.0 + 0.1 * jax.random.normal(k2, (COUT,), jnp.float32)    # bn weight
    beta = 0.1 * jax.random.normal(k3, (COUT,), jnp.float32)           # bn bias
    wc = 0.1 * jax.random.normal(k4, (CIN, COUT), jnp.float32)         # color 1x1 conv weight
    bc = 0.1 * jax.random.normal(k5, (COUT,), jnp.float32)             # color 1x1 conv bias

    out = color_aware_conv(x, w3, gamma, beta, wc, bc)
    out = jax.block_until_ready(out)

    ref = reference_nchw(x, w3, gamma, beta, wc, bc)
    assert out.shape == (N, COUT, H, W), out.shape
    # Tolerance has a small margin for the EUP approximate-reciprocal SiLU
    # (one Newton refinement keeps it near f32 accuracy).
    if not jnp.allclose(out, ref, atol=5e-4, rtol=1e-3):
        raise AssertionError(
            f"mismatch: max abs err {float(jnp.max(jnp.abs(out - ref)))}")
    print("KERNEL_OK")
</pallas_src>

<mosaic_0001>
module attributes {stable_mosaic.version = 11 : i64} {
  func.func @_conv3x3_stats_kernel(%arg0: i32, %arg1: memref<2x18x18x4xf32, #tpu.memory_space<vmem>>, %arg2: memref<36x8xf32, #tpu.memory_space<vmem>>, %arg3: memref<2x16x16x8xf32, #tpu.memory_space<vmem>>, %arg4: memref<1x2x8xf32, #tpu.memory_space<vmem>>, %arg5: memref<512x36xf32, #tpu.memory_space<vmem>>) attributes {dimension_semantics = [#tpu.dimension_semantics<parallel>], iteration_bounds = array<i64: 1>, scalar_prefetch = 0 : i64, scratch_operands = 1 : i64, tpu.core_type = #tpu.core_type<tc>, window_params = [{transform_indices = @transform_0, window_bounds = array<i64: 2, 18, 18, 4>}, {pipeline_mode = #tpu.pipeline_mode<synchronous>, transform_indices = @transform_1, window_bounds = array<i64: 36, 8>}, {transform_indices = @transform_2, window_bounds = array<i64: 2, 16, 16, 8>}, {transform_indices = @transform_3, window_bounds = array<i64: 1, 2, 8>}]} {
    %c0 = arith.constant 0 : index
    %c0_0 = arith.constant 0 : index
    %c0_1 = arith.constant 0 : index
    %c0_2 = arith.constant 0 : index
    %0 = vector.load %arg1[%c0, %c0_0, %c0_1, %c0_2] : memref<2x18x18x4xf32, #tpu.memory_space<vmem>>, vector<2x18x18x4xf32>
    %1 = vector.extract_strided_slice %0 {offsets = [0, 0, 0, 0], sizes = [2, 16, 16, 4], strides = [1, 1, 1, 1]} : vector<2x18x18x4xf32> to vector<2x16x16x4xf32>
    %2 = vector.shape_cast %1 : vector<2x16x16x4xf32> to vector<512x4xf32>
    %c0_3 = arith.constant 0 : index
    %c0_4 = arith.constant 0 : index
    %3 = vector.load %arg5[%c0_3, %c0_4] : memref<512x36xf32, #tpu.memory_space<vmem>>, vector<512x4xf32>
    tpu.vector_store %arg5[%c0_3, %c0_4], %2 {strides = array<i32>} : memref<512x36xf32, #tpu.memory_space<vmem>>, vector<512x4xf32>,
    %4 = vector.extract_strided_slice %0 {offsets = [0, 0, 1, 0], sizes = [2, 16, 16, 4], strides = [1, 1, 1, 1]} : vector<2x18x18x4xf32> to vector<2x16x16x4xf32>
    %5 = vector.shape_cast %4 : vector<2x16x16x4xf32> to vector<512x4xf32>
    %c0_5 = arith.constant 0 : index
    %c4 = arith.constant 4 : index
    %6 = vector.load %arg5[%c0_5, %c4] : memref<512x36xf32, #tpu.memory_space<vmem>>, vector<512x4xf32>
    tpu.vector_store %arg5[%c0_5, %c4], %5 {strides = array<i32>} : memref<512x36xf32, #tpu.memory_space<vmem>>, vector<512x4xf32>,
    %7 = vector.extract_strided_slice %0 {offsets = [0, 0, 2, 0], sizes = [2, 16, 16, 4], strides = [1, 1, 1, 1]} : vector<2x18x18x4xf32> to vector<2x16x16x4xf32>
    %8 = vector.shape_cast %7 : vector<2x16x16x4xf32> to vector<512x4xf32>
    %c0_6 = arith.constant 0 : index
    %c8 = arith.constant 8 : index
    %9 = vector.load %arg5[%c0_6, %c8] : memref<512x36xf32, #tpu.memory_space<vmem>>, vector<512x4xf32>
    tpu.vector_store %arg5[%c0_6, %c8], %8 {strides = array<i32>} : memref<512x36xf32, #tpu.memory_space<vmem>>, vector<512x4xf32>,
    %10 = vector.extract_strided_slice %0 {offsets = [0, 1, 0, 0], sizes = [2, 16, 16, 4], strides = [1, 1, 1, 1]} : vector<2x18x18x4xf32> to vector<2x16x16x4xf32>
    %11 = vector.shape_cast %10 : vector<2x16x16x4xf32> to vector<512x4xf32>
    %c0_7 = arith.constant 0 : index
    %c12 = arith.constant 12 : index
    %12 = vector.load %arg5[%c0_7, %c12] : memref<512x36xf32, #tpu.memory_space<vmem>>, vector<512x4xf32>
    tpu.vector_store %arg5[%c0_7, %c12], %11 {strides = array<i32>} : memref<512x36xf32, #tpu.memory_space<vmem>>, vector<512x4xf32>,
    %13 = vector.extract_strided_slice %0 {offsets = [0, 1, 1, 0], sizes = [2, 16, 16, 4], strides = [1, 1, 1, 1]} : vector<2x18x18x4xf32> to vector<2x16x16x4xf32>
    %14 = vector.shape_cast %13 : vector<2x16x16x4xf32> to vector<512x4xf32>
    %c0_8 = arith.constant 0 : index
    %c16 = arith.constant 16 : index
    %15 = vector.load %arg5[%c0_8, %c16] : memref<512x36xf32, #tpu.memory_space<vmem>>, vector<512x4xf32>
    tpu.vector_store %arg5[%c0_8, %c16], %14 {strides = array<i32>} : memref<512x36xf32, #tpu.memory_space<vmem>>, vector<512x4xf32>,
    %16 = vector.extract_strided_slice %0 {offsets = [0, 1, 2, 0], sizes = [2, 16, 16, 4], strides = [1, 1, 1, 1]} : vector<2x18x18x4xf32> to vector<2x16x16x4xf32>
    %17 = vector.shape_cast %16 : vector<2x16x16x4xf32> to vector<512x4xf32>
    %c0_9 = arith.constant 0 : index
    %c20 = arith.constant 20 : index
    %18 = vector.load %arg5[%c0_9, %c20] : memref<512x36xf32, #tpu.memory_space<vmem>>, vector<512x4xf32>
    tpu.vector_store %arg5[%c0_9, %c20], %17 {strides = array<i32>} : memref<512x36xf32, #tpu.memory_space<vmem>>, vector<512x4xf32>,
    %19 = vector.extract_strided_slice %0 {offsets = [0, 2, 0, 0], sizes = [2, 16, 16, 4], strides = [1, 1, 1, 1]} : vector<2x18x18x4xf32> to vector<2x16x16x4xf32>
    %20 = vector.shape_cast %19 : vector<2x16x16x4xf32> to vector<512x4xf32>
    %c0_10 = arith.constant 0 : index
    %c24 = arith.constant 24 : index
    %21 = vector.load %arg5[%c0_10, %c24] : memref<512x36xf32, #tpu.memory_space<vmem>>, vector<512x4xf32>
    tpu.vector_store %arg5[%c0_10, %c24], %20 {strides = array<i32>} : memref<512x36xf32, #tpu.memory_space<vmem>>, vector<512x4xf32>,
    %22 = vector.extract_strided_slice %0 {offsets = [0, 2, 1, 0], sizes = [2, 16, 16, 4], strides = [1, 1, 1, 1]} : vector<2x18x18x4xf32> to vector<2x16x16x4xf32>
    %23 = vector.shape_cast %22 : vector<2x16x16x4xf32> to vector<512x4xf32>
    %c0_11 = arith.constant 0 : index
    %c28 = arith.constant 28 : index
    %24 = vector.load %arg5[%c0_11, %c28] : memref<512x36xf32, #tpu.memory_space<vmem>>, vector<512x4xf32>
    tpu.vector_store %arg5[%c0_11, %c28], %23 {strides = array<i32>} : memref<512x36xf32, #tpu.memory_space<vmem>>, vector<512x4xf32>,
    %25 = vector.extract_strided_slice %0 {offsets = [0, 2, 2, 0], sizes = [2, 16, 16, 4], strides = [1, 1, 1, 1]} : vector<2x18x18x4xf32> to vector<2x16x16x4xf32>
    %26 = vector.shape_cast %25 : vector<2x16x16x4xf32> to vector<512x4xf32>
    %c0_12 = arith.constant 0 : index
    %c32 = arith.constant 32 : index
    %27 = vector.load %arg5[%c0_12, %c32] : memref<512x36xf32, #tpu.memory_space<vmem>>, vector<512x4xf32>
    tpu.vector_store %arg5[%c0_12, %c32], %26 {strides = array<i32>} : memref<512x36xf32, #tpu.memory_space<vmem>>, vector<512x4xf32>,
    %c0_13 = arith.constant 0 : index
    %c0_14 = arith.constant 0 : index
    %28 = vector.load %arg5[%c0_13, %c0_14] : memref<512x36xf32, #tpu.memory_space<vmem>>, vector<512x36xf32>
    %c0_15 = arith.constant 0 : index
    %c0_16 = arith.constant 0 : index
    %29 = vector.load %arg2[%c0_15, %c0_16] : memref<36x8xf32, #tpu.memory_space<vmem>>, vector<36x8xf32>
    %cst = arith.constant dense<0.000000e+00> : vector<512x8xf32>
    %30 = tpu.matmul %28, %29, %cst {dimension_numbers = #tpu.dot_dimension_numbers<[1], [0], [0], [1], [0, 0, 1, 1], [], []>} : vector<512x36xf32>, vector<36x8xf32>, vector<512x8xf32> -> vector<512x8xf32>
    %31 = vector.shape_cast %30 : vector<512x8xf32> to vector<2x16x16x8xf32>
    %c0_17 = arith.constant 0 : index
    %c0_18 = arith.constant 0 : index
    %c0_19 = arith.constant 0 : index
    %c0_20 = arith.constant 0 : index
    %32 = vector.load %arg3[%c0_17, %c0_18, %c0_19, %c0_20] : memref<2x16x16x8xf32, #tpu.memory_space<vmem>>, vector<2x16x16x8xf32>
    tpu.vector_store %arg3[%c0_17, %c0_18, %c0_19, %c0_20], %31 {strides = array<i32>} : memref<2x16x16x8xf32, #tpu.memory_space<vmem>>, vector<2x16x16x8xf32>,
    %cst_21 = arith.constant dense<0.000000e+00> : vector<8xf32>
    %33 = vector.multi_reduction <add>, %30, %cst_21 [0] : vector<512x8xf32> to vector<8xf32>
    %34 = vector.shape_cast %33 : vector<8xf32> to vector<1x8xf32>
    %35 = arith.mulf %30, %30 : vector<512x8xf32>
    %cst_22 = arith.constant dense<0.000000e+00> : vector<8xf32>
    %36 = vector.multi_reduction <add>, %35, %cst_22 [0] : vector<512x8xf32> to vector<8xf32>
    %37 = vector.shape_cast %36 : vector<8xf32> to vector<1x8xf32>
    %38 = tpu.concatenate %34, %37 in 0 : vector<1x8xf32>, vector<1x8xf32> -> vector<2x8xf32>
    %c0_23 = arith.constant 0 : index
    %c0_24 = arith.constant 0 : index
    %c0_25 = arith.constant 0 : index
    %39 = vector.load %arg4[%c0_23, %c0_24, %c0_25] : memref<1x2x8xf32, #tpu.memory_space<vmem>>, vector<1x2x8xf32>
    %40 = vector.shape_cast %39 : vector<1x2x8xf32> to vector<2x8xf32>
    %41 = vector.shape_cast %38 : vector<2x8xf32> to vector<1x2x8xf32>
    tpu.vector_store %arg4[%c0_23, %c0_24, %c0_25], %41 {strides = array<i32>} : memref<1x2x8xf32, #tpu.memory_space<vmem>>, vector<1x2x8xf32>,
    return
  }
  func.func @transform_0(%arg0: i32) -> (i32, i32, i32, i32) {
    %c0_i32 = arith.constant 0 : i32
    %c0_i32_0 = arith.constant 0 : i32
    %c0_i32_1 = arith.constant 0 : i32
    %c0_i32_2 = arith.constant 0 : i32
    return %arg0, %c0_i32, %c0_i32_0, %c0_i32_1 : i32, i32, i32, i32
  }
  func.func @transform_1(%arg0: i32) -> (i32, i32) {
    %c0_i32 = arith.constant 0 : i32
    %c0_i32_0 = arith.constant 0 : i32
    %c0_i32_1 = arith.constant 0 : i32
    return %c0_i32, %c0_i32_0 : i32, i32
  }
  func.func @transform_2(%arg0: i32) -> (i32, i32, i32, i32) {
    %c0_i32 = arith.constant 0 : i32
    %c0_i32_0 = arith.constant 0 : i32
    %c0_i32_1 = arith.constant 0 : i32
    %c0_i32_2 = arith.constant 0 : i32
    return %arg0, %c0_i32, %c0_i32_0, %c0_i32_1 : i32, i32, i32, i32
  }
  func.func @transform_3(%arg0: i32) -> (i32, i32, i32) {
    %c0_i32 = arith.constant 0 : i32
    %c0_i32_0 = arith.constant 0 : i32
    %c0_i32_1 = arith.constant 0 : i32
    return %arg0, %c0_i32, %c0_i32_0 : i32, i32, i32
  }
}

</mosaic_0001>

<llo_original>
// kernel: tpu_custom_call.1
$region0: #{tpu_custom_call.1}
  #allocation0 [shape = 'u32[]', space=smem, size = 0x4, offset = 0x4, fixed_abs, tag = 'smem constant byte address 0x4 - core index']
  #allocation1 [shape = 'u32[144,128]{1,0:T(1,128)}', space=vmem, size = 0x12000, scoped, tag = 'internal scratch']
  #allocation2 [shape = 'f32[512,36]{1,0:T(8,128)}', space=vmem, size = 0x40000, scoped, tag = 'scratch operand']
  %s0 = inlined_call_operand.vmem [shape: f32[2,18,18,4], index: 0, kind: input, shape index: {}]
  %s1 = inlined_call_operand.vmem [shape: f32[36,8], index: 1, kind: input, shape index: {}]
  %s2 = inlined_call_operand.vmem [shape: f32[2,16,16,8], index: 2, kind: output, shape index: {0}]
  %s3 = inlined_call_operand.hbm [shape: f32[1,2,8], index: 3, kind: output, shape index: {1}]
  %4 = xla_tuple %s2, %s3
  %s5 = sld [smem:[#allocation0]]
  $region26: #{tpu_custom_call.1} parent=0
    _
  %s7 = ssub.s32 1, %s5
  %s8 = scalar_select 0, %s7, %s5
  $region1: #{tpu_custom_call.1} parent=0
    #allocation3 [shape = 'u8[1024]{0}', space=vmem, size = 0x400, scoped, tag = 'output window, operand 1, single buffered']
    #allocation4 [shape = 's32[1]{0}', space=sflag, size = 0x4, scoped, tag = 'scoped memory for tpu_custom_call.1']
    %9 = vsyncpa [#allocation4], 0
    // Predicated region
    $region2: #{tpu_custom_call.1} parent=1 // pred_check
      _
    $region3: #{tpu_custom_call.1} parent=1 // pred_check_branch
      %11 = sbr.rel (0) target = $region5
    $region4: #{tpu_custom_call.1} parent=1 // pred_region
      _
    $region5: #{tpu_custom_call.1} parent=1 // pred_fallthru
      _
    // Predicated region
    $region6: #{tpu_custom_call.1} parent=1 // pred_check
      _
    $region7: #{tpu_custom_call.1} parent=1 // pred_check_branch
      %13 = sbr.rel (0) target = $region9
    $region8: #{tpu_custom_call.1} parent=1 // pred_region
      _
    $region9: #{tpu_custom_call.1} parent=1 // pred_fallthru
      _
    %v14 = vld [vmem:[%s0] sm:$0xff]
    %v15 = vld [vmem:[%s0 + $0x8] sm:$0xff]
    %v16 = vld [vmem:[%s0 + $0x10] sm:$0x3]
    %v17 = vld [vmem:[%s0 + $0x18] sm:$0xff]
    %v18 = vld [vmem:[%s0 + $0x20] sm:$0xff]
    %v19 = vld [vmem:[%s0 + $0x28] sm:$0x3]
    %v20 = vld [vmem:[%s0 + $0x30] sm:$0xff]
    %v21 = vld [vmem:[%s0 + $0x38] sm:$0xff]
    %v22 = vld [vmem:[%s0 + $0x40] sm:$0x3]
    %v23 = vld [vmem:[%s0 + $0x48] sm:$0xff]
    %v24 = vld [vmem:[%s0 + $0x50] sm:$0xff]
    %v25 = vld [vmem:[%s0 + $0x58] sm:$0x3]
    %v26 = vld [vmem:[%s0 + $0x60] sm:$0xff]
    %v27 = vld [vmem:[%s0 + $0x68] sm:$0xff]
    %v28 = vld [vmem:[%s0 + $0x70] sm:$0x3]
    %v29 = vld [vmem:[%s0 + $0x78] sm:$0xff]
    %v30 = vld [vmem:[%s0 + $0x80] sm:$0xff]
    %v31 = vld [vmem:[%s0 + $0x88] sm:$0x3]
    %v32 = vld [vmem:[%s0 + $0x90] sm:$0xff]
    %v33 = vld [vmem:[%s0 + $0x98] sm:$0xff]
    %v34 = vld [vmem:[%s0 + $0xa0] sm:$0x3]
    %v35 = vld [vmem:[%s0 + $0xa8] sm:$0xff]
    %v36 = vld [vmem:[%s0 + $0xb0] sm:$0xff]
    %v37 = vld [vmem:[%s0 + $0xb8] sm:$0x3]
    %v38 = vld [vmem:[%s0 + $0xc0] sm:$0xff]
    %v39 = vld [vmem:[%s0 + $0xc8] sm:$0xff]
    %v40 = vld [vmem:[%s0 + $0xd0] sm:$0x3]
    %v41 = vld [vmem:[%s0 + $0xd8] sm:$0xff]
    %v42 = vld [vmem:[%s0 + $0xe0] sm:$0xff]
    %v43 = vld [vmem:[%s0 + $0xe8] sm:$0x3]
    %v44 = vld [vmem:[%s0 + $0xf0] sm:$0xff]
    %v45 = vld [vmem:[%s0 + $0xf8] sm:$0xff]
    %v46 = vld [vmem:[%s0 + $0x100] sm:$0x3]
    %v47 = vld [vmem:[%s0 + $0x108] sm:$0xff]
    %v48 = vld [vmem:[%s0 + $0x110] sm:$0xff]
    %v49 = vld [vmem:[%s0 + $0x118] sm:$0x3]
    %v50 = vld [vmem:[%s0 + $0x120] sm:$0xff]
    %v51 = vld [vmem:[%s0 + $0x128] sm:$0xff]
    %v52 = vld [vmem:[%s0 + $0x130] sm:$0x3]
    %v53 = vld [vmem:[%s0 + $0x138] sm:$0xff]
    %v54 = vld [vmem:[%s0 + $0x140] sm:$0xff]
    %v55 = vld [vmem:[%s0 + $0x148] sm:$0x3]
    %v56 = vld [vmem:[%s0 + $0x150] sm:$0xff]
    %v57 = vld [vmem:[%s0 + $0x158] sm:$0xff]
    %v58 = vld [vmem:[%s0 + $0x160] sm:$0x3]
    %v59 = vld [vmem:[%s0 + $0x168] sm:$0xff]
    %v60 = vld [vmem:[%s0 + $0x170] sm:$0xff]
    %v61 = vld [vmem:[%s0 + $0x178] sm:$0x3]
    %v62 = vld [vmem:[%s0 + $0x180] sm:$0xff]
    %v63 = vld [vmem:[%s0 + $0x188] sm:$0xff]
    %v64 = vld [vmem:[%s0 + $0x190] sm:$0x3]
    %v65 = vld [vmem:[%s0 + $0x198] sm:$0xff]
    %v66 = vld [vmem:[%s0 + $0x1a0] sm:$0xff]
    %v67 = vld [vmem:[%s0 + $0x1a8] sm:$0x3]
    %v68 = vld [vmem:[%s0 + $0x1b0] sm:$0xff]
    %v69 = vld [vmem:[%s0 + $0x1b8] sm:$0xff]
    %v70 = vld [vmem:[%s0 + $0x1c0] sm:$0x3]
    %v71 = vld [vmem:[%s0 + $0x1c8] sm:$0xff]
    %v72 = vld [vmem:[%s0 + $0x1d0] sm:$0xff]
    %v73 = vld [vmem:[%s0 + $0x1d8] sm:$0x3]
    %v74 = vld [vmem:[%s0 + $0x1e0] sm:$0xff]
    %v75 = vld [vmem:[%s0 + $0x1e8] sm:$0xff]
    %v76 = vld [vmem:[%s0 + $0x1f0] sm:$0x3]
    %v77 = vld [vmem:[%s0 + $0x1f8] sm:$0xff]
    %v78 = vld [vmem:[%s0 + $0x200] sm:$0xff]
    %v79 = vld [vmem:[%s0 + $0x208] sm:$0x3]
    %v80 = vld [vmem:[%s0 + $0x210] sm:$0xff]
    %v81 = vld [vmem:[%s0 + $0x218] sm:$0xff]
    %v82 = vld [vmem:[%s0 + $0x220] sm:$0x3]
    %v83 = vld [vmem:[%s0 + $0x228] sm:$0xff]
    %v84 = vld [vmem:[%s0 + $0x230] sm:$0xff]
    %v85 = vld [vmem:[%s0 + $0x238] sm:$0x3]
    %v86 = vld [vmem:[%s0 + $0x240] sm:$0xff]
    %v87 = vld [vmem:[%s0 + $0x248] sm:$0xff]
    %v88 = vld [vmem:[%s0 + $0x250] sm:$0x3]
    %v89 = vld [vmem:[%s0 + $0x258] sm:$0xff]
    %v90 = vld [vmem:[%s0 + $0x260] sm:$0xff]
    %v91 = vld [vmem:[%s0 + $0x268] sm:$0x3]
    %v92 = vld [vmem:[%s0 + $0x270] sm:$0xff]
    %v93 = vld [vmem:[%s0 + $0x278] sm:$0xff]
    %v94 = vld [vmem:[%s0 + $0x280] sm:$0x3]
    %v95 = vld [vmem:[%s0 + $0x288] sm:$0xff]
    %v96 = vld [vmem:[%s0 + $0x290] sm:$0xff]
    %v97 = vld [vmem:[%s0 + $0x298] sm:$0x3]
    %v98 = vld [vmem:[%s0 + $0x2a0] sm:$0xff]
    %v99 = vld [vmem:[%s0 + $0x2a8] sm:$0xff]
    %v100 = vld [vmem:[%s0 + $0x2b0] sm:$0x3]
    %v101 = vld [vmem:[%s0 + $0x2b8] sm:$0xff]
    %v102 = vld [vmem:[%s0 + $0x2c0] sm:$0xff]
    %v103 = vld [vmem:[%s0 + $0x2c8] sm:$0x3]
    %v104 = vld [vmem:[%s0 + $0x2d0] sm:$0xff]
    %v105 = vld [vmem:[%s0 + $0x2d8] sm:$0xff]
    %v106 = vld [vmem:[%s0 + $0x2e0] sm:$0x3]
    %v107 = vld [vmem:[%s0 + $0x2e8] sm:$0xff]
    %v108 = vld [vmem:[%s0 + $0x2f0] sm:$0xff]
    %v109 = vld [vmem:[%s0 + $0x2f8] sm:$0x3]
    %v110 = vld [vmem:[%s0 + $0x300] sm:$0xff]
    %v111 = vld [vmem:[%s0 + $0x308] sm:$0xff]
    %v112 = vld [vmem:[%s0 + $0x310] sm:$0x3]
    %v113 = vld [vmem:[%s0 + $0x318] sm:$0xff]
    %v114 = vld [vmem:[%s0 + $0x320] sm:$0xff]
    %v115 = vld [vmem:[%s0 + $0x328] sm:$0x3]
    %v116 = vld [vmem:[%s0 + $0x330] sm:$0xff]
    %v117 = vld [vmem:[%s0 + $0x338] sm:$0xff]
    %v118 = vld [vmem:[%s0 + $0x340] sm:$0x3]
    %v119 = vld [vmem:[%s0 + $0x348] sm:$0xff]
    %v120 = vld [vmem:[%s0 + $0x350] sm:$0xff]
    %v121 = vld [vmem:[%s0 + $0x358] sm:$0x3]
    %vm122 = vcmask 31744
    %123 = vst.msk [vmem:[#allocation2] sm:$0xff] %vm122, %v14
    %124 = vst.msk [vmem:[#allocation2 + $0x8] sm:$0xff] %vm122, %v15
    %125 = vst.msk [vmem:[#allocation2 + $0x10] sm:$0xff] %vm122, %v17
    %126 = vst.msk [vmem:[#allocation2 + $0x18] sm:$0xff] %vm122, %v18
    %127 = vst.msk [vmem:[#allocation2 + $0x20] sm:$0xff] %vm122, %v20
    %128 = vst.msk [vmem:[#allocation2 + $0x28] sm:$0xff] %vm122, %v21
    %129 = vst.msk [vmem:[#allocation2 + $0x30] sm:$0xff] %vm122, %v23
    %130 = vst.msk [vmem:[#allocation2 + $0x38] sm:$0xff] %vm122, %v24
    %131 = vst.msk [vmem:[#allocation2 + $0x40] sm:$0xff] %vm122, %v26
    %132 = vst.msk [vmem:[#allocation2 + $0x48] sm:$0xff] %vm122, %v27
    %133 = vst.msk [vmem:[#allocation2 + $0x50] sm:$0xff] %vm122, %v29
    %134 = vst.msk [vmem:[#allocation2 + $0x58] sm:$0xff] %vm122, %v30
    %135 = vst.msk [vmem:[#allocation2 + $0x60] sm:$0xff] %vm122, %v32
    %136 = vst.msk [vmem:[#allocation2 + $0x68] sm:$0xff] %vm122, %v33
    %137 = vst.msk [vmem:[#allocation2 + $0x70] sm:$0xff] %vm122, %v35
    %138 = vst.msk [vmem:[#allocation2 + $0x78] sm:$0xff] %vm122, %v36
    %139 = vst.msk [vmem:[#allocation2 + $0x80] sm:$0xff] %vm122, %v38
    %140 = vst.msk [vmem:[#allocation2 + $0x88] sm:$0xff] %vm122, %v39
    %141 = vst.msk [vmem:[#allocation2 + $0x90] sm:$0xff] %vm122, %v41
    %142 = vst.msk [vmem:[#allocation2 + $0x98] sm:$0xff] %vm122, %v42
    %143 = vst.msk [vmem:[#allocation2 + $0xa0] sm:$0xff] %vm122, %v44
    %144 = vst.msk [vmem:[#allocation2 + $0xa8] sm:$0xff] %vm122, %v45
    %145 = vst.msk [vmem:[#allocation2 + $0xb0] sm:$0xff] %vm122, %v47
    %146 = vst.msk [vmem:[#allocation2 + $0xb8] sm:$0xff] %vm122, %v48
    %147 = vst.msk [vmem:[#allocation2 + $0xc0] sm:$0xff] %vm122, %v50
    %148 = vst.msk [vmem:[#allocation2 + $0xc8] sm:$0xff] %vm122, %v51
    %149 = vst.msk [vmem:[#allocation2 + $0xd0] sm:$0xff] %vm122, %v53
    %150 = vst.msk [vmem:[#allocation2 + $0xd8] sm:$0xff] %vm122, %v54
    %151 = vst.msk [vmem:[#allocation2 + $0xe0] sm:$0xff] %vm122, %v56
    %152 = vst.msk [vmem:[#allocation2 + $0xe8] sm:$0xff] %vm122, %v57
    %153 = vst.msk [vmem:[#allocation2 + $0xf0] sm:$0xff] %vm122, %v59
    %154 = vst.msk [vmem:[#allocation2 + $0xf8] sm:$0xff] %vm122, %v60
    %155 = vst.msk [vmem:[#allocation2 + $0x100] sm:$0xff] %vm122, %v68
    %156 = vst.msk [vmem:[#allocation2 + $0x108] sm:$0xff] %vm122, %v69
    %157 = vst.msk [vmem:[#allocation2 + $0x110] sm:$0xff] %vm122, %v71
    %158 = vst.msk [vmem:[#allocation2 + $0x118] sm:$0xff] %vm122, %v72
    %159 = vst.msk [vmem:[#allocation2 + $0x120] sm:$0xff] %vm122, %v74
    %160 = vst.msk [vmem:[#allocation2 + $0x128] sm:$0xff] %vm122, %v75
    %161 = vst.msk [vmem:[#allocation2 + $0x130] sm:$0xff] %vm122, %v77
    %162 = vst.msk [vmem:[#allocation2 + $0x138] sm:$0xff] %vm122, %v78
    %163 = vst.msk [vmem:[#allocation2 + $0x140] sm:$0xff] %vm122, %v80
    %164 = vst.msk [vmem:[#allocation2 + $0x148] sm:$0xff] %vm122, %v81
    %165 = vst.msk [vmem:[#allocation2 + $0x150] sm:$0xff] %vm122, %v83
    %166 = vst.msk [vmem:[#allocation2 + $0x158] sm:$0xff] %vm122, %v84
    %167 = vst.msk [vmem:[#allocation2 + $0x160] sm:$0xff] %vm122, %v86
    %168 = vst.msk [vmem:[#allocation2 + $0x168] sm:$0xff] %vm122, %v87
    %169 = vst.msk [vmem:[#allocation2 + $0x170] sm:$0xff] %vm122, %v89
    %170 = vst.msk [vmem:[#allocation2 + $0x178] sm:$0xff] %vm122, %v90
    %171 = vst.msk [vmem:[#allocation2 + $0x180] sm:$0xff] %vm122, %v92
    %172 = vst.msk [vmem:[#allocation2 + $0x188] sm:$0xff] %vm122, %v93
    %173 = vst.msk [vmem:[#allocation2 + $0x190] sm:$0xff] %vm122, %v95
    %174 = vst.msk [vmem:[#allocation2 + $0x198] sm:$0xff] %vm122, %v96
    %175 = vst.msk [vmem:[#allocation2 + $0x1a0] sm:$0xff] %vm122, %v98
    %176 = vst.msk [vmem:[#allocation2 + $0x1a8] sm:$0xff] %vm122, %v99
    %177 = vst.msk [vmem:[#allocation2 + $0x1b0] sm:$0xff] %vm122, %v101
    %178 = vst.msk [vmem:[#allocation2 + $0x1b8] sm:$0xff] %vm122, %v102
    %179 = vst.msk [vmem:[#allocation2 + $0x1c0] sm:$0xff] %vm122, %v104
    %180 = vst.msk [vmem:[#allocation2 + $0x1c8] sm:$0xff] %vm122, %v105
    %181 = vst.msk [vmem:[#allocation2 + $0x1d0] sm:$0xff] %vm122, %v107
    %182 = vst.msk [vmem:[#allocation2 + $0x1d8] sm:$0xff] %vm122, %v108
    %183 = vst.msk [vmem:[#allocation2 + $0x1e0] sm:$0xff] %vm122, %v110
    %184 = vst.msk [vmem:[#allocation2 + $0x1e8] sm:$0xff] %vm122, %v111
    %185 = vst.msk [vmem:[#allocation2 + $0x1f0] sm:$0xff] %vm122, %v113
    %186 = vst.msk [vmem:[#allocation2 + $0x1f8] sm:$0xff] %vm122, %v114
    %vm283 = vcmask 1046528
    %v284 = vrot.slane %v14, 1
    %v285 = vrot.slane %v15, 1
    %v286 = vsel %vm283, %v284, %v285
    %v287 = vrot.slane %v16, 1
    %v288 = vsel %vm283, %v285, %v287
    %v289 = vrot.slane %v17, 1
    %v290 = vrot.slane %v18, 1
    %v291 = vsel %vm283, %v289, %v290
    %v292 = vrot.slane %v19, 1
    %v293 = vsel %vm283, %v290, %v292
    %v294 = vrot.slane %v20, 1
    %v295 = vrot.slane %v21, 1
    %v296 = vsel %vm283, %v294, %v295
    %v297 = vrot.slane %v22, 1
    %v298 = vsel %vm283, %v295, %v297
    %v299 = vrot.slane %v23, 1
    %v300 = vrot.slane %v24, 1
    %v301 = vsel %vm283, %v299, %v300
    %v302 = vrot.slane %v25, 1
    %v303 = vsel %vm283, %v300, %v302
    %v304 = vrot.slane %v26, 1
    %v305 = vrot.slane %v27, 1
    %v306 = vsel %vm283, %v304, %v305
    %v307 = vrot.slane %v28, 1
    %v308 = vsel %vm283, %v305, %v307
    %v309 = vrot.slane %v29, 1
    %v310 = vrot.slane %v30, 1
    %v311 = vsel %vm283, %v309, %v310
    %v312 = vrot.slane %v31, 1
    %v313 = vsel %vm283, %v310, %v312
    %v314 = vrot.slane %v32, 1
    %v315 = vrot.slane %v33, 1
    %v316 = vsel %vm283, %v314, %v315
    %v317 = vrot.slane %v34, 1
    %v318 = vsel %vm283, %v315, %v317
    %v319 = vrot.slane %v35, 1
    %v320 = vrot.slane %v36, 1
    %v321 = vsel %vm283, %v319, %v320
    %v322 = vrot.slane %v37, 1
    %v323 = vsel %vm283, %v320, %v322
    %v324 = vrot.slane %v38, 1
    %v325 = vrot.slane %v39, 1
    %v326 = vsel %vm283, %v324, %v325
    %v327 = vrot.slane %v40, 1
    %v328 = vsel %vm283, %v325, %v327
    %v329 = vrot.slane %v41, 1
    %v330 = vrot.slane %v42, 1
    %v331 = vsel %vm283, %v329, %v330
    %v332 = vrot.slane %v43, 1
    %v333 = vsel %vm283, %v330, %v332
    %v334 = vrot.slane %v44, 1
    %v335 = vrot.slane %v45, 1
    %v336 = vsel %vm283, %v334, %v335
    %v337 = vrot.slane %v46, 1
    %v338 = vsel %vm283, %v335, %v337
    %v339 = vrot.slane %v47, 1
    %v340 = vrot.slane %v48, 1
    %v341 = vsel %vm283, %v339, %v340
    %v342 = vrot.slane %v49, 1
    %v343 = vsel %vm283, %v340, %v342
    %v344 = vrot.slane %v50, 1
    %v345 = vrot.slane %v51, 1
    %v346 = vsel %vm283, %v344, %v345
    %v347 = vrot.slane %v52, 1
    %v348 = vsel %vm283, %v345, %v347
    %v349 = vrot.slane %v53, 1
    %v350 = vrot.slane %v54, 1
    %v351 = vsel %vm283, %v349, %v350
    %v352 = vrot.slane %v55, 1
    %v353 = vsel %vm283, %v350, %v352
    %v354 = vrot.slane %v56, 1
    %v355 = vrot.slane %v57, 1
    %v356 = vsel %vm283, %v354, %v355
    %v357 = vrot.slane %v58, 1
    %v358 = vsel %vm283, %v355, %v357
    %v359 = vrot.slane %v59, 1
    %v360 = vrot.slane %v60, 1
    %v361 = vsel %vm283, %v359, %v360
    %v362 = vrot.slane %v61, 1
    %v363 = vsel %vm283, %v360, %v362
    %v364 = vrot.slane %v68, 1
    %v365 = vrot.slane %v69, 1
    %v366 = vsel %vm283, %v364, %v365
    %v367 = vrot.slane %v70, 1
    %v368 = vsel %vm283, %v365, %v367
    %v369 = vrot.slane %v71, 1
    %v370 = vrot.slane %v72, 1
    %v371 = vsel %vm283, %v369, %v370
    %v372 = vrot.slane %v73, 1
    %v373 = vsel %vm283, %v370, %v372
    %v374 = vrot.slane %v74, 1
    %v375 = vrot.slane %v75, 1
    %v376 = vsel %vm283, %v374, %v375
    %v377 = vrot.slane %v76, 1
    %v378 = vsel %vm283, %v375, %v377
    %v379 = vrot.slane %v77, 1
    %v380 = vrot.slane %v78, 1
    %v381 = vsel %vm283, %v379, %v380
    %v382 = vrot.slane %v79, 1
    %v383 = vsel %vm283, %v380, %v382
    %v384 = vrot.slane %v80, 1
    %v385 = vrot.slane %v81, 1
    %v386 = vsel %vm283, %v384, %v385
    %v387 = vrot.slane %v82, 1
    %v388 = vsel %vm283, %v385, %v387
    %v389 = vrot.slane %v83, 1
    %v390 = vrot.slane %v84, 1
    %v391 = vsel %vm283, %v389, %v390
    %v392 = vrot.slane %v85, 1
    %v393 = vsel %vm283, %v390, %v392
    %v394 = vrot.slane %v86, 1
    %v395 = vrot.slane %v87, 1
    %v396 = vsel %vm283, %v394, %v395
    %v397 = vrot.slane %v88, 1
    %v398 = vsel %vm283, %v395, %v397
    %v399 = vrot.slane %v89, 1
    %v400 = vrot.slane %v90, 1
    %v401 = vsel %vm283, %v399, %v400
    %v402 = vrot.slane %v91, 1
    %v403 = vsel %vm283, %v400, %v402
    %v404 = vrot.slane %v92, 1
    %v405 = vrot.slane %v93, 1
    %v406 = vsel %vm283, %v404, %v405
    %v407 = vrot.slane %v94, 1
    %v408 = vsel %vm283, %v405, %v407
    %v409 = vrot.slane %v95, 1
    %v410 = vrot.slane %v96, 1
    %v411 = vsel %vm283, %v409, %v410
    %v412 = vrot.slane %v97, 1
    %v413 = vsel %vm283, %v410, %v412
    %v414 = vrot.slane %v98, 1
    %v415 = vrot.slane %v99, 1
    %v416 = vsel %vm283, %v414, %v415
    %v417 = vrot.slane %v100, 1
    %v418 = vsel %vm283, %v415, %v417
    %v419 = vrot.slane %v101, 1
    %v420 = vrot.slane %v102, 1
    %v421 = vsel %vm283, %v419, %v420
    %v422 = vrot.slane %v103, 1
    %v423 = vsel %vm283, %v420, %v422
    %v424 = vrot.slane %v104, 1
    %v425 = vrot.slane %v105, 1
    %v426 = vsel %vm283, %v424, %v425
    %v427 = vrot.slane %v106, 1
    %v428 = vsel %vm283, %v425, %v427
    %v429 = vrot.slane %v107, 1
    %v430 = vrot.slane %v108, 1
    %v431 = vsel %vm283, %v429, %v430
    %v432 = vrot.slane %v109, 1
    %v433 = vsel %vm283, %v430, %v432
    %v434 = vrot.slane %v110, 1
    %v435 = vrot.slane %v111, 1
    %v436 = vsel %vm283, %v434, %v435
    %v437 = vrot.slane %v112, 1
    %v438 = vsel %vm283, %v435, %v437
    %v439 = vrot.slane %v113, 1
    %v440 = vrot.slane %v114, 1
    %v441 = vsel %vm283, %v439, %v440
    %v442 = vrot.slane %v115, 1
    %v443 = vsel %vm283, %v440, %v442
    %444 = vrot.lane.b32.xlu0 %v286, 4
    %v445 = vpop.permute.xlu0 %444
    %446 = vrot.lane.b32.xlu0 %v288, 4
    %v447 = vpop.permute.xlu0 %446
    %448 = vrot.lane.b32.xlu0 %v291, 4
    %v449 = vpop.permute.xlu0 %448
    %450 = vrot.lane.b32.xlu0 %v293, 4
    %v451 = vpop.permute.xlu0 %450
    %452 = vrot.lane.b32.xlu0 %v296, 4
    %v453 = vpop.permute.xlu0 %452
    %454 = vrot.lane.b32.xlu0 %v298, 4
    %v455 = vpop.permute.xlu0 %454
    %456 = vrot.lane.b32.xlu0 %v301, 4
    %v457 = vpop.permute.xlu0 %456
    %458 = vrot.lane.b32.xlu0 %v303, 4
    %v459 = vpop.permute.xlu0 %458
    %460 = vrot.lane.b32.xlu0 %v306, 4
    %v461 = vpop.permute.xlu0 %460
    %462 = vrot.lane.b32.xlu0 %v308, 4
    %v463 = vpop.permute.xlu0 %462
    %464 = vrot.lane.b32.xlu0 %v311, 4
    %v465 = vpop.permute.xlu0 %464
    %466 = vrot.lane.b32.xlu0 %v313, 4
    %v467 = vpop.permute.xlu0 %466
    %468 = vrot.lane.b32.xlu0 %v316, 4
    %v469 = vpop.permute.xlu0 %468
    %470 = vrot.lane.b32.xlu0 %v318, 4
    %v471 = vpop.permute.xlu0 %470
    %472 = vrot.lane.b32.xlu0 %v321, 4
    %v473 = vpop.permute.xlu0 %472
    %474 = vrot.lane.b32.xlu0 %v323, 4
    %v475 = vpop.permute.xlu0 %474
    %476 = vrot.lane.b32.xlu0 %v326, 4
    %v477 = vpop.permute.xlu0 %476
    %478 = vrot.lane.b32.xlu0 %v328, 4
    %v479 = vpop.permute.xlu0 %478
    %480 = vrot.lane.b32.xlu0 %v331, 4
    %v481 = vpop.permute.xlu0 %480
    %482 = vrot.lane.b32.xlu0 %v333, 4
    %v483 = vpop.permute.xlu0 %482
    %484 = vrot.lane.b32.xlu0 %v336, 4
    %v485 = vpop.permute.xlu0 %484
    %486 = vrot.lane.b32.xlu0 %v338, 4
    %v487 = vpop.permute.xlu0 %486
    %488 = vrot.lane.b32.xlu0 %v341, 4
    %v489 = vpop.permute.xlu0 %488
    %490 = vrot.lane.b32.xlu0 %v343, 4
    %v491 = vpop.permute.xlu0 %490
    %492 = vrot.lane.b32.xlu0 %v346, 4
    %v493 = vpop.permute.xlu0 %492
    %494 = vrot.lane.b32.xlu0 %v348, 4
    %v495 = vpop.permute.xlu0 %494
    %496 = vrot.lane.b32.xlu0 %v351, 4
    %v497 = vpop.permute.xlu0 %496
    %498 = vrot.lane.b32.xlu0 %v353, 4
    %v499 = vpop.permute.xlu0 %498
    %500 = vrot.lane.b32.xlu0 %v356, 4
    %v501 = vpop.permute.xlu0 %500
    %502 = vrot.lane.b32.xlu0 %v358, 4
    %v503 = vpop.permute.xlu0 %502
    %504 = vrot.lane.b32.xlu0 %v361, 4
    %v505 = vpop.permute.xlu0 %504
    %506 = vrot.lane.b32.xlu0 %v363, 4
    %v507 = vpop.permute.xlu0 %506
    %508 = vrot.lane.b32.xlu0 %v366, 4
    %v509 = vpop.permute.xlu0 %508
    %510 = vrot.lane.b32.xlu0 %v368, 4
    %v511 = vpop.permute.xlu0 %510
    %512 = vrot.lane.b32.xlu0 %v371, 4
    %v513 = vpop.permute.xlu0 %512
    %514 = vrot.lane.b32.xlu0 %v373, 4
    %v515 = vpop.permute.xlu0 %514
    %516 = vrot.lane.b32.xlu0 %v376, 4
    %v517 = vpop.permute.xlu0 %516
    %518 = vrot.lane.b32.xlu0 %v378, 4
    %v519 = vpop.permute.xlu0 %518
    %520 = vrot.lane.b32.xlu0 %v381, 4
    %v521 = vpop.permute.xlu0 %520
    %522 = vrot.lane.b32.xlu0 %v383, 4
    %v523 = vpop.permute.xlu0 %522
    %524 = vrot.lane.b32.xlu0 %v386, 4
    %v525 = vpop.permute.xlu0 %524
    %526 = vrot.lane.b32.xlu0 %v388, 4
    %v527 = vpop.permute.xlu0 %526
    %528 = vrot.lane.b32.xlu0 %v391, 4
    %v529 = vpop.permute.xlu0 %528
    %530 = vrot.lane.b32.xlu0 %v393, 4
    %v531 = vpop.permute.xlu0 %530
    %532 = vrot.lane.b32.xlu0 %v396, 4
    %v533 = vpop.permute.xlu0 %532
    %534 = vrot.lane.b32.xlu0 %v398, 4
    %v535 = vpop.permute.xlu0 %534
    %536 = vrot.lane.b32.xlu0 %v401, 4
    %v537 = vpop.permute.xlu0 %536
    %538 = vrot.lane.b32.xlu0 %v403, 4
    %v539 = vpop.permute.xlu0 %538
    %540 = vrot.lane.b32.xlu0 %v406, 4
    %v541 = vpop.permute.xlu0 %540
    %542 = vrot.lane.b32.xlu0 %v408, 4
    %v543 = vpop.permute.xlu0 %542
    %544 = vrot.lane.b32.xlu0 %v411, 4
    %v545 = vpop.permute.xlu0 %544
    %546 = vrot.lane.b32.xlu0 %v413, 4
    %v547 = vpop.permute.xlu0 %546
    %548 = vrot.lane.b32.xlu0 %v416, 4
    %v549 = vpop.permute.xlu0 %548
    %550 = vrot.lane.b32.xlu0 %v418, 4
    %v551 = vpop.permute.xlu0 %550
    %552 = vrot.lane.b32.xlu0 %v421, 4
    %v553 = vpop.permute.xlu0 %552
    %554 = vrot.lane.b32.xlu0 %v423, 4
    %v555 = vpop.permute.xlu0 %554
    %556 = vrot.lane.b32.xlu0 %v426, 4
    %v557 = vpop.permute.xlu0 %556
    %558 = vrot.lane.b32.xlu0 %v428, 4
    %v559 = vpop.permute.xlu0 %558
    %560 = vrot.lane.b32.xlu0 %v431, 4
    %v561 = vpop.permute.xlu0 %560
    %562 = vrot.lane.b32.xlu0 %v433, 4
    %v563 = vpop.permute.xlu0 %562
    %564 = vrot.lane.b32.xlu0 %v436, 4
    %v565 = vpop.permute.xlu0 %564
    %566 = vrot.lane.b32.xlu0 %v438, 4
    %v567 = vpop.permute.xlu0 %566
    %568 = vrot.lane.b32.xlu0 %v441, 4
    %v569 = vpop.permute.xlu0 %568
    %570 = vrot.lane.b32.xlu0 %v443, 4
    %v571 = vpop.permute.xlu0 %570
    %vm636 = vcmask 64544
    %637 = vst.msk [vmem:[#allocation2] sm:$0xff] %vm636, %v445
    %638 = vst.msk [vmem:[#allocation2 + $0x8] sm:$0xff] %vm636, %v447
    %639 = vst.msk [vmem:[#allocation2 + $0x10] sm:$0xff] %vm636, %v449
    %640 = vst.msk [vmem:[#allocation2 + $0x18] sm:$0xff] %vm636, %v451
    %641 = vst.msk [vmem:[#allocation2 + $0x20] sm:$0xff] %vm636, %v453
    %642 = vst.msk [vmem:[#allocation2 + $0x28] sm:$0xff] %vm636, %v455
    %643 = vst.msk [vmem:[#allocation2 + $0x30] sm:$0xff] %vm636, %v457
    %644 = vst.msk [vmem:[#allocation2 + $0x38] sm:$0xff] %vm636, %v459
    %645 = vst.msk [vmem:[#allocation2 + $0x40] sm:$0xff] %vm636, %v461
    %646 = vst.msk [vmem:[#allocation2 + $0x48] sm:$0xff] %vm636, %v463
    %647 = vst.msk [vmem:[#allocation2 + $0x50] sm:$0xff] %vm636, %v465
    %648 = vst.msk [vmem:[#allocation2 + $0x58] sm:$0xff] %vm636, %v467
    %649 = vst.msk [vmem:[#allocation2 + $0x60] sm:$0xff] %vm636, %v469
    %650 = vst.msk [vmem:[#allocation2 + $0x68] sm:$0xff] %vm636, %v471
    %651 = vst.msk [vmem:[#allocation2 + $0x70] sm:$0xff] %vm636, %v473
    %652 = vst.msk [vmem:[#allocation2 + $0x78] sm:$0xff] %vm636, %v475
    %653 = vst.msk [vmem:[#allocation2 + $0x80] sm:$0xff] %vm636, %v477
    %654 = vst.msk [vmem:[#allocation2 + $0x88] sm:$0xff] %vm636, %v479
    %655 = vst.msk [vmem:[#allocation2 + $0x90] sm:$0xff] %vm636, %v481
    %656 = vst.msk [vmem:[#allocation2 + $0x98] sm:$0xff] %vm636, %v483
    %657 = vst.msk [vmem:[#allocation2 + $0xa0] sm:$0xff] %vm636, %v485
    %658 = vst.msk [vmem:[#allocation2 + $0xa8] sm:$0xff] %vm636, %v487
    %659 = vst.msk [vmem:[#allocation2 + $0xb0] sm:$0xff] %vm636, %v489
    %660 = vst.msk [vmem:[#allocation2 + $0xb8] sm:$0xff] %vm636, %v491
    %661 = vst.msk [vmem:[#allocation2 + $0xc0] sm:$0xff] %vm636, %v493
    %662 = vst.msk [vmem:[#allocation2 + $0xc8] sm:$0xff] %vm636, %v495
    %663 = vst.msk [vmem:[#allocation2 + $0xd0] sm:$0xff] %vm636, %v497
    %664 = vst.msk [vmem:[#allocation2 + $0xd8] sm:$0xff] %vm636, %v499
    %665 = vst.msk [vmem:[#allocation2 + $0xe0] sm:$0xff] %vm636, %v501
    %666 = vst.msk [vmem:[#allocation2 + $0xe8] sm:$0xff] %vm636, %v503
    %667 = vst.msk [vmem:[#allocation2 + $0xf0] sm:$0xff] %vm636, %v505
    %668 = vst.msk [vmem:[#allocation2 + $0xf8] sm:$0xff] %vm636, %v507
    %669 = vst.msk [vmem:[#allocation2 + $0x100] sm:$0xff] %vm636, %v509
    %670 = vst.msk [vmem:[#allocation2 + $0x108] sm:$0xff] %vm636, %v511
    %671 = vst.msk [vmem:[#allocation2 + $0x110] sm:$0xff] %vm636, %v513
    %672 = vst.msk [vmem:[#allocation2 + $0x118] sm:$0xff] %vm636, %v515
    %673 = vst.msk [vmem:[#allocation2 + $0x120] sm:$0xff] %vm636, %v517
    %674 = vst.msk [vmem:[#allocation2 + $0x128] sm:$0xff] %vm636, %v519
    %675 = vst.msk [vmem:[#allocation2 + $0x130] sm:$0xff] %vm636, %v521
    %676 = vst.msk [vmem:[#allocation2 + $0x138] sm:$0xff] %vm636, %v523
    %677 = vst.msk [vmem:[#allocation2 + $0x140] sm:$0xff] %vm636, %v525
    %678 = vst.msk [vmem:[#allocation2 + $0x148] sm:$0xff] %vm636, %v527
    %679 = vst.msk [vmem:[#allocation2 + $0x150] sm:$0xff] %vm636, %v529
    %680 = vst.msk [vmem:[#allocation2 + $0x158] sm:$0xff] %vm636, %v531
    %681 = vst.msk [vmem:[#allocation2 + $0x160] sm:$0xff] %vm636, %v533
    %682 = vst.msk [vmem:[#allocation2 + $0x168] sm:$0xff] %vm636, %v535
    %683 = vst.msk [vmem:[#allocation2 + $0x170] sm:$0xff] %vm636, %v537
    %684 = vst.msk [vmem:[#allocation2 + $0x178] sm:$0xff] %vm636, %v539
    %685 = vst.msk [vmem:[#allocation2 + $0x180] sm:$0xff] %vm636, %v541
    %686 = vst.msk [vmem:[#allocation2 + $0x188] sm:$0xff] %vm636, %v543
    %687 = vst.msk [vmem:[#allocation2 + $0x190] sm:$0xff] %vm636, %v545
    %688 = vst.msk [vmem:[#allocation2 + $0x198] sm:$0xff] %vm636, %v547
    %689 = vst.msk [vmem:[#allocation2 + $0x1a0] sm:$0xff] %vm636, %v549
    %690 = vst.msk [vmem:[#allocation2 + $0x1a8] sm:$0xff] %vm636, %v551
    %691 = vst.msk [vmem:[#allocation2 + $0x1b0] sm:$0xff] %vm636, %v553
    %692 = vst.msk [vmem:[#allocation2 + $0x1b8] sm:$0xff] %vm636, %v555
    %693 = vst.msk [vmem:[#allocation2 + $0x1c0] sm:$0xff] %vm636, %v557
    %694 = vst.msk [vmem:[#allocation2 + $0x1c8] sm:$0xff] %vm636, %v559
    %695 = vst.msk [vmem:[#allocation2 + $0x1d0] sm:$0xff] %vm636, %v561
    %696 = vst.msk [vmem:[#allocation2 + $0x1d8] sm:$0xff] %vm636, %v563
    %697 = vst.msk [vmem:[#allocation2 + $0x1e0] sm:$0xff] %vm636, %v565
    %698 = vst.msk [vmem:[#allocation2 + $0x1e8] sm:$0xff] %vm636, %v567
    %699 = vst.msk [vmem:[#allocation2 + $0x1f0] sm:$0xff] %vm636, %v569
    %700 = vst.msk [vmem:[#allocation2 + $0x1f8] sm:$0xff] %vm636, %v571
    %vm701 = vcmask 1045504
    %v702 = vrot.slane %v14, 2
    %v703 = vrot.slane %v15, 2
    %v704 = vsel %vm701, %v702, %v703
    %v705 = vrot.slane %v16, 2
    %v706 = vsel %vm701, %v703, %v705
    %v707 = vrot.slane %v17, 2
    %v708 = vrot.slane %v18, 2
    %v709 = vsel %vm701, %v707, %v708
    %v710 = vrot.slane %v19, 2
    %v711 = vsel %vm701, %v708, %v710
    %v712 = vrot.slane %v20, 2
    %v713 = vrot.slane %v21, 2
    %v714 = vsel %vm701, %v712, %v713
    %v715 = vrot.slane %v22, 2
    %v716 = vsel %vm701, %v713, %v715
    %v717 = vrot.slane %v23, 2
    %v718 = vrot.slane %v24, 2
    %v719 = vsel %vm701, %v717, %v718
    %v720 = vrot.slane %v25, 2
    %v721 = vsel %vm701, %v718, %v720
    %v722 = vrot.slane %v26, 2
    %v723 = vrot.slane %v27, 2
    %v724 = vsel %vm701, %v722, %v723
    %v725 = vrot.slane %v28, 2
    %v726 = vsel %vm701, %v723, %v725
    %v727 = vrot.slane %v29, 2
    %v728 = vrot.slane %v30, 2
    %v729 = vsel %vm701, %v727, %v728
    %v730 = vrot.slane %v31, 2
    %v731 = vsel %vm701, %v728, %v730
    %v732 = vrot.slane %v32, 2
    %v733 = vrot.slane %v33, 2
    %v734 = vsel %vm701, %v732, %v733
    %v735 = vrot.slane %v34, 2
    %v736 = vsel %vm701, %v733, %v735
    %v737 = vrot.slane %v35, 2
    %v738 = vrot.slane %v36, 2
    %v739 = vsel %vm701, %v737, %v738
    %v740 = vrot.slane %v37, 2
    %v741 = vsel %vm701, %v738, %v740
    %v742 = vrot.slane %v38, 2
    %v743 = vrot.slane %v39, 2
    %v744 = vsel %vm701, %v742, %v743
    %v745 = vrot.slane %v40, 2
    %v746 = vsel %vm701, %v743, %v745
    %v747 = vrot.slane %v41, 2
    %v748 = vrot.slane %v42, 2
    %v749 = vsel %vm701, %v747, %v748
    %v750 = vrot.slane %v43, 2
    %v751 = vsel %vm701, %v748, %v750
    %v752 = vrot.slane %v44, 2
    %v753 = vrot.slane %v45, 2
    %v754 = vsel %vm701, %v752, %v753
    %v755 = vrot.slane %v46, 2
    %v756 = vsel %vm701, %v753, %v755
    %v757 = vrot.slane %v47, 2
    %v758 = vrot.slane %v48, 2
    %v759 = vsel %vm701, %v757, %v758
    %v760 = vrot.slane %v49, 2
    %v761 = vsel %vm701, %v758, %v760
    %v762 = vrot.slane %v50, 2
    %v763 = vrot.slane %v51, 2
    %v764 = vsel %vm701, %v762, %v763
    %v765 = vrot.slane %v52, 2
    %v766 = vsel %vm701, %v763, %v765
    %v767 = vrot.slane %v53, 2
    %v768 = vrot.slane %v54, 2
    %v769 = vsel %vm701, %v767, %v768
    %v770 = vrot.slane %v55, 2
    %v771 = vsel %vm701, %v768, %v770
    %v772 = vrot.slane %v56, 2
    %v773 = vrot.slane %v57, 2
    %v774 = vsel %vm701, %v772, %v773
    %v775 = vrot.slane %v58, 2
    %v776 = vsel %vm701, %v773, %v775
    %v777 = vrot.slane %v59, 2
    %v778 = vrot.slane %v60, 2
    %v779 = vsel %vm701, %v777, %v778
    %v780 = vrot.slane %v61, 2
    %v781 = vsel %vm701, %v778, %v780
    %v782 = vrot.slane %v68, 2
    %v783 = vrot.slane %v69, 2
    %v784 = vsel %vm701, %v782, %v783
    %v785 = vrot.slane %v70, 2
    %v786 = vsel %vm701, %v783, %v785
    %v787 = vrot.slane %v71, 2
    %v788 = vrot.slane %v72, 2
    %v789 = vsel %vm701, %v787, %v788
    %v790 = vrot.slane %v73, 2
    %v791 = vsel %vm701, %v788, %v790
    %v792 = vrot.slane %v74, 2
    %v793 = vrot.slane %v75, 2
    %v794 = vsel %vm701, %v792, %v793
    %v795 = vrot.slane %v76, 2
    %v796 = vsel %vm701, %v793, %v795
    %v797 = vrot.slane %v77, 2
    %v798 = vrot.slane %v78, 2
    %v799 = vsel %vm701, %v797, %v798
    %v800 = vrot.slane %v79, 2
    %v801 = vsel %vm701, %v798, %v800
    %v802 = vrot.slane %v80, 2
    %v803 = vrot.slane %v81, 2
    %v804 = vsel %vm701, %v802, %v803
    %v805 = vrot.slane %v82, 2
    %v806 = vsel %vm701, %v803, %v805
    %v807 = vrot.slane %v83, 2
    %v808 = vrot.slane %v84, 2
    %v809 = vsel %vm701, %v807, %v808
    %v810 = vrot.slane %v85, 2
    %v811 = vsel %vm701, %v808, %v810
    %v812 = vrot.slane %v86, 2
    %v813 = vrot.slane %v87, 2
    %v814 = vsel %vm701, %v812, %v813
    %v815 = vrot.slane %v88, 2
    %v816 = vsel %vm701, %v813, %v815
    %v817 = vrot.slane %v89, 2
    %v818 = vrot.slane %v90, 2
    %v819 = vsel %vm701, %v817, %v818
    %v820 = vrot.slane %v91, 2
    %v821 = vsel %vm701, %v818, %v820
    %v822 = vrot.slane %v92, 2
    %v823 = vrot.slane %v93, 2
    %v824 = vsel %vm701, %v822, %v823
    %v825 = vrot.slane %v94, 2
    %v826 = vsel %vm701, %v823, %v825
    %v827 = vrot.slane %v95, 2
    %v828 = vrot.slane %v96, 2
    %v829 = vsel %vm701, %v827, %v828
    %v830 = vrot.slane %v97, 2
    %v831 = vsel %vm701, %v828, %v830
    %v832 = vrot.slane %v98, 2
    %v833 = vrot.slane %v99, 2
    %v834 = vsel %vm701, %v832, %v833
    %v835 = vrot.slane %v100, 2
    %v836 = vsel %vm701, %v833, %v835
    %v837 = vrot.slane %v101, 2
    %v838 = vrot.slane %v102, 2
    %v839 = vsel %vm701, %v837, %v838
    %v840 = vrot.slane %v103, 2
    %v841 = vsel %vm701, %v838, %v840
    %v842 = vrot.slane %v104, 2
    %v843 = vrot.slane %v105, 2
    %v844 = vsel %vm701, %v842, %v843
    %v845 = vrot.slane %v106, 2
    %v846 = vsel %vm701, %v843, %v845
    %v847 = vrot.slane %v107, 2
    %v848 = vrot.slane %v108, 2
    %v849 = vsel %vm701, %v847, %v848
    %v850 = vrot.slane %v109, 2
    %v851 = vsel %vm701, %v848, %v850
    %v852 = vrot.slane %v110, 2
    %v853 = vrot.slane %v111, 2
    %v854 = vsel %vm701, %v852, %v853
    %v855 = vrot.slane %v112, 2
    %v856 = vsel %vm701, %v853, %v855
    %v857 = vrot.slane %v113, 2
    %v858 = vrot.slane %v114, 2
    %v859 = vsel %vm701, %v857, %v858
    %v860 = vrot.slane %v115, 2
    %v861 = vsel %vm701, %v858, %v860
    %862 = vrot.lane.b32.xlu0 %v704, 8
    %v863 = vpop.permute.xlu0 %862
    %864 = vrot.lane.b32.xlu0 %v706, 8
    %v865 = vpop.permute.xlu0 %864
    %866 = vrot.lane.b32.xlu0 %v709, 8
    %v867 = vpop.permute.xlu0 %866
    %868 = vrot.lane.b32.xlu0 %v711, 8
    %v869 = vpop.permute.xlu0 %868
    %870 = vrot.lane.b32.xlu0 %v714, 8
    %v871 = vpop.permute.xlu0 %870
    %872 = vrot.lane.b32.xlu0 %v716, 8
    %v873 = vpop.permute.xlu0 %872
    %874 = vrot.lane.b32.xlu0 %v719, 8
    %v875 = vpop.permute.xlu0 %874
    %876 = vrot.lane.b32.xlu0 %v721, 8
    %v877 = vpop.permute.xlu0 %876
    %878 = vrot.lane.b32.xlu0 %v724, 8
    %v879 = vpop.permute.xlu0 %878
    %880 = vrot.lane.b32.xlu0 %v726, 8
    %v881 = vpop.permute.xlu0 %880
    %882 = vrot.lane.b32.xlu0 %v729, 8
    %v883 = vpop.permute.xlu0 %882
    %884 = vrot.lane.b32.xlu0 %v731, 8
    %v885 = vpop.permute.xlu0 %884
    %886 = vrot.lane.b32.xlu0 %v734, 8
    %v887 = vpop.permute.xlu0 %886
    %888 = vrot.lane.b32.xlu0 %v736, 8
    %v889 = vpop.permute.xlu0 %888
    %890 = vrot.lane.b32.xlu0 %v739, 8
    %v891 = vpop.permute.xlu0 %890
    %892 = vrot.lane.b32.xlu0 %v741, 8
    %v893 = vpop.permute.xlu0 %892
    %894 = vrot.lane.b32.xlu0 %v744, 8
    %v895 = vpop.permute.xlu0 %894
    %896 = vrot.lane.b32.xlu0 %v746, 8
    %v897 = vpop.permute.xlu0 %896
    %898 = vrot.lane.b32.xlu0 %v749, 8
    %v899 = vpop.permute.xlu0 %898
    %900 = vrot.lane.b32.xlu0 %v751, 8
    %v901 = vpop.permute.xlu0 %900
    %902 = vrot.lane.b32.xlu0 %v754, 8
    %v903 = vpop.permute.xlu0 %902
    %904 = vrot.lane.b32.xlu0 %v756, 8
    %v905 = vpop.permute.xlu0 %904
    %906 = vrot.lane.b32.xlu0 %v759, 8
    %v907 = vpop.permute.xlu0 %906
    %908 = vrot.lane.b32.xlu0 %v761, 8
    %v909 = vpop.permute.xlu0 %908
    %910 = vrot.lane.b32.xlu0 %v764, 8
    %v911 = vpop.permute.xlu0 %910
    %912 = vrot.lane.b32.xlu0 %v766, 8
    %v913 = vpop.permute.xlu0 %912
    %914 = vrot.lane.b32.xlu0 %v769, 8
    %v915 = vpop.permute.xlu0 %914
    %916 = vrot.lane.b32.xlu0 %v771, 8
    %v917 = vpop.permute.xlu0 %916
    %918 = vrot.lane.b32.xlu0 %v774, 8
    %v919 = vpop.permute.xlu0 %918
    %920 = vrot.lane.b32.xlu0 %v776, 8
    %v921 = vpop.permute.xlu0 %920
    %922 = vrot.lane.b32.xlu0 %v779, 8
    %v923 = vpop.permute.xlu0 %922
    %924 = vrot.lane.b32.xlu0 %v781, 8
    %v925 = vpop.permute.xlu0 %924
    %926 = vrot.lane.b32.xlu0 %v784, 8
    %v927 = vpop.permute.xlu0 %926
    %928 = vrot.lane.b32.xlu0 %v786, 8
    %v929 = vpop.permute.xlu0 %928
    %930 = vrot.lane.b32.xlu0 %v789, 8
    %v931 = vpop.permute.xlu0 %930
    %932 = vrot.lane.b32.xlu0 %v791, 8
    %v933 = vpop.permute.xlu0 %932
    %934 = vrot.lane.b32.xlu0 %v794, 8
    %v935 = vpop.permute.xlu0 %934
    %936 = vrot.lane.b32.xlu0 %v796, 8
    %v937 = vpop.permute.xlu0 %936
    %938 = vrot.lane.b32.xlu0 %v799, 8
    %v939 = vpop.permute.xlu0 %938
    %940 = vrot.lane.b32.xlu0 %v801, 8
    %v941 = vpop.permute.xlu0 %940
    %942 = vrot.lane.b32.xlu0 %v804, 8
    %v943 = vpop.permute.xlu0 %942
    %944 = vrot.lane.b32.xlu0 %v806, 8
    %v945 = vpop.permute.xlu0 %944
    %946 = vrot.lane.b32.xlu0 %v809, 8
    %v947 = vpop.permute.xlu0 %946
    %948 = vrot.lane.b32.xlu0 %v811, 8
    %v949 = vpop.permute.xlu0 %948
    %950 = vrot.lane.b32.xlu0 %v814, 8
    %v951 = vpop.permute.xlu0 %950
    %952 = vrot.lane.b32.xlu0 %v816, 8
    %v953 = vpop.permute.xlu0 %952
    %954 = vrot.lane.b32.xlu0 %v819, 8
    %v955 = vpop.permute.xlu0 %954
    %956 = vrot.lane.b32.xlu0 %v821, 8
    %v957 = vpop.permute.xlu0 %956
    %958 = vrot.lane.b32.xlu0 %v824, 8
    %v959 = vpop.permute.xlu0 %958
    %960 = vrot.lane.b32.xlu0 %v826, 8
    %v961 = vpop.permute.xlu0 %960
    %962 = vrot.lane.b32.xlu0 %v829, 8
    %v963 = vpop.permute.xlu0 %962
    %964 = vrot.lane.b32.xlu0 %v831, 8
    %v965 = vpop.permute.xlu0 %964
    %966 = vrot.lane.b32.xlu0 %v834, 8
    %v967 = vpop.permute.xlu0 %966
    %968 = vrot.lane.b32.xlu0 %v836, 8
    %v969 = vpop.permute.xlu0 %968
    %970 = vrot.lane.b32.xlu0 %v839, 8
    %v971 = vpop.permute.xlu0 %970
    %972 = vrot.lane.b32.xlu0 %v841, 8
    %v973 = vpop.permute.xlu0 %972
    %974 = vrot.lane.b32.xlu0 %v844, 8
    %v975 = vpop.permute.xlu0 %974
    %976 = vrot.lane.b32.xlu0 %v846, 8
    %v977 = vpop.permute.xlu0 %976
    %978 = vrot.lane.b32.xlu0 %v849, 8
    %v979 = vpop.permute.xlu0 %978
    %980 = vrot.lane.b32.xlu0 %v851, 8
    %v981 = vpop.permute.xlu0 %980
    %982 = vrot.lane.b32.xlu0 %v854, 8
    %v983 = vpop.permute.xlu0 %982
    %984 = vrot.lane.b32.xlu0 %v856, 8
    %v985 = vpop.permute.xlu0 %984
    %986 = vrot.lane.b32.xlu0 %v859, 8
    %v987 = vpop.permute.xlu0 %986
    %988 = vrot.lane.b32.xlu0 %v861, 8
    %v989 = vpop.permute.xlu0 %988
    %vm1054 = vcmask 97344
    %1055 = vst.msk [vmem:[#allocation2] sm:$0xff] %vm1054, %v863
    %1056 = vst.msk [vmem:[#allocation2 + $0x8] sm:$0xff] %vm1054, %v865
    %1057 = vst.msk [vmem:[#allocation2 + $0x10] sm:$0xff] %vm1054, %v867
    %1058 = vst.msk [vmem:[#allocation2 + $0x18] sm:$0xff] %vm1054, %v869
    %1059 = vst.msk [vmem:[#allocation2 + $0x20] sm:$0xff] %vm1054, %v871
    %1060 = vst.msk [vmem:[#allocation2 + $0x28] sm:$0xff] %vm1054, %v873
    %1061 = vst.msk [vmem:[#allocation2 + $0x30] sm:$0xff] %vm1054, %v875
    %1062 = vst.msk [vmem:[#allocation2 + $0x38] sm:$0xff] %vm1054, %v877
    %1063 = vst.msk [vmem:[#allocation2 + $0x40] sm:$0xff] %vm1054, %v879
    %1064 = vst.msk [vmem:[#allocation2 + $0x48] sm:$0xff] %vm1054, %v881
    %1065 = vst.msk [vmem:[#allocation2 + $0x50] sm:$0xff] %vm1054, %v883
    %1066 = vst.msk [vmem:[#allocation2 + $0x58] sm:$0xff] %vm1054, %v885
    %1067 = vst.msk [vmem:[#allocation2 + $0x60] sm:$0xff] %vm1054, %v887
    %1068 = vst.msk [vmem:[#allocation2 + $0x68] sm:$0xff] %vm1054, %v889
    %1069 = vst.msk [vmem:[#allocation2 + $0x70] sm:$0xff] %vm1054, %v891
    %1070 = vst.msk [vmem:[#allocation2 + $0x78] sm:$0xff] %vm1054, %v893
    %1071 = vst.msk [vmem:[#allocation2 + $0x80] sm:$0xff] %vm1054, %v895
    %1072 = vst.msk [vmem:[#allocation2 + $0x88] sm:$0xff] %vm1054, %v897
    %1073 = vst.msk [vmem:[#allocation2 + $0x90] sm:$0xff] %vm1054, %v899
    %1074 = vst.msk [vmem:[#allocation2 + $0x98] sm:$0xff] %vm1054, %v901
    %1075 = vst.msk [vmem:[#allocation2 + $0xa0] sm:$0xff] %vm1054, %v903
    %1076 = vst.msk [vmem:[#allocation2 + $0xa8] sm:$0xff] %vm1054, %v905
    %1077 = vst.msk [vmem:[#allocation2 + $0xb0] sm:$0xff] %vm1054, %v907
    %1078 = vst.msk [vmem:[#allocation2 + $0xb8] sm:$0xff] %vm1054, %v909
    %1079 = vst.msk [vmem:[#allocation2 + $0xc0] sm:$0xff] %vm1054, %v911
    %1080 = vst.msk [vmem:[#allocation2 + $0xc8] sm:$0xff] %vm1054, %v913
    %1081 = vst.msk [vmem:[#allocation2 + $0xd0] sm:$0xff] %vm1054, %v915
    %1082 = vst.msk [vmem:[#allocation2 + $0xd8] sm:$0xff] %vm1054, %v917
    %1083 = vst.msk [vmem:[#allocation2 + $0xe0] sm:$0xff] %vm1054, %v919
    %1084 = vst.msk [vmem:[#allocation2 + $0xe8] sm:$0xff] %vm1054, %v921
    %1085 = vst.msk [vmem:[#allocation2 + $0xf0] sm:$0xff] %vm1054, %v923
    %1086 = vst.msk [vmem:[#allocation2 + $0xf8] sm:$0xff] %vm1054, %v925
    %1087 = vst.msk [vmem:[#allocation2 + $0x100] sm:$0xff] %vm1054, %v927
    %1088 = vst.msk [vmem:[#allocation2 + $0x108] sm:$0xff] %vm1054, %v929
    %1089 = vst.msk [vmem:[#allocation2 + $0x110] sm:$0xff] %vm1054, %v931
    %1090 = vst.msk [vmem:[#allocation2 + $0x118] sm:$0xff] %vm1054, %v933
    %1091 = vst.msk [vmem:[#allocation2 + $0x120] sm:$0xff] %vm1054, %v935
    %1092 = vst.msk [vmem:[#allocation2 + $0x128] sm:$0xff] %vm1054, %v937
    %1093 = vst.msk [vmem:[#allocation2 + $0x130] sm:$0xff] %vm1054, %v939
    %1094 = vst.msk [vmem:[#allocation2 + $0x138] sm:$0xff] %vm1054, %v941
    %1095 = vst.msk [vmem:[#allocation2 + $0x140] sm:$0xff] %vm1054, %v943
    %1096 = vst.msk [vmem:[#allocation2 + $0x148] sm:$0xff] %vm1054, %v945
    %1097 = vst.msk [vmem:[#allocation2 + $0x150] sm:$0xff] %vm1054, %v947
    %1098 = vst.msk [vmem:[#allocation2 + $0x158] sm:$0xff] %vm1054, %v949
    %1099 = vst.msk [vmem:[#allocation2 + $0x160] sm:$0xff] %vm1054, %v951
    %1100 = vst.msk [vmem:[#allocation2 + $0x168] sm:$0xff] %vm1054, %v953
    %1101 = vst.msk [vmem:[#allocation2 + $0x170] sm:$0xff] %vm1054, %v955
    %1102 = vst.msk [vmem:[#allocation2 + $0x178] sm:$0xff] %vm1054, %v957
    %1103 = vst.msk [vmem:[#allocation2 + $0x180] sm:$0xff] %vm1054, %v959
    %1104 = vst.msk [vmem:[#allocation2 + $0x188] sm:$0xff] %vm1054, %v961
    %1105 = vst.msk [vmem:[#allocation2 + $0x190] sm:$0xff] %vm1054, %v963
    %1106 = vst.msk [vmem:[#allocation2 + $0x198] sm:$0xff] %vm1054, %v965
    %1107 = vst.msk [vmem:[#allocation2 + $0x1a0] sm:$0xff] %vm1054, %v967
    %1108 = vst.msk [vmem:[#allocation2 + $0x1a8] sm:$0xff] %vm1054, %v969
    %1109 = vst.msk [vmem:[#allocation2 + $0x1b0] sm:$0xff] %vm1054, %v971
    %1110 = vst.msk [vmem:[#allocation2 + $0x1b8] sm:$0xff] %vm1054, %v973
    %1111 = vst.msk [vmem:[#allocation2 + $0x1c0] sm:$0xff] %vm1054, %v975
    %1112 = vst.msk [vmem:[#allocation2 + $0x1c8] sm:$0xff] %vm1054, %v977
    %1113 = vst.msk [vmem:[#allocation2 + $0x1d0] sm:$0xff] %vm1054, %v979
    %1114 = vst.msk [vmem:[#allocation2 + $0x1d8] sm:$0xff] %vm1054, %v981
    %1115 = vst.msk [vmem:[#allocation2 + $0x1e0] sm:$0xff] %vm1054, %v983
    %1116 = vst.msk [vmem:[#allocation2 + $0x1e8] sm:$0xff] %vm1054, %v985
    %1117 = vst.msk [vmem:[#allocation2 + $0x1f0] sm:$0xff] %vm1054, %v987
    %1118 = vst.msk [vmem:[#allocation2 + $0x1f8] sm:$0xff] %vm1054, %v989
    %1123 = vrot.lane.b32.xlu0 %v17, 12
    %v1124 = vpop.permute.xlu0 %1123
    %1125 = vrot.lane.b32.xlu0 %v18, 12
    %v1126 = vpop.permute.xlu0 %1125
    %1127 = vrot.lane.b32.xlu0 %v20, 12
    %v1128 = vpop.permute.xlu0 %1127
    %1129 = vrot.lane.b32.xlu0 %v21, 12
    %v1130 = vpop.permute.xlu0 %1129
    %1131 = vrot.lane.b32.xlu0 %v23, 12
    %v1132 = vpop.permute.xlu0 %1131
    %1133 = vrot.lane.b32.xlu0 %v24, 12
    %v1134 = vpop.permute.xlu0 %1133
    %1135 = vrot.lane.b32.xlu0 %v26, 12
    %v1136 = vpop.permute.xlu0 %1135
    %1137 = vrot.lane.b32.xlu0 %v27, 12
    %v1138 = vpop.permute.xlu0 %1137
    %1139 = vrot.lane.b32.xlu0 %v29, 12
    %v1140 = vpop.permute.xlu0 %1139
    %1141 = vrot.lane.b32.xlu0 %v30, 12
    %v1142 = vpop.permute.xlu0 %1141
    %1143 = vrot.lane.b32.xlu0 %v32, 12
    %v1144 = vpop.permute.xlu0 %1143
    %1145 = vrot.lane.b32.xlu0 %v33, 12
    %v1146 = vpop.permute.xlu0 %1145
    %1147 = vrot.lane.b32.xlu0 %v35, 12
    %v1148 = vpop.permute.xlu0 %1147
    %1149 = vrot.lane.b32.xlu0 %v36, 12
    %v1150 = vpop.permute.xlu0 %1149
    %1151 = vrot.lane.b32.xlu0 %v38, 12
    %v1152 = vpop.permute.xlu0 %1151
    %1153 = vrot.lane.b32.xlu0 %v39, 12
    %v1154 = vpop.permute.xlu0 %1153
    %1155 = vrot.lane.b32.xlu0 %v41, 12
    %v1156 = vpop.permute.xlu0 %1155
    %1157 = vrot.lane.b32.xlu0 %v42, 12
    %v1158 = vpop.permute.xlu0 %1157
    %1159 = vrot.lane.b32.xlu0 %v44, 12
    %v1160 = vpop.permute.xlu0 %1159
    %1161 = vrot.lane.b32.xlu0 %v45, 12
    %v1162 = vpop.permute.xlu0 %1161
    %1163 = vrot.lane.b32.xlu0 %v47, 12
    %v1164 = vpop.permute.xlu0 %1163
    %1165 = vrot.lane.b32.xlu0 %v48, 12
    %v1166 = vpop.permute.xlu0 %1165
    %1167 = vrot.lane.b32.xlu0 %v50, 12
    %v1168 = vpop.permute.xlu0 %1167
    %1169 = vrot.lane.b32.xlu0 %v51, 12
    %v1170 = vpop.permute.xlu0 %1169
    %1171 = vrot.lane.b32.xlu0 %v53, 12
    %v1172 = vpop.permute.xlu0 %1171
    %1173 = vrot.lane.b32.xlu0 %v54, 12
    %v1174 = vpop.permute.xlu0 %1173
    %1175 = vrot.lane.b32.xlu0 %v56, 12
    %v1176 = vpop.permute.xlu0 %1175
    %1177 = vrot.lane.b32.xlu0 %v57, 12
    %v1178 = vpop.permute.xlu0 %1177
    %1179 = vrot.lane.b32.xlu0 %v59, 12
    %v1180 = vpop.permute.xlu0 %1179
    %1181 = vrot.lane.b32.xlu0 %v60, 12
    %v1182 = vpop.permute.xlu0 %1181
    %1183 = vrot.lane.b32.xlu0 %v62, 12
    %v1184 = vpop.permute.xlu0 %1183
    %1185 = vrot.lane.b32.xlu0 %v63, 12
    %v1186 = vpop.permute.xlu0 %1185
    %1187 = vrot.lane.b32.xlu0 %v71, 12
    %v1188 = vpop.permute.xlu0 %1187
    %1189 = vrot.lane.b32.xlu0 %v72, 12
    %v1190 = vpop.permute.xlu0 %1189
    %1191 = vrot.lane.b32.xlu0 %v74, 12
    %v1192 = vpop.permute.xlu0 %1191
    %1193 = vrot.lane.b32.xlu0 %v75, 12
    %v1194 = vpop.permute.xlu0 %1193
    %1195 = vrot.lane.b32.xlu0 %v77, 12
    %v1196 = vpop.permute.xlu0 %1195
    %1197 = vrot.lane.b32.xlu0 %v78, 12
    %v1198 = vpop.permute.xlu0 %1197
    %1199 = vrot.lane.b32.xlu0 %v80, 12
    %v1200 = vpop.permute.xlu0 %1199
    %1201 = vrot.lane.b32.xlu0 %v81, 12
    %v1202 = vpop.permute.xlu0 %1201
    %1203 = vrot.lane.b32.xlu0 %v83, 12
    %v1204 = vpop.permute.xlu0 %1203
    %1205 = vrot.lane.b32.xlu0 %v84, 12
    %v1206 = vpop.permute.xlu0 %1205
    %1207 = vrot.lane.b32.xlu0 %v86, 12
    %v1208 = vpop.permute.xlu0 %1207
    %1209 = vrot.lane.b32.xlu0 %v87, 12
    %v1210 = vpop.permute.xlu0 %1209
    %1211 = vrot.lane.b32.xlu0 %v89, 12
    %v1212 = vpop.permute.xlu0 %1211
    %1213 = vrot.lane.b32.xlu0 %v90, 12
    %v1214 = vpop.permute.xlu0 %1213
    %1215 = vrot.lane.b32.xlu0 %v92, 12
    %v1216 = vpop.permute.xlu0 %1215
    %1217 = vrot.lane.b32.xlu0 %v93, 12
    %v1218 = vpop.permute.xlu0 %1217
    %1219 = vrot.lane.b32.xlu0 %v95, 12
    %v1220 = vpop.permute.xlu0 %1219
    %1221 = vrot.lane.b32.xlu0 %v96, 12
    %v1222 = vpop.permute.xlu0 %1221
    %1223 = vrot.lane.b32.xlu0 %v98, 12
    %v1224 = vpop.permute.xlu0 %1223
    %1225 = vrot.lane.b32.xlu0 %v99, 12
    %v1226 = vpop.permute.xlu0 %1225
    %1227 = vrot.lane.b32.xlu0 %v101, 12
    %v1228 = vpop.permute.xlu0 %1227
    %1229 = vrot.lane.b32.xlu0 %v102, 12
    %v1230 = vpop.permute.xlu0 %1229
    %1231 = vrot.lane.b32.xlu0 %v104, 12
    %v1232 = vpop.permute.xlu0 %1231
    %1233 = vrot.lane.b32.xlu0 %v105, 12
    %v1234 = vpop.permute.xlu0 %1233
    %1235 = vrot.lane.b32.xlu0 %v107, 12
    %v1236 = vpop.permute.xlu0 %1235
    %1237 = vrot.lane.b32.xlu0 %v108, 12
    %v1238 = vpop.permute.xlu0 %1237
    %1239 = vrot.lane.b32.xlu0 %v110, 12
    %v1240 = vpop.permute.xlu0 %1239
    %1241 = vrot.lane.b32.xlu0 %v111, 12
    %v1242 = vpop.permute.xlu0 %1241
    %1243 = vrot.lane.b32.xlu0 %v113, 12
    %v1244 = vpop.permute.xlu0 %1243
    %1245 = vrot.lane.b32.xlu0 %v114, 12
    %v1246 = vpop.permute.xlu0 %1245
    %1247 = vrot.lane.b32.xlu0 %v116, 12
    %v1248 = vpop.permute.xlu0 %1247
    %1249 = vrot.lane.b32.xlu0 %v117, 12
    %v1250 = vpop.permute.xlu0 %1249
    %vm1315 = vcmask 130144
    %1316 = vst.msk [vmem:[#allocation2] sm:$0xff] %vm1315, %v1124
    %1317 = vst.msk [vmem:[#allocation2 + $0x8] sm:$0xff] %vm1315, %v1126
    %1318 = vst.msk [vmem:[#allocation2 + $0x10] sm:$0xff] %vm1315, %v1128
    %1319 = vst.msk [vmem:[#allocation2 + $0x18] sm:$0xff] %vm1315, %v1130
    %1320 = vst.msk [vmem:[#allocation2 + $0x20] sm:$0xff] %vm1315, %v1132
    %1321 = vst.msk [vmem:[#allocation2 + $0x28] sm:$0xff] %vm1315, %v1134
    %1322 = vst.msk [vmem:[#allocation2 + $0x30] sm:$0xff] %vm1315, %v1136
    %1323 = vst.msk [vmem:[#allocation2 + $0x38] sm:$0xff] %vm1315, %v1138
    %1324 = vst.msk [vmem:[#allocation2 + $0x40] sm:$0xff] %vm1315, %v1140
    %1325 = vst.msk [vmem:[#allocation2 + $0x48] sm:$0xff] %vm1315, %v1142
    %1326 = vst.msk [vmem:[#allocation2 + $0x50] sm:$0xff] %vm1315, %v1144
    %1327 = vst.msk [vmem:[#allocation2 + $0x58] sm:$0xff] %vm1315, %v1146
    %1328 = vst.msk [vmem:[#allocation2 + $0x60] sm:$0xff] %vm1315, %v1148
    %1329 = vst.msk [vmem:[#allocation2 + $0x68] sm:$0xff] %vm1315, %v1150
    %1330 = vst.msk [vmem:[#allocation2 + $0x70] sm:$0xff] %vm1315, %v1152
    %1331 = vst.msk [vmem:[#allocation2 + $0x78] sm:$0xff] %vm1315, %v1154
    %1332 = vst.msk [vmem:[#allocation2 + $0x80] sm:$0xff] %vm1315, %v1156
    %1333 = vst.msk [vmem:[#allocation2 + $0x88] sm:$0xff] %vm1315, %v1158
    %1334 = vst.msk [vmem:[#allocation2 + $0x90] sm:$0xff] %vm1315, %v1160
    %1335 = vst.msk [vmem:[#allocation2 + $0x98] sm:$0xff] %vm1315, %v1162
    %1336 = vst.msk [vmem:[#allocation2 + $0xa0] sm:$0xff] %vm1315, %v1164
    %1337 = vst.msk [vmem:[#allocation2 + $0xa8] sm:$0xff] %vm1315, %v1166
    %1338 = vst.msk [vmem:[#allocation2 + $0xb0] sm:$0xff] %vm1315, %v1168
    %1339 = vst.msk [vmem:[#allocation2 + $0xb8] sm:$0xff] %vm1315, %v1170
    %1340 = vst.msk [vmem:[#allocation2 + $0xc0] sm:$0xff] %vm1315, %v1172
    %1341 = vst.msk [vmem:[#allocation2 + $0xc8] sm:$0xff] %vm1315, %v1174
    %1342 = vst.msk [vmem:[#allocation2 + $0xd0] sm:$0xff] %vm1315, %v1176
    %1343 = vst.msk [vmem:[#allocation2 + $0xd8] sm:$0xff] %vm1315, %v1178
    %1344 = vst.msk [vmem:[#allocation2 + $0xe0] sm:$0xff] %vm1315, %v1180
    %1345 = vst.msk [vmem:[#allocation2 + $0xe8] sm:$0xff] %vm1315, %v1182
    %1346 = vst.msk [vmem:[#allocation2 + $0xf0] sm:$0xff] %vm1315, %v1184
    %1347 = vst.msk [vmem:[#allocation2 + $0xf8] sm:$0xff] %vm1315, %v1186
    %1348 = vst.msk [vmem:[#allocation2 + $0x100] sm:$0xff] %vm1315, %v1188
    %1349 = vst.msk [vmem:[#allocation2 + $0x108] sm:$0xff] %vm1315, %v1190
    %1350 = vst.msk [vmem:[#allocation2 + $0x110] sm:$0xff] %vm1315, %v1192
    %1351 = vst.msk [vmem:[#allocation2 + $0x118] sm:$0xff] %vm1315, %v1194
    %1352 = vst.msk [vmem:[#allocation2 + $0x120] sm:$0xff] %vm1315, %v1196
    %1353 = vst.msk [vmem:[#allocation2 + $0x128] sm:$0xff] %vm1315, %v1198
    %1354 = vst.msk [vmem:[#allocation2 + $0x130] sm:$0xff] %vm1315, %v1200
    %1355 = vst.msk [vmem:[#allocation2 + $0x138] sm:$0xff] %vm1315, %v1202
    %1356 = vst.msk [vmem:[#allocation2 + $0x140] sm:$0xff] %vm1315, %v1204
    %1357 = vst.msk [vmem:[#allocation2 + $0x148] sm:$0xff] %vm1315, %v1206
    %1358 = vst.msk [vmem:[#allocation2 + $0x150] sm:$0xff] %vm1315, %v1208
    %1359 = vst.msk [vmem:[#allocation2 + $0x158] sm:$0xff] %vm1315, %v1210
    %1360 = vst.msk [vmem:[#allocation2 + $0x160] sm:$0xff] %vm1315, %v1212
    %1361 = vst.msk [vmem:[#allocation2 + $0x168] sm:$0xff] %vm1315, %v1214
    %1362 = vst.msk [vmem:[#allocation2 + $0x170] sm:$0xff] %vm1315, %v1216
    %1363 = vst.msk [vmem:[#allocation2 + $0x178] sm:$0xff] %vm1315, %v1218
    %1364 = vst.msk [vmem:[#allocation2 + $0x180] sm:$0xff] %vm1315, %v1220
    %1365 = vst.msk [vmem:[#allocation2 + $0x188] sm:$0xff] %vm1315, %v1222
    %1366 = vst.msk [vmem:[#allocation2 + $0x190] sm:$0xff] %vm1315, %v1224
    %1367 = vst.msk [vmem:[#allocation2 + $0x198] sm:$0xff] %vm1315, %v1226
    %1368 = vst.msk [vmem:[#allocation2 + $0x1a0] sm:$0xff] %vm1315, %v1228
    %1369 = vst.msk [vmem:[#allocation2 + $0x1a8] sm:$0xff] %vm1315, %v1230
    %1370 = vst.msk [vmem:[#allocation2 + $0x1b0] sm:$0xff] %vm1315, %v1232
    %1371 = vst.msk [vmem:[#allocation2 + $0x1b8] sm:$0xff] %vm1315, %v1234
    %1372 = vst.msk [vmem:[#allocation2 + $0x1c0] sm:$0xff] %vm1315, %v1236
    %1373 = vst.msk [vmem:[#allocation2 + $0x1c8] sm:$0xff] %vm1315, %v1238
    %1374 = vst.msk [vmem:[#allocation2 + $0x1d0] sm:$0xff] %vm1315, %v1240
    %1375 = vst.msk [vmem:[#allocation2 + $0x1d8] sm:$0xff] %vm1315, %v1242
    %1376 = vst.msk [vmem:[#allocation2 + $0x1e0] sm:$0xff] %vm1315, %v1244
    %1377 = vst.msk [vmem:[#allocation2 + $0x1e8] sm:$0xff] %vm1315, %v1246
    %1378 = vst.msk [vmem:[#allocation2 + $0x1f0] sm:$0xff] %vm1315, %v1248
    %1379 = vst.msk [vmem:[#allocation2 + $0x1f8] sm:$0xff] %vm1315, %v1250
    %v1382 = vrot.slane %v62, 1
    %v1383 = vrot.slane %v63, 1
    %v1384 = vsel %vm283, %v1382, %v1383
    %v1385 = vrot.slane %v64, 1
    %v1386 = vsel %vm283, %v1383, %v1385
    %v1387 = vrot.slane %v116, 1
    %v1388 = vrot.slane %v117, 1
    %v1389 = vsel %vm283, %v1387, %v1388
    %v1390 = vrot.slane %v118, 1
    %v1391 = vsel %vm283, %v1388, %v1390
    %1392 = vrot.lane.b32.xlu0 %v291, 16
    %v1393 = vpop.permute.xlu0 %1392
    %1394 = vrot.lane.b32.xlu0 %v293, 16
    %v1395 = vpop.permute.xlu0 %1394
    %1396 = vrot.lane.b32.xlu0 %v296, 16
    %v1397 = vpop.permute.xlu0 %1396
    %1398 = vrot.lane.b32.xlu0 %v298, 16
    %v1399 = vpop.permute.xlu0 %1398
    %1400 = vrot.lane.b32.xlu0 %v301, 16
    %v1401 = vpop.permute.xlu0 %1400
    %1402 = vrot.lane.b32.xlu0 %v303, 16
    %v1403 = vpop.permute.xlu0 %1402
    %1404 = vrot.lane.b32.xlu0 %v306, 16
    %v1405 = vpop.permute.xlu0 %1404
    %1406 = vrot.lane.b32.xlu0 %v308, 16
    %v1407 = vpop.permute.xlu0 %1406
    %1408 = vrot.lane.b32.xlu0 %v311, 16
    %v1409 = vpop.permute.xlu0 %1408
    %1410 = vrot.lane.b32.xlu0 %v313, 16
    %v1411 = vpop.permute.xlu0 %1410
    %1412 = vrot.lane.b32.xlu0 %v316, 16
    %v1413 = vpop.permute.xlu0 %1412
    %1414 = vrot.lane.b32.xlu0 %v318, 16
    %v1415 = vpop.permute.xlu0 %1414
    %1416 = vrot.lane.b32.xlu0 %v321, 16
    %v1417 = vpop.permute.xlu0 %1416
    %1418 = vrot.lane.b32.xlu0 %v323, 16
    %v1419 = vpop.permute.xlu0 %1418
    %1420 = vrot.lane.b32.xlu0 %v326, 16
    %v1421 = vpop.permute.xlu0 %1420
    %1422 = vrot.lane.b32.xlu0 %v328, 16
    %v1423 = vpop.permute.xlu0 %1422
    %1424 = vrot.lane.b32.xlu0 %v331, 16
    %v1425 = vpop.permute.xlu0 %1424
    %1426 = vrot.lane.b32.xlu0 %v333, 16
    %v1427 = vpop.permute.xlu0 %1426
    %1428 = vrot.lane.b32.xlu0 %v336, 16
    %v1429 = vpop.permute.xlu0 %1428
    %1430 = vrot.lane.b32.xlu0 %v338, 16
    %v1431 = vpop.permute.xlu0 %1430
    %1432 = vrot.lane.b32.xlu0 %v341, 16
    %v1433 = vpop.permute.xlu0 %1432
    %1434 = vrot.lane.b32.xlu0 %v343, 16
    %v1435 = vpop.permute.xlu0 %1434
    %1436 = vrot.lane.b32.xlu0 %v346, 16
    %v1437 = vpop.permute.xlu0 %1436
    %1438 = vrot.lane.b32.xlu0 %v348, 16
    %v1439 = vpop.permute.xlu0 %1438
    %1440 = vrot.lane.b32.xlu0 %v351, 16
    %v1441 = vpop.permute.xlu0 %1440
    %1442 = vrot.lane.b32.xlu0 %v353, 16
    %v1443 = vpop.permute.xlu0 %1442
    %1444 = vrot.lane.b32.xlu0 %v356, 16
    %v1445 = vpop.permute.xlu0 %1444
    %1446 = vrot.lane.b32.xlu0 %v358, 16
    %v1447 = vpop.permute.xlu0 %1446
    %1448 = vrot.lane.b32.xlu0 %v361, 16
    %v1449 = vpop.permute.xlu0 %1448
    %1450 = vrot.lane.b32.xlu0 %v363, 16
    %v1451 = vpop.permute.xlu0 %1450
    %1452 = vrot.lane.b32.xlu0 %v1384, 16
    %v1453 = vpop.permute.xlu0 %1452
    %1454 = vrot.lane.b32.xlu0 %v1386, 16
    %v1455 = vpop.permute.xlu0 %1454
    %1456 = vrot.lane.b32.xlu0 %v371, 16
    %v1457 = vpop.permute.xlu0 %1456
    %1458 = vrot.lane.b32.xlu0 %v373, 16
    %v1459 = vpop.permute.xlu0 %1458
    %1460 = vrot.lane.b32.xlu0 %v376, 16
    %v1461 = vpop.permute.xlu0 %1460
    %1462 = vrot.lane.b32.xlu0 %v378, 16
    %v1463 = vpop.permute.xlu0 %1462
    %1464 = vrot.lane.b32.xlu0 %v381, 16
    %v1465 = vpop.permute.xlu0 %1464
    %1466 = vrot.lane.b32.xlu0 %v383, 16
    %v1467 = vpop.permute.xlu0 %1466
    %1468 = vrot.lane.b32.xlu0 %v386, 16
    %v1469 = vpop.permute.xlu0 %1468
    %1470 = vrot.lane.b32.xlu0 %v388, 16
    %v1471 = vpop.permute.xlu0 %1470
    %1472 = vrot.lane.b32.xlu0 %v391, 16
    %v1473 = vpop.permute.xlu0 %1472
    %1474 = vrot.lane.b32.xlu0 %v393, 16
    %v1475 = vpop.permute.xlu0 %1474
    %1476 = vrot.lane.b32.xlu0 %v396, 16
    %v1477 = vpop.permute.xlu0 %1476
    %1478 = vrot.lane.b32.xlu0 %v398, 16
    %v1479 = vpop.permute.xlu0 %1478
    %1480 = vrot.lane.b32.xlu0 %v401, 16
    %v1481 = vpop.permute.xlu0 %1480
    %1482 = vrot.lane.b32.xlu0 %v403, 16
    %v1483 = vpop.permute.xlu0 %1482
    %1484 = vrot.lane.b32.xlu0 %v406, 16
    %v1485 = vpop.permute.xlu0 %1484
    %1486 = vrot.lane.b32.xlu0 %v408, 16
    %v1487 = vpop.permute.xlu0 %1486
    %1488 = vrot.lane.b32.xlu0 %v411, 16
    %v1489 = vpop.permute.xlu0 %1488
    %1490 = vrot.lane.b32.xlu0 %v413, 16
    %v1491 = vpop.permute.xlu0 %1490
    %1492 = vrot.lane.b32.xlu0 %v416, 16
    %v1493 = vpop.permute.xlu0 %1492
    %1494 = vrot.lane.b32.xlu0 %v418, 16
    %v1495 = vpop.permute.xlu0 %1494
    %1496 = vrot.lane.b32.xlu0 %v421, 16
    %v1497 = vpop.permute.xlu0 %1496
    %1498 = vrot.lane.b32.xlu0 %v423, 16
    %v1499 = vpop.permute.xlu0 %1498
    %1500 = vrot.lane.b32.xlu0 %v426, 16
    %v1501 = vpop.permute.xlu0 %1500
    %1502 = vrot.lane.b32.xlu0 %v428, 16
    %v1503 = vpop.permute.xlu0 %1502
    %1504 = vrot.lane.b32.xlu0 %v431, 16
    %v1505 = vpop.permute.xlu0 %1504
    %1506 = vrot.lane.b32.xlu0 %v433, 16
    %v1507 = vpop.permute.xlu0 %1506
    %1508 = vrot.lane.b32.xlu0 %v436, 16
    %v1509 = vpop.permute.xlu0 %1508
    %1510 = vrot.lane.b32.xlu0 %v438, 16
    %v1511 = vpop.permute.xlu0 %1510
    %1512 = vrot.lane.b32.xlu0 %v441, 16
    %v1513 = vpop.permute.xlu0 %1512
    %1514 = vrot.lane.b32.xlu0 %v443, 16
    %v1515 = vpop.permute.xlu0 %1514
    %1516 = vrot.lane.b32.xlu0 %v1389, 16
    %v1517 = vpop.permute.xlu0 %1516
    %1518 = vrot.lane.b32.xlu0 %v1391, 16
    %v1519 = vpop.permute.xlu0 %1518
    %vm1584 = vcmask 162944
    %1585 = vst.msk [vmem:[#allocation2] sm:$0xff] %vm1584, %v1393
    %1586 = vst.msk [vmem:[#allocation2 + $0x8] sm:$0xff] %vm1584, %v1395
    %1587 = vst.msk [vmem:[#allocation2 + $0x10] sm:$0xff] %vm1584, %v1397
    %1588 = vst.msk [vmem:[#allocation2 + $0x18] sm:$0xff] %vm1584, %v1399
    %1589 = vst.msk [vmem:[#allocation2 + $0x20] sm:$0xff] %vm1584, %v1401
    %1590 = vst.msk [vmem:[#allocation2 + $0x28] sm:$0xff] %vm1584, %v1403
    %1591 = vst.msk [vmem:[#allocation2 + $0x30] sm:$0xff] %vm1584, %v1405
    %1592 = vst.msk [vmem:[#allocation2 + $0x38] sm:$0xff] %vm1584, %v1407
    %1593 = vst.msk [vmem:[#allocation2 + $0x40] sm:$0xff] %vm1584, %v1409
    %1594 = vst.msk [vmem:[#allocation2 + $0x48] sm:$0xff] %vm1584, %v1411
    %1595 = vst.msk [vmem:[#allocation2 + $0x50] sm:$0xff] %vm1584, %v1413
    %1596 = vst.msk [vmem:[#allocation2 + $0x58] sm:$0xff] %vm1584, %v1415
    %1597 = vst.msk [vmem:[#allocation2 + $0x60] sm:$0xff] %vm1584, %v1417
    %1598 = vst.msk [vmem:[#allocation2 + $0x68] sm:$0xff] %vm1584, %v1419
    %1599 = vst.msk [vmem:[#allocation2 + $0x70] sm:$0xff] %vm1584, %v1421
    %1600 = vst.msk [vmem:[#allocation2 + $0x78] sm:$0xff] %vm1584, %v1423
    %1601 = vst.msk [vmem:[#allocation2 + $0x80] sm:$0xff] %vm1584, %v1425
    %1602 = vst.msk [vmem:[#allocation2 + $0x88] sm:$0xff] %vm1584, %v1427
    %1603 = vst.msk [vmem:[#allocation2 + $0x90] sm:$0xff] %vm1584, %v1429
    %1604 = vst.msk [vmem:[#allocation2 + $0x98] sm:$0xff] %vm1584, %v1431
    %1605 = vst.msk [vmem:[#allocation2 + $0xa0] sm:$0xff] %vm1584, %v1433
    %1606 = vst.msk [vmem:[#allocation2 + $0xa8] sm:$0xff] %vm1584, %v1435
    %1607 = vst.msk [vmem:[#allocation2 + $0xb0] sm:$0xff] %vm1584, %v1437
    %1608 = vst.msk [vmem:[#allocation2 + $0xb8] sm:$0xff] %vm1584, %v1439
    %1609 = vst.msk [vmem:[#allocation2 + $0xc0] sm:$0xff] %vm1584, %v1441
    %1610 = vst.msk [vmem:[#allocation2 + $0xc8] sm:$0xff] %vm1584, %v1443
    %1611 = vst.msk [vmem:[#allocation2 + $0xd0] sm:$0xff] %vm1584, %v1445
    %1612 = vst.msk [vmem:[#allocation2 + $0xd8] sm:$0xff] %vm1584, %v1447
    %1613 = vst.msk [vmem:[#allocation2 + $0xe0] sm:$0xff] %vm1584, %v1449
    %1614 = vst.msk [vmem:[#allocation2 + $0xe8] sm:$0xff] %vm1584, %v1451
    %1615 = vst.msk [vmem:[#allocation2 + $0xf0] sm:$0xff] %vm1584, %v1453
    %1616 = vst.msk [vmem:[#allocation2 + $0xf8] sm:$0xff] %vm1584, %v1455
    %1617 = vst.msk [vmem:[#allocation2 + $0x100] sm:$0xff] %vm1584, %v1457
    %1618 = vst.msk [vmem:[#allocation2 + $0x108] sm:$0xff] %vm1584, %v1459
    %1619 = vst.msk [vmem:[#allocation2 + $0x110] sm:$0xff] %vm1584, %v1461
    %1620 = vst.msk [vmem:[#allocation2 + $0x118] sm:$0xff] %vm1584, %v1463
    %1621 = vst.msk [vmem:[#allocation2 + $0x120] sm:$0xff] %vm1584, %v1465
    %1622 = vst.msk [vmem:[#allocation2 + $0x128] sm:$0xff] %vm1584, %v1467
    %1623 = vst.msk [vmem:[#allocation2 + $0x130] sm:$0xff] %vm1584, %v1469
    %1624 = vst.msk [vmem:[#allocation2 + $0x138] sm:$0xff] %vm1584, %v1471
    %1625 = vst.msk [vmem:[#allocation2 + $0x140] sm:$0xff] %vm1584, %v1473
    %1626 = vst.msk [vmem:[#allocation2 + $0x148] sm:$0xff] %vm1584, %v1475
    %1627 = vst.msk [vmem:[#allocation2 + $0x150] sm:$0xff] %vm1584, %v1477
    %1628 = vst.msk [vmem:[#allocation2 + $0x158] sm:$0xff] %vm1584, %v1479
    %1629 = vst.msk [vmem:[#allocation2 + $0x160] sm:$0xff] %vm1584, %v1481
    %1630 = vst.msk [vmem:[#allocation2 + $0x168] sm:$0xff] %vm1584, %v1483
    %1631 = vst.msk [vmem:[#allocation2 + $0x170] sm:$0xff] %vm1584, %v1485
    %1632 = vst.msk [vmem:[#allocation2 + $0x178] sm:$0xff] %vm1584, %v1487
    %1633 = vst.msk [vmem:[#allocation2 + $0x180] sm:$0xff] %vm1584, %v1489
    %1634 = vst.msk [vmem:[#allocation2 + $0x188] sm:$0xff] %vm1584, %v1491
    %1635 = vst.msk [vmem:[#allocation2 + $0x190] sm:$0xff] %vm1584, %v1493
    %1636 = vst.msk [vmem:[#allocation2 + $0x198] sm:$0xff] %vm1584, %v1495
    %1637 = vst.msk [vmem:[#allocation2 + $0x1a0] sm:$0xff] %vm1584, %v1497
    %1638 = vst.msk [vmem:[#allocation2 + $0x1a8] sm:$0xff] %vm1584, %v1499
    %1639 = vst.msk [vmem:[#allocation2 + $0x1b0] sm:$0xff] %vm1584, %v1501
    %1640 = vst.msk [vmem:[#allocation2 + $0x1b8] sm:$0xff] %vm1584, %v1503
    %1641 = vst.msk [vmem:[#allocation2 + $0x1c0] sm:$0xff] %vm1584, %v1505
    %1642 = vst.msk [vmem:[#allocation2 + $0x1c8] sm:$0xff] %vm1584, %v1507
    %1643 = vst.msk [vmem:[#allocation2 + $0x1d0] sm:$0xff] %vm1584, %v1509
    %1644 = vst.msk [vmem:[#allocation2 + $0x1d8] sm:$0xff] %vm1584, %v1511
    %1645 = vst.msk [vmem:[#allocation2 + $0x1e0] sm:$0xff] %vm1584, %v1513
    %1646 = vst.msk [vmem:[#allocation2 + $0x1e8] sm:$0xff] %vm1584, %v1515
    %1647 = vst.msk [vmem:[#allocation2 + $0x1f0] sm:$0xff] %vm1584, %v1517
    %1648 = vst.msk [vmem:[#allocation2 + $0x1f8] sm:$0xff] %vm1584, %v1519
    %v1649 = vrot.slane %v62, 2
    %v1650 = vrot.slane %v63, 2
    %v1651 = vsel %vm701, %v1649, %v1650
    %v1652 = vrot.slane %v64, 2
    %v1653 = vsel %vm701, %v1650, %v1652
    %v1654 = vrot.slane %v116, 2
    %v1655 = vrot.slane %v117, 2
    %v1656 = vsel %vm701, %v1654, %v1655
    %v1657 = vrot.slane %v118, 2
    %v1658 = vsel %vm701, %v1655, %v1657
    %1659 = vrot.lane.b32.xlu0 %v709, 20
    %v1660 = vpop.permute.xlu0 %1659
    %1661 = vrot.lane.b32.xlu0 %v711, 20
    %v1662 = vpop.permute.xlu0 %1661
    %1663 = vrot.lane.b32.xlu0 %v714, 20
    %v1664 = vpop.permute.xlu0 %1663
    %1665 = vrot.lane.b32.xlu0 %v716, 20
    %v1666 = vpop.permute.xlu0 %1665
    %1667 = vrot.lane.b32.xlu0 %v719, 20
    %v1668 = vpop.permute.xlu0 %1667
    %1669 = vrot.lane.b32.xlu0 %v721, 20
    %v1670 = vpop.permute.xlu0 %1669
    %1671 = vrot.lane.b32.xlu0 %v724, 20
    %v1672 = vpop.permute.xlu0 %1671
    %1673 = vrot.lane.b32.xlu0 %v726, 20
    %v1674 = vpop.permute.xlu0 %1673
    %1675 = vrot.lane.b32.xlu0 %v729, 20
    %v1676 = vpop.permute.xlu0 %1675
    %1677 = vrot.lane.b32.xlu0 %v731, 20
    %v1678 = vpop.permute.xlu0 %1677
    %1679 = vrot.lane.b32.xlu0 %v734, 20
    %v1680 = vpop.permute.xlu0 %1679
    %1681 = vrot.lane.b32.xlu0 %v736, 20
    %v1682 = vpop.permute.xlu0 %1681
    %1683 = vrot.lane.b32.xlu0 %v739, 20
    %v1684 = vpop.permute.xlu0 %1683
    %1685 = vrot.lane.b32.xlu0 %v741, 20
    %v1686 = vpop.permute.xlu0 %1685
    %1687 = vrot.lane.b32.xlu0 %v744, 20
    %v1688 = vpop.permute.xlu0 %1687
    %1689 = vrot.lane.b32.xlu0 %v746, 20
    %v1690 = vpop.permute.xlu0 %1689
    %1691 = vrot.lane.b32.xlu0 %v749, 20
    %v1692 = vpop.permute.xlu0 %1691
    %1693 = vrot.lane.b32.xlu0 %v751, 20
    %v1694 = vpop.permute.xlu0 %1693
    %1695 = vrot.lane.b32.xlu0 %v754, 20
    %v1696 = vpop.permute.xlu0 %1695
    %1697 = vrot.lane.b32.xlu0 %v756, 20
    %v1698 = vpop.permute.xlu0 %1697
    %1699 = vrot.lane.b32.xlu0 %v759, 20
    %v1700 = vpop.permute.xlu0 %1699
    %1701 = vrot.lane.b32.xlu0 %v761, 20
    %v1702 = vpop.permute.xlu0 %1701
    %1703 = vrot.lane.b32.xlu0 %v764, 20
    %v1704 = vpop.permute.xlu0 %1703
    %1705 = vrot.lane.b32.xlu0 %v766, 20
    %v1706 = vpop.permute.xlu0 %1705
    %1707 = vrot.lane.b32.xlu0 %v769, 20
    %v1708 = vpop.permute.xlu0 %1707
    %1709 = vrot.lane.b32.xlu0 %v771, 20
    %v1710 = vpop.permute.xlu0 %1709
    %1711 = vrot.lane.b32.xlu0 %v774, 20
    %v1712 = vpop.permute.xlu0 %1711
    %1713 = vrot.lane.b32.xlu0 %v776, 20
    %v1714 = vpop.permute.xlu0 %1713
    %1715 = vrot.lane.b32.xlu0 %v779, 20
    %v1716 = vpop.permute.xlu0 %1715
    %1717 = vrot.lane.b32.xlu0 %v781, 20
    %v1718 = vpop.permute.xlu0 %1717
    %1719 = vrot.lane.b32.xlu0 %v1651, 20
    %v1720 = vpop.permute.xlu0 %1719
    %1721 = vrot.lane.b32.xlu0 %v1653, 20
    %v1722 = vpop.permute.xlu0 %1721
    %1723 = vrot.lane.b32.xlu0 %v789, 20
    %v1724 = vpop.permute.xlu0 %1723
    %1725 = vrot.lane.b32.xlu0 %v791, 20
    %v1726 = vpop.permute.xlu0 %1725
    %1727 = vrot.lane.b32.xlu0 %v794, 20
    %v1728 = vpop.permute.xlu0 %1727
    %1729 = vrot.lane.b32.xlu0 %v796, 20
    %v1730 = vpop.permute.xlu0 %1729
    %1731 = vrot.lane.b32.xlu0 %v799, 20
    %v1732 = vpop.permute.xlu0 %1731
    %1733 = vrot.lane.b32.xlu0 %v801, 20
    %v1734 = vpop.permute.xlu0 %1733
    %1735 = vrot.lane.b32.xlu0 %v804, 20
    %v1736 = vpop.permute.xlu0 %1735
    %1737 = vrot.lane.b32.xlu0 %v806, 20
    %v1738 = vpop.permute.xlu0 %1737
    %1739 = vrot.lane.b32.xlu0 %v809, 20
    %v1740 = vpop.permute.xlu0 %1739
    %1741 = vrot.lane.b32.xlu0 %v811, 20
    %v1742 = vpop.permute.xlu0 %1741
    %1743 = vrot.lane.b32.xlu0 %v814, 20
    %v1744 = vpop.permute.xlu0 %1743
    %1745 = vrot.lane.b32.xlu0 %v816, 20
    %v1746 = vpop.permute.xlu0 %1745
    %1747 = vrot.lane.b32.xlu0 %v819, 20
    %v1748 = vpop.permute.xlu0 %1747
    %1749 = vrot.lane.b32.xlu0 %v821, 20
    %v1750 = vpop.permute.xlu0 %1749
    %1751 = vrot.lane.b32.xlu0 %v824, 20
    %v1752 = vpop.permute.xlu0 %1751
    %1753 = vrot.lane.b32.xlu0 %v826, 20
    %v1754 = vpop.permute.xlu0 %1753
    %1755 = vrot.lane.b32.xlu0 %v829, 20
    %v1756 = vpop.permute.xlu0 %1755
    %1757 = vrot.lane.b32.xlu0 %v831, 20
    %v1758 = vpop.permute.xlu0 %1757
    %1759 = vrot.lane.b32.xlu0 %v834, 20
    %v1760 = vpop.permute.xlu0 %1759
    %1761 = vrot.lane.b32.xlu0 %v836, 20
    %v1762 = vpop.permute.xlu0 %1761
    %1763 = vrot.lane.b32.xlu0 %v839, 20
    %v1764 = vpop.permute.xlu0 %1763
    %1765 = vrot.lane.b32.xlu0 %v841, 20
    %v1766 = vpop.permute.xlu0 %1765
    %1767 = vrot.lane.b32.xlu0 %v844, 20
    %v1768 = vpop.permute.xlu0 %1767
    %1769 = vrot.lane.b32.xlu0 %v846, 20
    %v1770 = vpop.permute.xlu0 %1769
    %1771 = vrot.lane.b32.xlu0 %v849, 20
    %v1772 = vpop.permute.xlu0 %1771
    %1773 = vrot.lane.b32.xlu0 %v851, 20
    %v1774 = vpop.permute.xlu0 %1773
    %1775 = vrot.lane.b32.xlu0 %v854, 20
    %v1776 = vpop.permute.xlu0 %1775
    %1777 = vrot.lane.b32.xlu0 %v856, 20
    %v1778 = vpop.permute.xlu0 %1777
    %1779 = vrot.lane.b32.xlu0 %v859, 20
    %v1780 = vpop.permute.xlu0 %1779
    %1781 = vrot.lane.b32.xlu0 %v861, 20
    %v1782 = vpop.permute.xlu0 %1781
    %1783 = vrot.lane.b32.xlu0 %v1656, 20
    %v1784 = vpop.permute.xlu0 %1783
    %1785 = vrot.lane.b32.xlu0 %v1658, 20
    %v1786 = vpop.permute.xlu0 %1785
    %vm1851 = vcmask 195744
    %1852 = vst.msk [vmem:[#allocation2] sm:$0xff] %vm1851, %v1660
    %1853 = vst.msk [vmem:[#allocation2 + $0x8] sm:$0xff] %vm1851, %v1662
    %1854 = vst.msk [vmem:[#allocation2 + $0x10] sm:$0xff] %vm1851, %v1664
    %1855 = vst.msk [vmem:[#allocation2 + $0x18] sm:$0xff] %vm1851, %v1666
    %1856 = vst.msk [vmem:[#allocation2 + $0x20] sm:$0xff] %vm1851, %v1668
    %1857 = vst.msk [vmem:[#allocation2 + $0x28] sm:$0xff] %vm1851, %v1670
    %1858 = vst.msk [vmem:[#allocation2 + $0x30] sm:$0xff] %vm1851, %v1672
    %1859 = vst.msk [vmem:[#allocation2 + $0x38] sm:$0xff] %vm1851, %v1674
    %1860 = vst.msk [vmem:[#allocation2 + $0x40] sm:$0xff] %vm1851, %v1676
    %1861 = vst.msk [vmem:[#allocation2 + $0x48] sm:$0xff] %vm1851, %v1678
    %1862 = vst.msk [vmem:[#allocation2 + $0x50] sm:$0xff] %vm1851, %v1680
    %1863 = vst.msk [vmem:[#allocation2 + $0x58] sm:$0xff] %vm1851, %v1682
    %1864 = vst.msk [vmem:[#allocation2 + $0x60] sm:$0xff] %vm1851, %v1684
    %1865 = vst.msk [vmem:[#allocation2 + $0x68] sm:$0xff] %vm1851, %v1686
    %1866 = vst.msk [vmem:[#allocation2 + $0x70] sm:$0xff] %vm1851, %v1688
    %1867 = vst.msk [vmem:[#allocation2 + $0x78] sm:$0xff] %vm1851, %v1690
    %1868 = vst.msk [vmem:[#allocation2 + $0x80] sm:$0xff] %vm1851, %v1692
    %1869 = vst.msk [vmem:[#allocation2 + $0x88] sm:$0xff] %vm1851, %v1694
    %1870 = vst.msk [vmem:[#allocation2 + $0x90] sm:$0xff] %vm1851, %v1696
    %1871 = vst.msk [vmem:[#allocation2 + $0x98] sm:$0xff] %vm1851, %v1698
    %1872 = vst.msk [vmem:[#allocation2 + $0xa0] sm:$0xff] %vm1851, %v1700
    %1873 = vst.msk [vmem:[#allocation2 + $0xa8] sm:$0xff] %vm1851, %v1702
    %1874 = vst.msk [vmem:[#allocation2 + $0xb0] sm:$0xff] %vm1851, %v1704
    %1875 = vst.msk [vmem:[#allocation2 + $0xb8] sm:$0xff] %vm1851, %v1706
    %1876 = vst.msk [vmem:[#allocation2 + $0xc0] sm:$0xff] %vm1851, %v1708
    %1877 = vst.msk [vmem:[#allocation2 + $0xc8] sm:$0xff] %vm1851, %v1710
    %1878 = vst.msk [vmem:[#allocation2 + $0xd0] sm:$0xff] %vm1851, %v1712
    %1879 = vst.msk [vmem:[#allocation2 + $0xd8] sm:$0xff] %vm1851, %v1714
    %1880 = vst.msk [vmem:[#allocation2 + $0xe0] sm:$0xff] %vm1851, %v1716
    %1881 = vst.msk [vmem:[#allocation2 + $0xe8] sm:$0xff] %vm1851, %v1718
    %1882 = vst.msk [vmem:[#allocation2 + $0xf0] sm:$0xff] %vm1851, %v1720
    %1883 = vst.msk [vmem:[#allocation2 + $0xf8] sm:$0xff] %vm1851, %v1722
    %1884 = vst.msk [vmem:[#allocation2 + $0x100] sm:$0xff] %vm1851, %v1724
    %1885 = vst.msk [vmem:[#allocation2 + $0x108] sm:$0xff] %vm1851, %v1726
    %1886 = vst.msk [vmem:[#allocation2 + $0x110] sm:$0xff] %vm1851, %v1728
    %1887 = vst.msk [vmem:[#allocation2 + $0x118] sm:$0xff] %vm1851, %v1730
    %1888 = vst.msk [vmem:[#allocation2 + $0x120] sm:$0xff] %vm1851, %v1732
    %1889 = vst.msk [vmem:[#allocation2 + $0x128] sm:$0xff] %vm1851, %v1734
    %1890 = vst.msk [vmem:[#allocation2 + $0x130] sm:$0xff] %vm1851, %v1736
    %1891 = vst.msk [vmem:[#allocation2 + $0x138] sm:$0xff] %vm1851, %v1738
    %1892 = vst.msk [vmem:[#allocation2 + $0x140] sm:$0xff] %vm1851, %v1740
    %1893 = vst.msk [vmem:[#allocation2 + $0x148] sm:$0xff] %vm1851, %v1742
    %1894 = vst.msk [vmem:[#allocation2 + $0x150] sm:$0xff] %vm1851, %v1744
    %1895 = vst.msk [vmem:[#allocation2 + $0x158] sm:$0xff] %vm1851, %v1746
    %1896 = vst.msk [vmem:[#allocation2 + $0x160] sm:$0xff] %vm1851, %v1748
    %1897 = vst.msk [vmem:[#allocation2 + $0x168] sm:$0xff] %vm1851, %v1750
    %1898 = vst.msk [vmem:[#allocation2 + $0x170] sm:$0xff] %vm1851, %v1752
    %1899 = vst.msk [vmem:[#allocation2 + $0x178] sm:$0xff] %vm1851, %v1754
    %1900 = vst.msk [vmem:[#allocation2 + $0x180] sm:$0xff] %vm1851, %v1756
    %1901 = vst.msk [vmem:[#allocation2 + $0x188] sm:$0xff] %vm1851, %v1758
    %1902 = vst.msk [vmem:[#allocation2 + $0x190] sm:$0xff] %vm1851, %v1760
    %1903 = vst.msk [vmem:[#allocation2 + $0x198] sm:$0xff] %vm1851, %v1762
    %1904 = vst.msk [vmem:[#allocation2 + $0x1a0] sm:$0xff] %vm1851, %v1764
    %1905 = vst.msk [vmem:[#allocation2 + $0x1a8] sm:$0xff] %vm1851, %v1766
    %1906 = vst.msk [vmem:[#allocation2 + $0x1b0] sm:$0xff] %vm1851, %v1768
    %1907 = vst.msk [vmem:[#allocation2 + $0x1b8] sm:$0xff] %vm1851, %v1770
    %1908 = vst.msk [vmem:[#allocation2 + $0x1c0] sm:$0xff] %vm1851, %v1772
    %1909 = vst.msk [vmem:[#allocation2 + $0x1c8] sm:$0xff] %vm1851, %v1774
    %1910 = vst.msk [vmem:[#allocation2 + $0x1d0] sm:$0xff] %vm1851, %v1776
    %1911 = vst.msk [vmem:[#allocation2 + $0x1d8] sm:$0xff] %vm1851, %v1778
    %1912 = vst.msk [vmem:[#allocation2 + $0x1e0] sm:$0xff] %vm1851, %v1780
    %1913 = vst.msk [vmem:[#allocation2 + $0x1e8] sm:$0xff] %vm1851, %v1782
    %1914 = vst.msk [vmem:[#allocation2 + $0x1f0] sm:$0xff] %vm1851, %v1784
    %1915 = vst.msk [vmem:[#allocation2 + $0x1f8] sm:$0xff] %vm1851, %v1786
    %1920 = vrot.lane.b32.xlu0 %v20, 24
    %v1921 = vpop.permute.xlu0 %1920
    %1922 = vrot.lane.b32.xlu0 %v21, 24
    %v1923 = vpop.permute.xlu0 %1922
    %1924 = vrot.lane.b32.xlu0 %v23, 24
    %v1925 = vpop.permute.xlu0 %1924
    %1926 = vrot.lane.b32.xlu0 %v24, 24
    %v1927 = vpop.permute.xlu0 %1926
    %1928 = vrot.lane.b32.xlu0 %v26, 24
    %v1929 = vpop.permute.xlu0 %1928
    %1930 = vrot.lane.b32.xlu0 %v27, 24
    %v1931 = vpop.permute.xlu0 %1930
    %1932 = vrot.lane.b32.xlu0 %v29, 24
    %v1933 = vpop.permute.xlu0 %1932
    %1934 = vrot.lane.b32.xlu0 %v30, 24
    %v1935 = vpop.permute.xlu0 %1934
    %1936 = vrot.lane.b32.xlu0 %v32, 24
    %v1937 = vpop.permute.xlu0 %1936
    %1938 = vrot.lane.b32.xlu0 %v33, 24
    %v1939 = vpop.permute.xlu0 %1938
    %1940 = vrot.lane.b32.xlu0 %v35, 24
    %v1941 = vpop.permute.xlu0 %1940
    %1942 = vrot.lane.b32.xlu0 %v36, 24
    %v1943 = vpop.permute.xlu0 %1942
    %1944 = vrot.lane.b32.xlu0 %v38, 24
    %v1945 = vpop.permute.xlu0 %1944
    %1946 = vrot.lane.b32.xlu0 %v39, 24
    %v1947 = vpop.permute.xlu0 %1946
    %1948 = vrot.lane.b32.xlu0 %v41, 24
    %v1949 = vpop.permute.xlu0 %1948
    %1950 = vrot.lane.b32.xlu0 %v42, 24
    %v1951 = vpop.permute.xlu0 %1950
    %1952 = vrot.lane.b32.xlu0 %v44, 24
    %v1953 = vpop.permute.xlu0 %1952
    %1954 = vrot.lane.b32.xlu0 %v45, 24
    %v1955 = vpop.permute.xlu0 %1954
    %1956 = vrot.lane.b32.xlu0 %v47, 24
    %v1957 = vpop.permute.xlu0 %1956
    %1958 = vrot.lane.b32.xlu0 %v48, 24
    %v1959 = vpop.permute.xlu0 %1958
    %1960 = vrot.lane.b32.xlu0 %v50, 24
    %v1961 = vpop.permute.xlu0 %1960
    %1962 = vrot.lane.b32.xlu0 %v51, 24
    %v1963 = vpop.permute.xlu0 %1962
    %1964 = vrot.lane.b32.xlu0 %v53, 24
    %v1965 = vpop.permute.xlu0 %1964
    %1966 = vrot.lane.b32.xlu0 %v54, 24
    %v1967 = vpop.permute.xlu0 %1966
    %1968 = vrot.lane.b32.xlu0 %v56, 24
    %v1969 = vpop.permute.xlu0 %1968
    %1970 = vrot.lane.b32.xlu0 %v57, 24
    %v1971 = vpop.permute.xlu0 %1970
    %1972 = vrot.lane.b32.xlu0 %v59, 24
    %v1973 = vpop.permute.xlu0 %1972
    %1974 = vrot.lane.b32.xlu0 %v60, 24
    %v1975 = vpop.permute.xlu0 %1974
    %1976 = vrot.lane.b32.xlu0 %v62, 24
    %v1977 = vpop.permute.xlu0 %1976
    %1978 = vrot.lane.b32.xlu0 %v63, 24
    %v1979 = vpop.permute.xlu0 %1978
    %1980 = vrot.lane.b32.xlu0 %v65, 24
    %v1981 = vpop.permute.xlu0 %1980
    %1982 = vrot.lane.b32.xlu0 %v66, 24
    %v1983 = vpop.permute.xlu0 %1982
    %1984 = vrot.lane.b32.xlu0 %v74, 24
    %v1985 = vpop.permute.xlu0 %1984
    %1986 = vrot.lane.b32.xlu0 %v75, 24
    %v1987 = vpop.permute.xlu0 %1986
    %1988 = vrot.lane.b32.xlu0 %v77, 24
    %v1989 = vpop.permute.xlu0 %1988
    %1990 = vrot.lane.b32.xlu0 %v78, 24
    %v1991 = vpop.permute.xlu0 %1990
    %1992 = vrot.lane.b32.xlu0 %v80, 24
    %v1993 = vpop.permute.xlu0 %1992
    %1994 = vrot.lane.b32.xlu0 %v81, 24
    %v1995 = vpop.permute.xlu0 %1994
    %1996 = vrot.lane.b32.xlu0 %v83, 24
    %v1997 = vpop.permute.xlu0 %1996
    %1998 = vrot.lane.b32.xlu0 %v84, 24
    %v1999 = vpop.permute.xlu0 %1998
    %2000 = vrot.lane.b32.xlu0 %v86, 24
    %v2001 = vpop.permute.xlu0 %2000
    %2002 = vrot.lane.b32.xlu0 %v87, 24
    %v2003 = vpop.permute.xlu0 %2002
    %2004 = vrot.lane.b32.xlu0 %v89, 24
    %v2005 = vpop.permute.xlu0 %2004
    %2006 = vrot.lane.b32.xlu0 %v90, 24
    %v2007 = vpop.permute.xlu0 %2006
    %2008 = vrot.lane.b32.xlu0 %v92, 24
    %v2009 = vpop.permute.xlu0 %2008
    %2010 = vrot.lane.b32.xlu0 %v93, 24
    %v2011 = vpop.permute.xlu0 %2010
    %2012 = vrot.lane.b32.xlu0 %v95, 24
    %v2013 = vpop.permute.xlu0 %2012
    %2014 = vrot.lane.b32.xlu0 %v96, 24
    %v2015 = vpop.permute.xlu0 %2014
    %2016 = vrot.lane.b32.xlu0 %v98, 24
    %v2017 = vpop.permute.xlu0 %2016
    %2018 = vrot.lane.b32.xlu0 %v99, 24
    %v2019 = vpop.permute.xlu0 %2018
    %2020 = vrot.lane.b32.xlu0 %v101, 24
    %v2021 = vpop.permute.xlu0 %2020
    %2022 = vrot.lane.b32.xlu0 %v102, 24
    %v2023 = vpop.permute.xlu0 %2022
    %2024 = vrot.lane.b32.xlu0 %v104, 24
    %v2025 = vpop.permute.xlu0 %2024
    %2026 = vrot.lane.b32.xlu0 %v105, 24
    %v2027 = vpop.permute.xlu0 %2026
    %2028 = vrot.lane.b32.xlu0 %v107, 24
    %v2029 = vpop.permute.xlu0 %2028
    %2030 = vrot.lane.b32.xlu0 %v108, 24
    %v2031 = vpop.permute.xlu0 %2030
    %2032 = vrot.lane.b32.xlu0 %v110, 24
    %v2033 = vpop.permute.xlu0 %2032
    %2034 = vrot.lane.b32.xlu0 %v111, 24
    %v2035 = vpop.permute.xlu0 %2034
    %2036 = vrot.lane.b32.xlu0 %v113, 24
    %v2037 = vpop.permute.xlu0 %2036
    %2038 = vrot.lane.b32.xlu0 %v114, 24
    %v2039 = vpop.permute.xlu0 %2038
    %2040 = vrot.lane.b32.xlu0 %v116, 24
    %v2041 = vpop.permute.xlu0 %2040
    %2042 = vrot.lane.b32.xlu0 %v117, 24
    %v2043 = vpop.permute.xlu0 %2042
    %2044 = vrot.lane.b32.xlu0 %v119, 24
    %v2045 = vpop.permute.xlu0 %2044
    %2046 = vrot.lane.b32.xlu0 %v120, 24
    %v2047 = vpop.permute.xlu0 %2046
    %vm2112 = vcmask 228544
    %2113 = vst.msk [vmem:[#allocation2] sm:$0xff] %vm2112, %v1921
    %2114 = vst.msk [vmem:[#allocation2 + $0x8] sm:$0xff] %vm2112, %v1923
    %2115 = vst.msk [vmem:[#allocation2 + $0x10] sm:$0xff] %vm2112, %v1925
    %2116 = vst.msk [vmem:[#allocation2 + $0x18] sm:$0xff] %vm2112, %v1927
    %2117 = vst.msk [vmem:[#allocation2 + $0x20] sm:$0xff] %vm2112, %v1929
    %2118 = vst.msk [vmem:[#allocation2 + $0x28] sm:$0xff] %vm2112, %v1931
    %2119 = vst.msk [vmem:[#allocation2 + $0x30] sm:$0xff] %vm2112, %v1933
    %2120 = vst.msk [vmem:[#allocation2 + $0x38] sm:$0xff] %vm2112, %v1935
    %2121 = vst.msk [vmem:[#allocation2 + $0x40] sm:$0xff] %vm2112, %v1937
    %2122 = vst.msk [vmem:[#allocation2 + $0x48] sm:$0xff] %vm2112, %v1939
    %2123 = vst.msk [vmem:[#allocation2 + $0x50] sm:$0xff] %vm2112, %v1941
    %2124 = vst.msk [vmem:[#allocation2 + $0x58] sm:$0xff] %vm2112, %v1943
    %2125 = vst.msk [vmem:[#allocation2 + $0x60] sm:$0xff] %vm2112, %v1945
    %2126 = vst.msk [vmem:[#allocation2 + $0x68] sm:$0xff] %vm2112, %v1947
    %2127 = vst.msk [vmem:[#allocation2 + $0x70] sm:$0xff] %vm2112, %v1949
    %2128 = vst.msk [vmem:[#allocation2 + $0x78] sm:$0xff] %vm2112, %v1951
    %2129 = vst.msk [vmem:[#allocation2 + $0x80] sm:$0xff] %vm2112, %v1953
    %2130 = vst.msk [vmem:[#allocation2 + $0x88] sm:$0xff] %vm2112, %v1955
    %2131 = vst.msk [vmem:[#allocation2 + $0x90] sm:$0xff] %vm2112, %v1957
    %2132 = vst.msk [vmem:[#allocation2 + $0x98] sm:$0xff] %vm2112, %v1959
    %2133 = vst.msk [vmem:[#allocation2 + $0xa0] sm:$0xff] %vm2112, %v1961
    %2134 = vst.msk [vmem:[#allocation2 + $0xa8] sm:$0xff] %vm2112, %v1963
    %2135 = vst.msk [vmem:[#allocation2 + $0xb0] sm:$0xff] %vm2112, %v1965
    %2136 = vst.msk [vmem:[#allocation2 + $0xb8] sm:$0xff] %vm2112, %v1967
    %2137 = vst.msk [vmem:[#allocation2 + $0xc0] sm:$0xff] %vm2112, %v1969
    %2138 = vst.msk [vmem:[#allocation2 + $0xc8] sm:$0xff] %vm2112, %v1971
    %2139 = vst.msk [vmem:[#allocation2 + $0xd0] sm:$0xff] %vm2112, %v1973
    %2140 = vst.msk [vmem:[#allocation2 + $0xd8] sm:$0xff] %vm2112, %v1975
    %2141 = vst.msk [vmem:[#allocation2 + $0xe0] sm:$0xff] %vm2112, %v1977
    %2142 = vst.msk [vmem:[#allocation2 + $0xe8] sm:$0xff] %vm2112, %v1979
    %2143 = vst.msk [vmem:[#allocation2 + $0xf0] sm:$0xff] %vm2112, %v1981
    %2144 = vst.msk [vmem:[#allocation2 + $0xf8] sm:$0xff] %vm2112, %v1983
    %2145 = vst.msk [vmem:[#allocation2 + $0x100] sm:$0xff] %vm2112, %v1985
    %2146 = vst.msk [vmem:[#allocation2 + $0x108] sm:$0xff] %vm2112, %v1987
    %2147 = vst.msk [vmem:[#allocation2 + $0x110] sm:$0xff] %vm2112, %v1989
    %2148 = vst.msk [vmem:[#allocation2 + $0x118] sm:$0xff] %vm2112, %v1991
    %2149 = vst.msk [vmem:[#allocation2 + $0x120] sm:$0xff] %vm2112, %v1993
    %2150 = vst.msk [vmem:[#allocation2 + $0x128] sm:$0xff] %vm2112, %v1995
    %2151 = vst.msk [vmem:[#allocation2 + $0x130] sm:$0xff] %vm2112, %v1997
    %2152 = vst.msk [vmem:[#allocation2 + $0x138] sm:$0xff] %vm2112, %v1999
    %2153 = vst.msk [vmem:[#allocation2 + $0x140] sm:$0xff] %vm2112, %v2001
    %2154 = vst.msk [vmem:[#allocation2 + $0x148] sm:$0xff] %vm2112, %v2003
    %2155 = vst.msk [vmem:[#allocation2 + $0x150] sm:$0xff] %vm2112, %v2005
    %2156 = vst.msk [vmem:[#allocation2 + $0x158] sm:$0xff] %vm2112, %v2007
    %2157 = vst.msk [vmem:[#allocation2 + $0x160] sm:$0xff] %vm2112, %v2009
    %2158 = vst.msk [vmem:[#allocation2 + $0x168] sm:$0xff] %vm2112, %v2011
    %2159 = vst.msk [vmem:[#allocation2 + $0x170] sm:$0xff] %vm2112, %v2013
    %2160 = vst.msk [vmem:[#allocation2 + $0x178] sm:$0xff] %vm2112, %v2015
    %2161 = vst.msk [vmem:[#allocation2 + $0x180] sm:$0xff] %vm2112, %v2017
    %2162 = vst.msk [vmem:[#allocation2 + $0x188] sm:$0xff] %vm2112, %v2019
    %2163 = vst.msk [vmem:[#allocation2 + $0x190] sm:$0xff] %vm2112, %v2021
    %2164 = vst.msk [vmem:[#allocation2 + $0x198] sm:$0xff] %vm2112, %v2023
    %2165 = vst.msk [vmem:[#allocation2 + $0x1a0] sm:$0xff] %vm2112, %v2025
    %2166 = vst.msk [vmem:[#allocation2 + $0x1a8] sm:$0xff] %vm2112, %v2027
    %2167 = vst.msk [vmem:[#allocation2 + $0x1b0] sm:$0xff] %vm2112, %v2029
    %2168 = vst.msk [vmem:[#allocation2 + $0x1b8] sm:$0xff] %vm2112, %v2031
    %2169 = vst.msk [vmem:[#allocation2 + $0x1c0] sm:$0xff] %vm2112, %v2033
    %2170 = vst.msk [vmem:[#allocation2 + $0x1c8] sm:$0xff] %vm2112, %v2035
    %2171 = vst.msk [vmem:[#allocation2 + $0x1d0] sm:$0xff] %vm2112, %v2037
    %2172 = vst.msk [vmem:[#allocation2 + $0x1d8] sm:$0xff] %vm2112, %v2039
    %2173 = vst.msk [vmem:[#allocation2 + $0x1e0] sm:$0xff] %vm2112, %v2041
    %2174 = vst.msk [vmem:[#allocation2 + $0x1e8] sm:$0xff] %vm2112, %v2043
    %2175 = vst.msk [vmem:[#allocation2 + $0x1f0] sm:$0xff] %vm2112, %v2045
    %2176 = vst.msk [vmem:[#allocation2 + $0x1f8] sm:$0xff] %vm2112, %v2047
    %v2179 = vrot.slane %v65, 1
    %v2180 = vrot.slane %v66, 1
    %v2181 = vsel %vm283, %v2179, %v2180
    %v2182 = vrot.slane %v67, 1
    %v2183 = vsel %vm283, %v2180, %v2182
    %v2184 = vrot.slane %v119, 1
    %v2185 = vrot.slane %v120, 1
    %v2186 = vsel %vm283, %v2184, %v2185
    %v2187 = vrot.slane %v121, 1
    %v2188 = vsel %vm283, %v2185, %v2187
    %2189 = vrot.lane.b32.xlu0 %v296, 28
    %v2190 = vpop.permute.xlu0 %2189
    %2191 = vrot.lane.b32.xlu0 %v298, 28
    %v2192 = vpop.permute.xlu0 %2191
    %2193 = vrot.lane.b32.xlu0 %v301, 28
    %v2194 = vpop.permute.xlu0 %2193
    %2195 = vrot.lane.b32.xlu0 %v303, 28
    %v2196 = vpop.permute.xlu0 %2195
    %2197 = vrot.lane.b32.xlu0 %v306, 28
    %v2198 = vpop.permute.xlu0 %2197
    %2199 = vrot.lane.b32.xlu0 %v308, 28
    %v2200 = vpop.permute.xlu0 %2199
    %2201 = vrot.lane.b32.xlu0 %v311, 28
    %v2202 = vpop.permute.xlu0 %2201
    %2203 = vrot.lane.b32.xlu0 %v313, 28
    %v2204 = vpop.permute.xlu0 %2203
    %2205 = vrot.lane.b32.xlu0 %v316, 28
    %v2206 = vpop.permute.xlu0 %2205
    %2207 = vrot.lane.b32.xlu0 %v318, 28
    %v2208 = vpop.permute.xlu0 %2207
    %2209 = vrot.lane.b32.xlu0 %v321, 28
    %v2210 = vpop.permute.xlu0 %2209
    %2211 = vrot.lane.b32.xlu0 %v323, 28
    %v2212 = vpop.permute.xlu0 %2211
    %2213 = vrot.lane.b32.xlu0 %v326, 28
    %v2214 = vpop.permute.xlu0 %2213
    %2215 = vrot.lane.b32.xlu0 %v328, 28
    %v2216 = vpop.permute.xlu0 %2215
    %2217 = vrot.lane.b32.xlu0 %v331, 28
    %v2218 = vpop.permute.xlu0 %2217
    %2219 = vrot.lane.b32.xlu0 %v333, 28
    %v2220 = vpop.permute.xlu0 %2219
    %2221 = vrot.lane.b32.xlu0 %v336, 28
    %v2222 = vpop.permute.xlu0 %2221
    %2223 = vrot.lane.b32.xlu0 %v338, 28
    %v2224 = vpop.permute.xlu0 %2223
    %2225 = vrot.lane.b32.xlu0 %v341, 28
    %v2226 = vpop.permute.xlu0 %2225
    %2227 = vrot.lane.b32.xlu0 %v343, 28
    %v2228 = vpop.permute.xlu0 %2227
    %2229 = vrot.lane.b32.xlu0 %v346, 28
    %v2230 = vpop.permute.xlu0 %2229
    %2231 = vrot.lane.b32.xlu0 %v348, 28
    %v2232 = vpop.permute.xlu0 %2231
    %2233 = vrot.lane.b32.xlu0 %v351, 28
    %v2234 = vpop.permute.xlu0 %2233
    %2235 = vrot.lane.b32.xlu0 %v353, 28
    %v2236 = vpop.permute.xlu0 %2235
    %2237 = vrot.lane.b32.xlu0 %v356, 28
    %v2238 = vpop.permute.xlu0 %2237
    %2239 = vrot.lane.b32.xlu0 %v358, 28
    %v2240 = vpop.permute.xlu0 %2239
    %2241 = vrot.lane.b32.xlu0 %v361, 28
    %v2242 = vpop.permute.xlu0 %2241
    %2243 = vrot.lane.b32.xlu0 %v363, 28
    %v2244 = vpop.permute.xlu0 %2243
    %2245 = vrot.lane.b32.xlu0 %v1384, 28
    %v2246 = vpop.permute.xlu0 %2245
    %2247 = vrot.lane.b32.xlu0 %v1386, 28
    %v2248 = vpop.permute.xlu0 %2247
    %2249 = vrot.lane.b32.xlu0 %v2181, 28
    %v2250 = vpop.permute.xlu0 %2249
    %2251 = vrot.lane.b32.xlu0 %v2183, 28
    %v2252 = vpop.permute.xlu0 %2251
    %2253 = vrot.lane.b32.xlu0 %v376, 28
    %v2254 = vpop.permute.xlu0 %2253
    %2255 = vrot.lane.b32.xlu0 %v378, 28
    %v2256 = vpop.permute.xlu0 %2255
    %2257 = vrot.lane.b32.xlu0 %v381, 28
    %v2258 = vpop.permute.xlu0 %2257
    %2259 = vrot.lane.b32.xlu0 %v383, 28
    %v2260 = vpop.permute.xlu0 %2259
    %2261 = vrot.lane.b32.xlu0 %v386, 28
    %v2262 = vpop.permute.xlu0 %2261
    %2263 = vrot.lane.b32.xlu0 %v388, 28
    %v2264 = vpop.permute.xlu0 %2263
    %2265 = vrot.lane.b32.xlu0 %v391, 28
    %v2266 = vpop.permute.xlu0 %2265
    %2267 = vrot.lane.b32.xlu0 %v393, 28
    %v2268 = vpop.permute.xlu0 %2267
    %2269 = vrot.lane.b32.xlu0 %v396, 28
    %v2270 = vpop.permute.xlu0 %2269
    %2271 = vrot.lane.b32.xlu0 %v398, 28
    %v2272 = vpop.permute.xlu0 %2271
    %2273 = vrot.lane.b32.xlu0 %v401, 28
    %v2274 = vpop.permute.xlu0 %2273
    %2275 = vrot.lane.b32.xlu0 %v403, 28
    %v2276 = vpop.permute.xlu0 %2275
    %2277 = vrot.lane.b32.xlu0 %v406, 28
    %v2278 = vpop.permute.xlu0 %2277
    %2279 = vrot.lane.b32.xlu0 %v408, 28
    %v2280 = vpop.permute.xlu0 %2279
    %2281 = vrot.lane.b32.xlu0 %v411, 28
    %v2282 = vpop.permute.xlu0 %2281
    %2283 = vrot.lane.b32.xlu0 %v413, 28
    %v2284 = vpop.permute.xlu0 %2283
    %2285 = vrot.lane.b32.xlu0 %v416, 28
    %v2286 = vpop.permute.xlu0 %2285
    %2287 = vrot.lane.b32.xlu0 %v418, 28
    %v2288 = vpop.permute.xlu0 %2287
    %2289 = vrot.lane.b32.xlu0 %v421, 28
    %v2290 = vpop.permute.xlu0 %2289
    %2291 = vrot.lane.b32.xlu0 %v423, 28
    %v2292 = vpop.permute.xlu0 %2291
    %2293 = vrot.lane.b32.xlu0 %v426, 28
    %v2294 = vpop.permute.xlu0 %2293
    %2295 = vrot.lane.b32.xlu0 %v428, 28
    %v2296 = vpop.permute.xlu0 %2295
    %2297 = vrot.lane.b32.xlu0 %v431, 28
    %v2298 = vpop.permute.xlu0 %2297
    %2299 = vrot.lane.b32.xlu0 %v433, 28
    %v2300 = vpop.permute.xlu0 %2299
    %2301 = vrot.lane.b32.xlu0 %v436, 28
    %v2302 = vpop.permute.xlu0 %2301
    %2303 = vrot.lane.b32.xlu0 %v438, 28
    %v2304 = vpop.permute.xlu0 %2303
    %2305 = vrot.lane.b32.xlu0 %v441, 28
    %v2306 = vpop.permute.xlu0 %2305
    %2307 = vrot.lane.b32.xlu0 %v443, 28
    %v2308 = vpop.permute.xlu0 %2307
    %2309 = vrot.lane.b32.xlu0 %v1389, 28
    %v2310 = vpop.permute.xlu0 %2309
    %2311 = vrot.lane.b32.xlu0 %v1391, 28
    %v2312 = vpop.permute.xlu0 %2311
    %2313 = vrot.lane.b32.xlu0 %v2186, 28
    %v2314 = vpop.permute.xlu0 %2313
    %2315 = vrot.lane.b32.xlu0 %v2188, 28
    %v2316 = vpop.permute.xlu0 %2315
    %vm2381 = vcmask 261344
    %2382 = vst.msk [vmem:[#allocation2] sm:$0xff] %vm2381, %v2190
    %2383 = vst.msk [vmem:[#allocation2 + $0x8] sm:$0xff] %vm2381, %v2192
    %2384 = vst.msk [vmem:[#allocation2 + $0x10] sm:$0xff] %vm2381, %v2194
    %2385 = vst.msk [vmem:[#allocation2 + $0x18] sm:$0xff] %vm2381, %v2196
    %2386 = vst.msk [vmem:[#allocation2 + $0x20] sm:$0xff] %vm2381, %v2198
    %2387 = vst.msk [vmem:[#allocation2 + $0x28] sm:$0xff] %vm2381, %v2200
    %2388 = vst.msk [vmem:[#allocation2 + $0x30] sm:$0xff] %vm2381, %v2202
    %2389 = vst.msk [vmem:[#allocation2 + $0x38] sm:$0xff] %vm2381, %v2204
    %2390 = vst.msk [vmem:[#allocation2 + $0x40] sm:$0xff] %vm2381, %v2206
    %2391 = vst.msk [vmem:[#allocation2 + $0x48] sm:$0xff] %vm2381, %v2208
    %2392 = vst.msk [vmem:[#allocation2 + $0x50] sm:$0xff] %vm2381, %v2210
    %2393 = vst.msk [vmem:[#allocation2 + $0x58] sm:$0xff] %vm2381, %v2212
    %2394 = vst.msk [vmem:[#allocation2 + $0x60] sm:$0xff] %vm2381, %v2214
    %2395 = vst.msk [vmem:[#allocation2 + $0x68] sm:$0xff] %vm2381, %v2216
    %2396 = vst.msk [vmem:[#allocation2 + $0x70] sm:$0xff] %vm2381, %v2218
    %2397 = vst.msk [vmem:[#allocation2 + $0x78] sm:$0xff] %vm2381, %v2220
    %2398 = vst.msk [vmem:[#allocation2 + $0x80] sm:$0xff] %vm2381, %v2222
    %2399 = vst.msk [vmem:[#allocation2 + $0x88] sm:$0xff] %vm2381, %v2224
    %2400 = vst.msk [vmem:[#allocation2 + $0x90] sm:$0xff] %vm2381, %v2226
    %2401 = vst.msk [vmem:[#allocation2 + $0x98] sm:$0xff] %vm2381, %v2228
    %2402 = vst.msk [vmem:[#allocation2 + $0xa0] sm:$0xff] %vm2381, %v2230
    %2403 = vst.msk [vmem:[#allocation2 + $0xa8] sm:$0xff] %vm2381, %v2232
    %2404 = vst.msk [vmem:[#allocation2 + $0xb0] sm:$0xff] %vm2381, %v2234
    %2405 = vst.msk [vmem:[#allocation2 + $0xb8] sm:$0xff] %vm2381, %v2236
    %2406 = vst.msk [vmem:[#allocation2 + $0xc0] sm:$0xff] %vm2381, %v2238
    %2407 = vst.msk [vmem:[#allocation2 + $0xc8] sm:$0xff] %vm2381, %v2240
    %2408 = vst.msk [vmem:[#allocation2 + $0xd0] sm:$0xff] %vm2381, %v2242
    %2409 = vst.msk [vmem:[#allocation2 + $0xd8] sm:$0xff] %vm2381, %v2244
    %2410 = vst.msk [vmem:[#allocation2 + $0xe0] sm:$0xff] %vm2381, %v2246
    %2411 = vst.msk [vmem:[#allocation2 + $0xe8] sm:$0xff] %vm2381, %v2248
    %2412 = vst.msk [vmem:[#allocation2 + $0xf0] sm:$0xff] %vm2381, %v2250
    %2413 = vst.msk [vmem:[#allocation2 + $0xf8] sm:$0xff] %vm2381, %v2252
    %2414 = vst.msk [vmem:[#allocation2 + $0x100] sm:$0xff] %vm2381, %v2254
    %2415 = vst.msk [vmem:[#allocation2 + $0x108] sm:$0xff] %vm2381, %v2256
    %2416 = vst.msk [vmem:[#allocation2 + $0x110] sm:$0xff] %vm2381, %v2258
    %2417 = vst.msk [vmem:[#allocation2 + $0x118] sm:$0xff] %vm2381, %v2260
    %2418 = vst.msk [vmem:[#allocation2 + $0x120] sm:$0xff] %vm2381, %v2262
    %2419 = vst.msk [vmem:[#allocation2 + $0x128] sm:$0xff] %vm2381, %v2264
    %2420 = vst.msk [vmem:[#allocation2 + $0x130] sm:$0xff] %vm2381, %v2266
    %2421 = vst.msk [vmem:[#allocation2 + $0x138] sm:$0xff] %vm2381, %v2268
    %2422 = vst.msk [vmem:[#allocation2 + $0x140] sm:$0xff] %vm2381, %v2270
    %2423 = vst.msk [vmem:[#allocation2 + $0x148] sm:$0xff] %vm2381, %v2272
    %2424 = vst.msk [vmem:[#allocation2 + $0x150] sm:$0xff] %vm2381, %v2274
    %2425 = vst.msk [vmem:[#allocation2 + $0x158] sm:$0xff] %vm2381, %v2276
    %2426 = vst.msk [vmem:[#allocation2 + $0x160] sm:$0xff] %vm2381, %v2278
    %2427 = vst.msk [vmem:[#allocation2 + $0x168] sm:$0xff] %vm2381, %v2280
    %2428 = vst.msk [vmem:[#allocation2 + $0x170] sm:$0xff] %vm2381, %v2282
    %2429 = vst.msk [vmem:[#allocation2 + $0x178] sm:$0xff] %vm2381, %v2284
    %2430 = vst.msk [vmem:[#allocation2 + $0x180] sm:$0xff] %vm2381, %v2286
    %2431 = vst.msk [vmem:[#allocation2 + $0x188] sm:$0xff] %vm2381, %v2288
    %2432 = vst.msk [vmem:[#allocation2 + $0x190] sm:$0xff] %vm2381, %v2290
    %2433 = vst.msk [vmem:[#allocation2 + $0x198] sm:$0xff] %vm2381, %v2292
    %2434 = vst.msk [vmem:[#allocation2 + $0x1a0] sm:$0xff] %vm2381, %v2294
    %2435 = vst.msk [vmem:[#allocation2 + $0x1a8] sm:$0xff] %vm2381, %v2296
    %2436 = vst.msk [vmem:[#allocation2 + $0x1b0] sm:$0xff] %vm2381, %v2298
    %2437 = vst.msk [vmem:[#allocation2 + $0x1b8] sm:$0xff] %vm2381, %v2300
    %2438 = vst.msk [vmem:[#allocation2 + $0x1c0] sm:$0xff] %vm2381, %v2302
    %2439 = vst.msk [vmem:[#allocation2 + $0x1c8] sm:$0xff] %vm2381, %v2304
    %2440 = vst.msk [vmem:[#allocation2 + $0x1d0] sm:$0xff] %vm2381, %v2306
    %2441 = vst.msk [vmem:[#allocation2 + $0x1d8] sm:$0xff] %vm2381, %v2308
    %2442 = vst.msk [vmem:[#allocation2 + $0x1e0] sm:$0xff] %vm2381, %v2310
    %2443 = vst.msk [vmem:[#allocation2 + $0x1e8] sm:$0xff] %vm2381, %v2312
    %2444 = vst.msk [vmem:[#allocation2 + $0x1f0] sm:$0xff] %vm2381, %v2314
    %2445 = vst.msk [vmem:[#allocation2 + $0x1f8] sm:$0xff] %vm2381, %v2316
    %v2446 = vrot.slane %v65, 2
    %v2447 = vrot.slane %v66, 2
    %v2448 = vsel %vm701, %v2446, %v2447
    %v2449 = vrot.slane %v67, 2
    %v2450 = vsel %vm701, %v2447, %v2449
    %v2451 = vrot.slane %v119, 2
    %v2452 = vrot.slane %v120, 2
    %v2453 = vsel %vm701, %v2451, %v2452
    %v2454 = vrot.slane %v121, 2
    %v2455 = vsel %vm701, %v2452, %v2454
    %2456 = vrot.lane.b32.xlu0 %v714, 32
    %v2457 = vpop.permute.xlu0 %2456
    %2458 = vrot.lane.b32.xlu0 %v716, 32
    %v2459 = vpop.permute.xlu0 %2458
    %2460 = vrot.lane.b32.xlu0 %v719, 32
    %v2461 = vpop.permute.xlu0 %2460
    %2462 = vrot.lane.b32.xlu0 %v721, 32
    %v2463 = vpop.permute.xlu0 %2462
    %2464 = vrot.lane.b32.xlu0 %v724, 32
    %v2465 = vpop.permute.xlu0 %2464
    %2466 = vrot.lane.b32.xlu0 %v726, 32
    %v2467 = vpop.permute.xlu0 %2466
    %2468 = vrot.lane.b32.xlu0 %v729, 32
    %v2469 = vpop.permute.xlu0 %2468
    %2470 = vrot.lane.b32.xlu0 %v731, 32
    %v2471 = vpop.permute.xlu0 %2470
    %2472 = vrot.lane.b32.xlu0 %v734, 32
    %v2473 = vpop.permute.xlu0 %2472
    %2474 = vrot.lane.b32.xlu0 %v736, 32
    %v2475 = vpop.permute.xlu0 %2474
    %2476 = vrot.lane.b32.xlu0 %v739, 32
    %v2477 = vpop.permute.xlu0 %2476
    %2478 = vrot.lane.b32.xlu0 %v741, 32
    %v2479 = vpop.permute.xlu0 %2478
    %2480 = vrot.lane.b32.xlu0 %v744, 32
    %v2481 = vpop.permute.xlu0 %2480
    %2482 = vrot.lane.b32.xlu0 %v746, 32
    %v2483 = vpop.permute.xlu0 %2482
    %2484 = vrot.lane.b32.xlu0 %v749, 32
    %v2485 = vpop.permute.xlu0 %2484
    %2486 = vrot.lane.b32.xlu0 %v751, 32
    %v2487 = vpop.permute.xlu0 %2486
    %2488 = vrot.lane.b32.xlu0 %v754, 32
    %v2489 = vpop.permute.xlu0 %2488
    %2490 = vrot.lane.b32.xlu0 %v756, 32
    %v2491 = vpop.permute.xlu0 %2490
    %2492 = vrot.lane.b32.xlu0 %v759, 32
    %v2493 = vpop.permute.xlu0 %2492
    %2494 = vrot.lane.b32.xlu0 %v761, 32
    %v2495 = vpop.permute.xlu0 %2494
    %2496 = vrot.lane.b32.xlu0 %v764, 32
    %v2497 = vpop.permute.xlu0 %2496
    %2498 = vrot.lane.b32.xlu0 %v766, 32
    %v2499 = vpop.permute.xlu0 %2498
    %2500 = vrot.lane.b32.xlu0 %v769, 32
    %v2501 = vpop.permute.xlu0 %2500
    %2502 = vrot.lane.b32.xlu0 %v771, 32
    %v2503 = vpop.permute.xlu0 %2502
    %2504 = vrot.lane.b32.xlu0 %v774, 32
    %v2505 = vpop.permute.xlu0 %2504
    %2506 = vrot.lane.b32.xlu0 %v776, 32
    %v2507 = vpop.permute.xlu0 %2506
    %2508 = vrot.lane.b32.xlu0 %v779, 32
    %v2509 = vpop.permute.xlu0 %2508
    %2510 = vrot.lane.b32.xlu0 %v781, 32
    %v2511 = vpop.permute.xlu0 %2510
    %2512 = vrot.lane.b32.xlu0 %v1651, 32
    %v2513 = vpop.permute.xlu0 %2512
    %2514 = vrot.lane.b32.xlu0 %v1653, 32
    %v2515 = vpop.permute.xlu0 %2514
    %2516 = vrot.lane.b32.xlu0 %v2448, 32
    %v2517 = vpop.permute.xlu0 %2516
    %2518 = vrot.lane.b32.xlu0 %v2450, 32
    %v2519 = vpop.permute.xlu0 %2518
    %2520 = vrot.lane.b32.xlu0 %v794, 32
    %v2521 = vpop.permute.xlu0 %2520
    %2522 = vrot.lane.b32.xlu0 %v796, 32
    %v2523 = vpop.permute.xlu0 %2522
    %2524 = vrot.lane.b32.xlu0 %v799, 32
    %v2525 = vpop.permute.xlu0 %2524
    %2526 = vrot.lane.b32.xlu0 %v801, 32
    %v2527 = vpop.permute.xlu0 %2526
    %2528 = vrot.lane.b32.xlu0 %v804, 32
    %v2529 = vpop.permute.xlu0 %2528
    %2530 = vrot.lane.b32.xlu0 %v806, 32
    %v2531 = vpop.permute.xlu0 %2530
    %2532 = vrot.lane.b32.xlu0 %v809, 32
    %v2533 = vpop.permute.xlu0 %2532
    %2534 = vrot.lane.b32.xlu0 %v811, 32
    %v2535 = vpop.permute.xlu0 %2534
    %2536 = vrot.lane.b32.xlu0 %v814, 32
    %v2537 = vpop.permute.xlu0 %2536
    %2538 = vrot.lane.b32.xlu0 %v816, 32
    %v2539 = vpop.permute.xlu0 %2538
    %2540 = vrot.lane.b32.xlu0 %v819, 32
    %v2541 = vpop.permute.xlu0 %2540
    %2542 = vrot.lane.b32.xlu0 %v821, 32
    %v2543 = vpop.permute.xlu0 %2542
    %2544 = vrot.lane.b32.xlu0 %v824, 32
    %v2545 = vpop.permute.xlu0 %2544
    %2546 = vrot.lane.b32.xlu0 %v826, 32
    %v2547 = vpop.permute.xlu0 %2546
    %2548 = vrot.lane.b32.xlu0 %v829, 32
    %v2549 = vpop.permute.xlu0 %2548
    %2550 = vrot.lane.b32.xlu0 %v831, 32
    %v2551 = vpop.permute.xlu0 %2550
    %2552 = vrot.lane.b32.xlu0 %v834, 32
    %v2553 = vpop.permute.xlu0 %2552
    %2554 = vrot.lane.b32.xlu0 %v836, 32
    %v2555 = vpop.permute.xlu0 %2554
    %2556 = vrot.lane.b32.xlu0 %v839, 32
    %v2557 = vpop.permute.xlu0 %2556
    %2558 = vrot.lane.b32.xlu0 %v841, 32
    %v2559 = vpop.permute.xlu0 %2558
    %2560 = vrot.lane.b32.xlu0 %v844, 32
    %v2561 = vpop.permute.xlu0 %2560
    %2562 = vrot.lane.b32.xlu0 %v846, 32
    %v2563 = vpop.permute.xlu0 %2562
    %2564 = vrot.lane.b32.xlu0 %v849, 32
    %v2565 = vpop.permute.xlu0 %2564
    %2566 = vrot.lane.b32.xlu0 %v851, 32
    %v2567 = vpop.permute.xlu0 %2566
    %2568 = vrot.lane.b32.xlu0 %v854, 32
    %v2569 = vpop.permute.xlu0 %2568
    %2570 = vrot.lane.b32.xlu0 %v856, 32
    %v2571 = vpop.permute.xlu0 %2570
    %2572 = vrot.lane.b32.xlu0 %v859, 32
    %v2573 = vpop.permute.xlu0 %2572
    %2574 = vrot.lane.b32.xlu0 %v861, 32
    %v2575 = vpop.permute.xlu0 %2574
    %2576 = vrot.lane.b32.xlu0 %v1656, 32
    %v2577 = vpop.permute.xlu0 %2576
    %2578 = vrot.lane.b32.xlu0 %v1658, 32
    %v2579 = vpop.permute.xlu0 %2578
    %2580 = vrot.lane.b32.xlu0 %v2453, 32
    %v2581 = vpop.permute.xlu0 %2580
    %2582 = vrot.lane.b32.xlu0 %v2455, 32
    %v2583 = vpop.permute.xlu0 %2582
    %vm2648 = vcmask 294144
    %2649 = vst.msk [vmem:[#allocation2] sm:$0xff] %vm2648, %v2457
    %2650 = vst.msk [vmem:[#allocation2 + $0x8] sm:$0xff] %vm2648, %v2459
    %2651 = vst.msk [vmem:[#allocation2 + $0x10] sm:$0xff] %vm2648, %v2461
    %2652 = vst.msk [vmem:[#allocation2 + $0x18] sm:$0xff] %vm2648, %v2463
    %2653 = vst.msk [vmem:[#allocation2 + $0x20] sm:$0xff] %vm2648, %v2465
    %2654 = vst.msk [vmem:[#allocation2 + $0x28] sm:$0xff] %vm2648, %v2467
    %2655 = vst.msk [vmem:[#allocation2 + $0x30] sm:$0xff] %vm2648, %v2469
    %2656 = vst.msk [vmem:[#allocation2 + $0x38] sm:$0xff] %vm2648, %v2471
    %2657 = vst.msk [vmem:[#allocation2 + $0x40] sm:$0xff] %vm2648, %v2473
    %2658 = vst.msk [vmem:[#allocation2 + $0x48] sm:$0xff] %vm2648, %v2475
    %2659 = vst.msk [vmem:[#allocation2 + $0x50] sm:$0xff] %vm2648, %v2477
    %2660 = vst.msk [vmem:[#allocation2 + $0x58] sm:$0xff] %vm2648, %v2479
    %2661 = vst.msk [vmem:[#allocation2 + $0x60] sm:$0xff] %vm2648, %v2481
    %2662 = vst.msk [vmem:[#allocation2 + $0x68] sm:$0xff] %vm2648, %v2483
    %2663 = vst.msk [vmem:[#allocation2 + $0x70] sm:$0xff] %vm2648, %v2485
    %2664 = vst.msk [vmem:[#allocation2 + $0x78] sm:$0xff] %vm2648, %v2487
    %2665 = vst.msk [vmem:[#allocation2 + $0x80] sm:$0xff] %vm2648, %v2489
    %2666 = vst.msk [vmem:[#allocation2 + $0x88] sm:$0xff] %vm2648, %v2491
    %2667 = vst.msk [vmem:[#allocation2 + $0x90] sm:$0xff] %vm2648, %v2493
    %2668 = vst.msk [vmem:[#allocation2 + $0x98] sm:$0xff] %vm2648, %v2495
    %2669 = vst.msk [vmem:[#allocation2 + $0xa0] sm:$0xff] %vm2648, %v2497
    %2670 = vst.msk [vmem:[#allocation2 + $0xa8] sm:$0xff] %vm2648, %v2499
    %2671 = vst.msk [vmem:[#allocation2 + $0xb0] sm:$0xff] %vm2648, %v2501
    %2672 = vst.msk [vmem:[#allocation2 + $0xb8] sm:$0xff] %vm2648, %v2503
    %2673 = vst.msk [vmem:[#allocation2 + $0xc0] sm:$0xff] %vm2648, %v2505
    %2674 = vst.msk [vmem:[#allocation2 + $0xc8] sm:$0xff] %vm2648, %v2507
    %2675 = vst.msk [vmem:[#allocation2 + $0xd0] sm:$0xff] %vm2648, %v2509
    %2676 = vst.msk [vmem:[#allocation2 + $0xd8] sm:$0xff] %vm2648, %v2511
    %2677 = vst.msk [vmem:[#allocation2 + $0xe0] sm:$0xff] %vm2648, %v2513
    %2678 = vst.msk [vmem:[#allocation2 + $0xe8] sm:$0xff] %vm2648, %v2515
    %2679 = vst.msk [vmem:[#allocation2 + $0xf0] sm:$0xff] %vm2648, %v2517
    %2680 = vst.msk [vmem:[#allocation2 + $0xf8] sm:$0xff] %vm2648, %v2519
    %2681 = vst.msk [vmem:[#allocation2 + $0x100] sm:$0xff] %vm2648, %v2521
    %2682 = vst.msk [vmem:[#allocation2 + $0x108] sm:$0xff] %vm2648, %v2523
    %2683 = vst.msk [vmem:[#allocation2 + $0x110] sm:$0xff] %vm2648, %v2525
    %2684 = vst.msk [vmem:[#allocation2 + $0x118] sm:$0xff] %vm2648, %v2527
    %2685 = vst.msk [vmem:[#allocation2 + $0x120] sm:$0xff] %vm2648, %v2529
    %2686 = vst.msk [vmem:[#allocation2 + $0x128] sm:$0xff] %vm2648, %v2531
    %2687 = vst.msk [vmem:[#allocation2 + $0x130] sm:$0xff] %vm2648, %v2533
    %2688 = vst.msk [vmem:[#allocation2 + $0x138] sm:$0xff] %vm2648, %v2535
    %2689 = vst.msk [vmem:[#allocation2 + $0x140] sm:$0xff] %vm2648, %v2537
    %2690 = vst.msk [vmem:[#allocation2 + $0x148] sm:$0xff] %vm2648, %v2539
    %2691 = vst.msk [vmem:[#allocation2 + $0x150] sm:$0xff] %vm2648, %v2541
    %2692 = vst.msk [vmem:[#allocation2 + $0x158] sm:$0xff] %vm2648, %v2543
    %2693 = vst.msk [vmem:[#allocation2 + $0x160] sm:$0xff] %vm2648, %v2545
    %2694 = vst.msk [vmem:[#allocation2 + $0x168] sm:$0xff] %vm2648, %v2547
    %2695 = vst.msk [vmem:[#allocation2 + $0x170] sm:$0xff] %vm2648, %v2549
    %2696 = vst.msk [vmem:[#allocation2 + $0x178] sm:$0xff] %vm2648, %v2551
    %2697 = vst.msk [vmem:[#allocation2 + $0x180] sm:$0xff] %vm2648, %v2553
    %2698 = vst.msk [vmem:[#allocation2 + $0x188] sm:$0xff] %vm2648, %v2555
    %2699 = vst.msk [vmem:[#allocation2 + $0x190] sm:$0xff] %vm2648, %v2557
    %2700 = vst.msk [vmem:[#allocation2 + $0x198] sm:$0xff] %vm2648, %v2559
    %2701 = vst.msk [vmem:[#allocation2 + $0x1a0] sm:$0xff] %vm2648, %v2561
    %2702 = vst.msk [vmem:[#allocation2 + $0x1a8] sm:$0xff] %vm2648, %v2563
    %2703 = vst.msk [vmem:[#allocation2 + $0x1b0] sm:$0xff] %vm2648, %v2565
    %2704 = vst.msk [vmem:[#allocation2 + $0x1b8] sm:$0xff] %vm2648, %v2567
    %2705 = vst.msk [vmem:[#allocation2 + $0x1c0] sm:$0xff] %vm2648, %v2569
    %2706 = vst.msk [vmem:[#allocation2 + $0x1c8] sm:$0xff] %vm2648, %v2571
    %2707 = vst.msk [vmem:[#allocation2 + $0x1d0] sm:$0xff] %vm2648, %v2573
    %2708 = vst.msk [vmem:[#allocation2 + $0x1d8] sm:$0xff] %vm2648, %v2575
    %2709 = vst.msk [vmem:[#allocation2 + $0x1e0] sm:$0xff] %vm2648, %v2577
    %2710 = vst.msk [vmem:[#allocation2 + $0x1e8] sm:$0xff] %vm2648, %v2579
    %2711 = vst.msk [vmem:[#allocation2 + $0x1f0] sm:$0xff] %vm2648, %v2581
    %2712 = vst.msk [vmem:[#allocation2 + $0x1f8] sm:$0xff] %vm2648, %v2583
    %v2713 = vld [vmem:[#allocation2] sm:$0xff]
    %v2714 = vld [vmem:[#allocation2 + $0x8] sm:$0xff]
    %v2715 = vld [vmem:[#allocation2 + $0x10] sm:$0xff]
    %v2716 = vld [vmem:[#allocation2 + $0x18] sm:$0xff]
    %v2717 = vld [vmem:[#allocation2 + $0x20] sm:$0xff]
    %v2718 = vld [vmem:[#allocation2 + $0x28] sm:$0xff]
    %v2719 = vld [vmem:[#allocation2 + $0x30] sm:$0xff]
    %v2720 = vld [vmem:[#allocation2 + $0x38] sm:$0xff]
    %v2721 = vld [vmem:[#allocation2 + $0x40] sm:$0xff]
    %v2722 = vld [vmem:[#allocation2 + $0x48] sm:$0xff]
    %v2723 = vld [vmem:[#allocation2 + $0x50] sm:$0xff]
    %v2724 = vld [vmem:[#allocation2 + $0x58] sm:$0xff]
    %v2725 = vld [vmem:[#allocation2 + $0x60] sm:$0xff]
    %v2726 = vld [vmem:[#allocation2 + $0x68] sm:$0xff]
    %v2727 = vld [vmem:[#allocation2 + $0x70] sm:$0xff]
    %v2728 = vld [vmem:[#allocation2 + $0x78] sm:$0xff]
    %v2729 = vld [vmem:[#allocation2 + $0x80] sm:$0xff]
    %v2730 = vld [vmem:[#allocation2 + $0x88] sm:$0xff]
    %v2731 = vld [vmem:[#allocation2 + $0x90] sm:$0xff]
    %v2732 = vld [vmem:[#allocation2 + $0x98] sm:$0xff]
    %v2733 = vld [vmem:[#allocation2 + $0xa0] sm:$0xff]
    %v2734 = vld [vmem:[#allocation2 + $0xa8] sm:$0xff]
    %v2735 = vld [vmem:[#allocation2 + $0xb0] sm:$0xff]
    %v2736 = vld [vmem:[#allocation2 + $0xb8] sm:$0xff]
    %v2737 = vld [vmem:[#allocation2 + $0xc0] sm:$0xff]
    %v2738 = vld [vmem:[#allocation2 + $0xc8] sm:$0xff]
    %v2739 = vld [vmem:[#allocation2 + $0xd0] sm:$0xff]
    %v2740 = vld [vmem:[#allocation2 + $0xd8] sm:$0xff]
    %v2741 = vld [vmem:[#allocation2 + $0xe0] sm:$0xff]
    %v2742 = vld [vmem:[#allocation2 + $0xe8] sm:$0xff]
    %v2743 = vld [vmem:[#allocation2 + $0xf0] sm:$0xff]
    %v2744 = vld [vmem:[#allocation2 + $0xf8] sm:$0xff]
    %v2745 = vld [vmem:[#allocation2 + $0x100] sm:$0xff]
    %v2746 = vld [vmem:[#allocation2 + $0x108] sm:$0xff]
    %v2747 = vld [vmem:[#allocation2 + $0x110] sm:$0xff]
    %v2748 = vld [vmem:[#allocation2 + $0x118] sm:$0xff]
    %v2749 = vld [vmem:[#allocation2 + $0x120] sm:$0xff]
    %v2750 = vld [vmem:[#allocation2 + $0x128] sm:$0xff]
    %v2751 = vld [vmem:[#allocation2 + $0x130] sm:$0xff]
    %v2752 = vld [vmem:[#allocation2 + $0x138] sm:$0xff]
    %v2753 = vld [vmem:[#allocation2 + $0x140] sm:$0xff]
    %v2754 = vld [vmem:[#allocation2 + $0x148] sm:$0xff]
    %v2755 = vld [vmem:[#allocation2 + $0x150] sm:$0xff]
    %v2756 = vld [vmem:[#allocation2 + $0x158] sm:$0xff]
    %v2757 = vld [vmem:[#allocation2 + $0x160] sm:$0xff]
    %v2758 = vld [vmem:[#allocation2 + $0x168] sm:$0xff]
    %v2759 = vld [vmem:[#allocation2 + $0x170] sm:$0xff]
    %v2760 = vld [vmem:[#allocation2 + $0x178] sm:$0xff]
    %v2761 = vld [vmem:[#allocation2 + $0x180] sm:$0xff]
    %v2762 = vld [vmem:[#allocation2 + $0x188] sm:$0xff]
    %v2763 = vld [vmem:[#allocation2 + $0x190] sm:$0xff]
    %v2764 = vld [vmem:[#allocation2 + $0x198] sm:$0xff]
    %v2765 = vld [vmem:[#allocation2 + $0x1a0] sm:$0xff]
    %v2766 = vld [vmem:[#allocation2 + $0x1a8] sm:$0xff]
    %v2767 = vld [vmem:[#allocation2 + $0x1b0] sm:$0xff]
    %v2768 = vld [vmem:[#allocation2 + $0x1b8] sm:$0xff]
    %v2769 = vld [vmem:[#allocation2 + $0x1c0] sm:$0xff]
    %v2770 = vld [vmem:[#allocation2 + $0x1c8] sm:$0xff]
    %v2771 = vld [vmem:[#allocation2 + $0x1d0] sm:$0xff]
    %v2772 = vld [vmem:[#allocation2 + $0x1d8] sm:$0xff]
    %v2773 = vld [vmem:[#allocation2 + $0x1e0] sm:$0xff]
    %v2774 = vld [vmem:[#allocation2 + $0x1e8] sm:$0xff]
    %v2775 = vld [vmem:[#allocation2 + $0x1f0] sm:$0xff]
    %v2776 = vld [vmem:[#allocation2 + $0x1f8] sm:$0xff]
    %v2777 = vld [vmem:[%s1] sm:$0xff]
    %v2778 = vld [vmem:[%s1 + $0x8] sm:$0xff]
    %v2779 = vld [vmem:[%s1 + $0x10] sm:$0xff]
    %v2780 = vld [vmem:[%s1 + $0x18] sm:$0xff]
    %v2781 = vld [vmem:[%s1 + $0x20] sm:$0xf]
    %vm2782 = vcmask 293888
    %v2784 = vsel %vm2782, %v2713, 0
    %v2787 = vsel %vm2782, %v2714, 0
    %v2790 = vsel %vm2782, %v2715, 0
    %v2793 = vsel %vm2782, %v2716, 0
    %v2796 = vsel %vm2782, %v2717, 0
    %v2799 = vsel %vm2782, %v2718, 0
    %v2802 = vsel %vm2782, %v2719, 0
    %v2805 = vsel %vm2782, %v2720, 0
    %v2808 = vsel %vm2782, %v2721, 0
    %v2811 = vsel %vm2782, %v2722, 0
    %v2814 = vsel %vm2782, %v2723, 0
    %v2817 = vsel %vm2782, %v2724, 0
    %v2820 = vsel %vm2782, %v2725, 0
    %v2823 = vsel %vm2782, %v2726, 0
    %v2826 = vsel %vm2782, %v2727, 0
    %v2829 = vsel %vm2782, %v2728, 0
    %v2832 = vsel %vm2782, %v2729, 0
    %v2835 = vsel %vm2782, %v2730, 0
    %v2838 = vsel %vm2782, %v2731, 0
    %v2841 = vsel %vm2782, %v2732, 0
    %v2844 = vsel %vm2782, %v2733, 0
    %v2847 = vsel %vm2782, %v2734, 0
    %v2850 = vsel %vm2782, %v2735, 0
    %v2853 = vsel %vm2782, %v2736, 0
    %v2856 = vsel %vm2782, %v2737, 0
    %v2859 = vsel %vm2782, %v2738, 0
    %v2862 = vsel %vm2782, %v2739, 0
    %v2865 = vsel %vm2782, %v2740, 0
    %v2868 = vsel %vm2782, %v2741, 0
    %v2871 = vsel %vm2782, %v2742, 0
    %v2874 = vsel %vm2782, %v2743, 0
    %v2877 = vsel %vm2782, %v2744, 0
    %v2880 = vsel %vm2782, %v2745, 0
    %v2883 = vsel %vm2782, %v2746, 0
    %v2886 = vsel %vm2782, %v2747, 0
    %v2889 = vsel %vm2782, %v2748, 0
    %v2892 = vsel %vm2782, %v2749, 0
    %v2895 = vsel %vm2782, %v2750, 0
    %v2898 = vsel %vm2782, %v2751, 0
    %v2901 = vsel %vm2782, %v2752, 0
    %v2904 = vsel %vm2782, %v2753, 0
    %v2907 = vsel %vm2782, %v2754, 0
    %v2910 = vsel %vm2782, %v2755, 0
    %v2913 = vsel %vm2782, %v2756, 0
    %v2916 = vsel %vm2782, %v2757, 0
    %v2919 = vsel %vm2782, %v2758, 0
    %v2922 = vsel %vm2782, %v2759, 0
    %v2925 = vsel %vm2782, %v2760, 0
    %v2928 = vsel %vm2782, %v2761, 0
    %v2931 = vsel %vm2782, %v2762, 0
    %v2934 = vsel %vm2782, %v2763, 0
    %v2937 = vsel %vm2782, %v2764, 0
    %v2940 = vsel %vm2782, %v2765, 0
    %v2943 = vsel %vm2782, %v2766, 0
    %v2946 = vsel %vm2782, %v2767, 0
    %v2949 = vsel %vm2782, %v2768, 0
    %v2952 = vsel %vm2782, %v2769, 0
    %v2955 = vsel %vm2782, %v2770, 0
    %v2958 = vsel %vm2782, %v2771, 0
    %v2961 = vsel %vm2782, %v2772, 0
    %v2964 = vsel %vm2782, %v2773, 0
    %v2967 = vsel %vm2782, %v2774, 0
    %v2970 = vsel %vm2782, %v2775, 0
    %v2973 = vsel %vm2782, %v2776, 0
    %vm2975 = vcmask 1043456
    %v2977 = vsel %vm2975, %v2781, 0
    %2979 = vmatprep.subr.mxu0 0.0
    %2980 = vmatpush1.msra.mxu0 %v2777
    %2981 = vmatprep.subr.mxu0 0.0
    %2982 = vmatpush1.msra.mxu0 %v2778
    %2983 = vmatprep.subr.mxu0 0.0
    %2984 = vmatpush1.msra.mxu0 %v2779
    %2985 = vmatprep.subr.mxu0 0.0
    %2986 = vmatpush1.msra.mxu0 %v2780
    %2987 = vmatprep.subr.mxu0 0.0
    %2988 = vmatpush1.msra.mxu0 %v2977
    %2989 = vmatprep.subr.mxu0 0.0
    %2990 = vmatpush1.msra.mxu0 0.0
    %2991 = vmatprep.subr.mxu0 0.0
    %2992 = vmatpush1.msra.mxu0 0.0
    %2993 = vmatprep.subr.mxu0 0.0
    %2994 = vmatpush1.msra.mxu0 0.0
    %2995 = vmatprep.subr.mxu0 0.0
    %2996 = vmatpush1.msra.mxu0 0.0
    %2997 = vmatprep.subr.mxu0 0.0
    %2998 = vmatpush1.msra.mxu0 0.0
    %2999 = vmatprep.subr.mxu0 0.0
    %3000 = vmatpush1.msra.mxu0 0.0
    %3001 = vmatprep.subr.mxu0 0.0
    %3002 = vmatpush1.msra.mxu0 0.0
    %3003 = vmatprep.subr.mxu0 0.0
    %3004 = vmatpush1.msra.mxu0 0.0
    %3005 = vmatprep.subr.mxu0 0.0
    %3006 = vmatpush1.msra.mxu0 0.0
    %3007 = vmatprep.subr.mxu0 0.0
    %3008 = vmatpush1.msra.mxu0 0.0
    %3009 = vmatprep.subr.mxu0 0.0
    %3010 = vmatpush1.msra.mxu0 0.0
    %3011 = vmatprep.subr.mxu0 0.0
    %3012 = vmatpush1.msra.mxu0 0.0
    %3013 = vmatprep.subr.mxu0 0.0
    %3014 = vmatpush1.msra.mxu0 0.0
    %3015 = vmatprep.subr.mxu0 0.0
    %3016 = vmatpush1.msra.mxu0 0.0
    %3017 = vmatprep.subr.mxu0 0.0
    %3018 = vmatpush1.msra.mxu0 0.0
    %3019 = vmatprep.subr.mxu0 0.0
    %3020 = vmatpush1.msra.mxu0 0.0
    %3021 = vmatprep.subr.mxu0 0.0
    %3022 = vmatpush1.msra.mxu0 0.0
    %3023 = vmatprep.subr.mxu0 0.0
    %3024 = vmatpush1.msra.mxu0 0.0
    %3025 = vmatprep.subr.mxu0 0.0
    %3026 = vmatpush1.msra.mxu0 0.0
    %3027 = vmatprep.subr.mxu0 0.0
    %3028 = vmatpush1.msra.mxu0 0.0
    %3029 = vmatprep.subr.mxu0 0.0
    %3030 = vmatpush1.msra.mxu0 0.0
    %3031 = vmatprep.subr.mxu0 0.0
    %3032 = vmatpush1.msra.mxu0 0.0
    %3033 = vmatprep.subr.mxu0 0.0
    %3034 = vmatpush1.msra.mxu0 0.0
    %3035 = vmatprep.subr.mxu0 0.0
    %3036 = vmatpush1.msra.mxu0 0.0
    %3037 = vmatprep.subr.mxu0 0.0
    %3038 = vmatpush1.msra.mxu0 0.0
    %3039 = vmatprep.subr.mxu0 0.0
    %3040 = vmatpush1.msra.mxu0 0.0
    %3041 = vmatprep.subr.mxu0 0.0
    %3042 = vmatpush1.msra.mxu0 0.0
    %3043 = vmatprep.mubr.f32.mxu0 0.0
    %3044 = vmatmul.mubr.f32.gmra.mrb[0].mxu0 %v2784
    %v3045 = vpop.f32.mrb[0].mxu0
    %v3046 = vadd.f32 0.0, %v3045
    %v3047 = vpop.f32.mrb[0].mxu0
    %3048 = vmatprep.mubr.f32.mxu0 0.0
    %3049 = vmatmul.mubr.f32.gmra.mrb[0].mxu0 %v2787
    %v3050 = vpop.f32.mrb[0].mxu0
    %v3051 = vadd.f32 0.0, %v3050
    %v3052 = vpop.f32.mrb[0].mxu0
    %3053 = vmatprep.mubr.f32.mxu0 0.0
    %3054 = vmatmul.mubr.f32.gmra.mrb[0].mxu0 %v2790
    %v3055 = vpop.f32.mrb[0].mxu0
    %v3056 = vadd.f32 0.0, %v3055
    %v3057 = vpop.f32.mrb[0].mxu0
    %3058 = vmatprep.mubr.f32.mxu0 0.0
    %3059 = vmatmul.mubr.f32.gmra.mrb[0].mxu0 %v2793
    %v3060 = vpop.f32.mrb[0].mxu0
    %v3061 = vadd.f32 0.0, %v3060
    %v3062 = vpop.f32.mrb[0].mxu0
    %3063 = vmatprep.mubr.f32.mxu0 0.0
    %3064 = vmatmul.mubr.f32.gmra.mrb[0].mxu0 %v2796
    %v3065 = vpop.f32.mrb[0].mxu0
    %v3066 = vadd.f32 0.0, %v3065
    %v3067 = vpop.f32.mrb[0].mxu0
    %3068 = vmatprep.mubr.f32.mxu0 0.0
    %3069 = vmatmul.mubr.f32.gmra.mrb[0].mxu0 %v2799
    %v3070 = vpop.f32.mrb[0].mxu0
    %v3071 = vadd.f32 0.0, %v3070
    %v3072 = vpop.f32.mrb[0].mxu0
    %3073 = vmatprep.mubr.f32.mxu0 0.0
    %3074 = vmatmul.mubr.f32.gmra.mrb[0].mxu0 %v2802
    %v3075 = vpop.f32.mrb[0].mxu0
    %v3076 = vadd.f32 0.0, %v3075
    %v3077 = vpop.f32.mrb[0].mxu0
    %3078 = vmatprep.mubr.f32.mxu0 0.0
    %3079 = vmatmul.mubr.f32.gmra.mrb[0].mxu0 %v2805
    %v3080 = vpop.f32.mrb[0].mxu0
    %v3081 = vadd.f32 0.0, %v3080
    %v3082 = vpop.f32.mrb[0].mxu0
    %3083 = vmatprep.mubr.f32.mxu0 0.0
    %3084 = vmatmul.mubr.f32.gmra.mrb[0].mxu0 %v2808
    %v3085 = vpop.f32.mrb[0].mxu0
    %v3086 = vadd.f32 0.0, %v3085
    %v3087 = vpop.f32.mrb[0].mxu0
    %3088 = vmatprep.mubr.f32.mxu0 0.0
    %3089 = vmatmul.mubr.f32.gmra.mrb[0].mxu0 %v2811
    %v3090 = vpop.f32.mrb[0].mxu0
    %v3091 = vadd.f32 0.0, %v3090
    %v3092 = vpop.f32.mrb[0].mxu0
    %3093 = vmatprep.mubr.f32.mxu0 0.0
    %3094 = vmatmul.mubr.f32.gmra.mrb[0].mxu0 %v2814
    %v3095 = vpop.f32.mrb[0].mxu0
    %v3096 = vadd.f32 0.0, %v3095
    %v3097 = vpop.f32.mrb[0].mxu0
    %3098 = vmatprep.mubr.f32.mxu0 0.0
    %3099 = vmatmul.mubr.f32.gmra.mrb[0].mxu0 %v2817
    %v3100 = vpop.f32.mrb[0].mxu0
    %v3101 = vadd.f32 0.0, %v3100
    %v3102 = vpop.f32.mrb[0].mxu0
    %3103 = vmatprep.mubr.f32.mxu0 0.0
    %3104 = vmatmul.mubr.f32.gmra.mrb[0].mxu0 %v2820
    %v3105 = vpop.f32.mrb[0].mxu0
    %v3106 = vadd.f32 0.0, %v3105
    %v3107 = vpop.f32.mrb[0].mxu0
    %3108 = vmatprep.mubr.f32.mxu0 0.0
    %3109 = vmatmul.mubr.f32.gmra.mrb[0].mxu0 %v2823
    %v3110 = vpop.f32.mrb[0].mxu0
    %v3111 = vadd.f32 0.0, %v3110
    %v3112 = vpop.f32.mrb[0].mxu0
    %3113 = vmatprep.mubr.f32.mxu0 0.0
    %3114 = vmatmul.mubr.f32.gmra.mrb[0].mxu0 %v2826
    %v3115 = vpop.f32.mrb[0].mxu0
    %v3116 = vadd.f32 0.0, %v3115
    %v3117 = vpop.f32.mrb[0].mxu0
    %3118 = vmatprep.mubr.f32.mxu0 0.0
    %3119 = vmatmul.mubr.f32.gmra.mrb[0].mxu0 %v2829
    %v3120 = vpop.f32.mrb[0].mxu0
    %v3121 = vadd.f32 0.0, %v3120
    %v3122 = vpop.f32.mrb[0].mxu0
    %3123 = vmatprep.mubr.f32.mxu0 0.0
    %3124 = vmatmul.mubr.f32.gmra.mrb[0].mxu0 %v2832
    %v3125 = vpop.f32.mrb[0].mxu0
    %v3126 = vadd.f32 0.0, %v3125
    %v3127 = vpop.f32.mrb[0].mxu0
    %3128 = vmatprep.mubr.f32.mxu0 0.0
    %3129 = vmatmul.mubr.f32.gmra.mrb[0].mxu0 %v2835
    %v3130 = vpop.f32.mrb[0].mxu0
    %v3131 = vadd.f32 0.0, %v3130
    %v3132 = vpop.f32.mrb[0].mxu0
    %3133 = vmatprep.mubr.f32.mxu0 0.0
    %3134 = vmatmul.mubr.f32.gmra.mrb[0].mxu0 %v2838
    %v3135 = vpop.f32.mrb[0].mxu0
    %v3136 = vadd.f32 0.0, %v3135
    %v3137 = vpop.f32.mrb[0].mxu0
    %3138 = vmatprep.mubr.f32.mxu0 0.0
    %3139 = vmatmul.mubr.f32.gmra.mrb[0].mxu0 %v2841
    %v3140 = vpop.f32.mrb[0].mxu0
    %v3141 = vadd.f32 0.0, %v3140
    %v3142 = vpop.f32.mrb[0].mxu0
    %3143 = vmatprep.mubr.f32.mxu0 0.0
    %3144 = vmatmul.mubr.f32.gmra.mrb[0].mxu0 %v2844
    %v3145 = vpop.f32.mrb[0].mxu0
    %v3146 = vadd.f32 0.0, %v3145
    %v3147 = vpop.f32.mrb[0].mxu0
    %3148 = vmatprep.mubr.f32.mxu0 0.0
    %3149 = vmatmul.mubr.f32.gmra.mrb[0].mxu0 %v2847
    %v3150 = vpop.f32.mrb[0].mxu0
    %v3151 = vadd.f32 0.0, %v3150
    %v3152 = vpop.f32.mrb[0].mxu0
    %3153 = vmatprep.mubr.f32.mxu0 0.0
    %3154 = vmatmul.mubr.f32.gmra.mrb[0].mxu0 %v2850
    %v3155 = vpop.f32.mrb[0].mxu0
    %v3156 = vadd.f32 0.0, %v3155
    %v3157 = vpop.f32.mrb[0].mxu0
    %3158 = vmatprep.mubr.f32.mxu0 0.0
    %3159 = vmatmul.mubr.f32.gmra.mrb[0].mxu0 %v2853
    %v3160 = vpop.f32.mrb[0].mxu0
    %v3161 = vadd.f32 0.0, %v3160
    %v3162 = vpop.f32.mrb[0].mxu0
    %3163 = vmatprep.mubr.f32.mxu0 0.0
    %3164 = vmatmul.mubr.f32.gmra.mrb[0].mxu0 %v2856
    %v3165 = vpop.f32.mrb[0].mxu0
    %v3166 = vadd.f32 0.0, %v3165
    %v3167 = vpop.f32.mrb[0].mxu0
    %3168 = vmatprep.mubr.f32.mxu0 0.0
    %3169 = vmatmul.mubr.f32.gmra.mrb[0].mxu0 %v2859
    %v3170 = vpop.f32.mrb[0].mxu0
    %v3171 = vadd.f32 0.0, %v3170
    %v3172 = vpop.f32.mrb[0].mxu0
    %3173 = vmatprep.mubr.f32.mxu0 0.0
    %3174 = vmatmul.mubr.f32.gmra.mrb[0].mxu0 %v2862
    %v3175 = vpop.f32.mrb[0].mxu0
    %v3176 = vadd.f32 0.0, %v3175
    %v3177 = vpop.f32.mrb[0].mxu0
    %3178 = vmatprep.mubr.f32.mxu0 0.0
    %3179 = vmatmul.mubr.f32.gmra.mrb[0].mxu0 %v2865
    %v3180 = vpop.f32.mrb[0].mxu0
    %v3181 = vadd.f32 0.0, %v3180
    %v3182 = vpop.f32.mrb[0].mxu0
    %3183 = vmatprep.mubr.f32.mxu0 0.0
    %3184 = vmatmul.mubr.f32.gmra.mrb[0].mxu0 %v2868
    %v3185 = vpop.f32.mrb[0].mxu0
    %v3186 = vadd.f32 0.0, %v3185
    %v3187 = vpop.f32.mrb[0].mxu0
    %3188 = vmatprep.mubr.f32.mxu0 0.0
    %3189 = vmatmul.mubr.f32.gmra.mrb[0].mxu0 %v2871
    %v3190 = vpop.f32.mrb[0].mxu0
    %v3191 = vadd.f32 0.0, %v3190
    %v3192 = vpop.f32.mrb[0].mxu0
    %3193 = vmatprep.mubr.f32.mxu0 0.0
    %3194 = vmatmul.mubr.f32.gmra.mrb[0].mxu0 %v2874
    %v3195 = vpop.f32.mrb[0].mxu0
    %v3196 = vadd.f32 0.0, %v3195
    %v3197 = vpop.f32.mrb[0].mxu0
    %3198 = vmatprep.mubr.f32.mxu0 0.0
    %3199 = vmatmul.mubr.f32.gmra.mrb[0].mxu0 %v2877
    %v3200 = vpop.f32.mrb[0].mxu0
    %v3201 = vadd.f32 0.0, %v3200
    %v3202 = vpop.f32.mrb[0].mxu0
    %3203 = vmatprep.mubr.f32.mxu0 0.0
    %3204 = vmatmul.mubr.f32.gmra.mrb[0].mxu0 %v2880
    %v3205 = vpop.f32.mrb[0].mxu0
    %v3206 = vadd.f32 0.0, %v3205
    %v3207 = vpop.f32.mrb[0].mxu0
    %3208 = vmatprep.mubr.f32.mxu0 0.0
    %3209 = vmatmul.mubr.f32.gmra.mrb[0].mxu0 %v2883
    %v3210 = vpop.f32.mrb[0].mxu0
    %v3211 = vadd.f32 0.0, %v3210
    %v3212 = vpop.f32.mrb[0].mxu0
    %3213 = vmatprep.mubr.f32.mxu0 0.0
    %3214 = vmatmul.mubr.f32.gmra.mrb[0].mxu0 %v2886
    %v3215 = vpop.f32.mrb[0].mxu0
    %v3216 = vadd.f32 0.0, %v3215
    %v3217 = vpop.f32.mrb[0].mxu0
    %3218 = vmatprep.mubr.f32.mxu0 0.0
    %3219 = vmatmul.mubr.f32.gmra.mrb[0].mxu0 %v2889
    %v3220 = vpop.f32.mrb[0].mxu0
    %v3221 = vadd.f32 0.0, %v3220
    %v3222 = vpop.f32.mrb[0].mxu0
    %3223 = vmatprep.mubr.f32.mxu0 0.0
    %3224 = vmatmul.mubr.f32.gmra.mrb[0].mxu0 %v2892
    %v3225 = vpop.f32.mrb[0].mxu0
    %v3226 = vadd.f32 0.0, %v3225
    %v3227 = vpop.f32.mrb[0].mxu0
    %3228 = vmatprep.mubr.f32.mxu0 0.0
    %3229 = vmatmul.mubr.f32.gmra.mrb[0].mxu0 %v2895
    %v3230 = vpop.f32.mrb[0].mxu0
    %v3231 = vadd.f32 0.0, %v3230
    %v3232 = vpop.f32.mrb[0].mxu0
    %3233 = vmatprep.mubr.f32.mxu0 0.0
    %3234 = vmatmul.mubr.f32.gmra.mrb[0].mxu0 %v2898
    %v3235 = vpop.f32.mrb[0].mxu0
    %v3236 = vadd.f32 0.0, %v3235
    %v3237 = vpop.f32.mrb[0].mxu0
    %3238 = vmatprep.mubr.f32.mxu0 0.0
    %3239 = vmatmul.mubr.f32.gmra.mrb[0].mxu0 %v2901
    %v3240 = vpop.f32.mrb[0].mxu0
    %v3241 = vadd.f32 0.0, %v3240
    %v3242 = vpop.f32.mrb[0].mxu0
    %3243 = vmatprep.mubr.f32.mxu0 0.0
    %3244 = vmatmul.mubr.f32.gmra.mrb[0].mxu0 %v2904
    %v3245 = vpop.f32.mrb[0].mxu0
    %v3246 = vadd.f32 0.0, %v3245
    %v3247 = vpop.f32.mrb[0].mxu0
    %3248 = vmatprep.mubr.f32.mxu0 0.0
    %3249 = vmatmul.mubr.f32.gmra.mrb[0].mxu0 %v2907
    %v3250 = vpop.f32.mrb[0].mxu0
    %v3251 = vadd.f32 0.0, %v3250
    %v3252 = vpop.f32.mrb[0].mxu0
    %3253 = vmatprep.mubr.f32.mxu0 0.0
    %3254 = vmatmul.mubr.f32.gmra.mrb[0].mxu0 %v2910
    %v3255 = vpop.f32.mrb[0].mxu0
    %v3256 = vadd.f32 0.0, %v3255
    %v3257 = vpop.f32.mrb[0].mxu0
    %3258 = vmatprep.mubr.f32.mxu0 0.0
    %3259 = vmatmul.mubr.f32.gmra.mrb[0].mxu0 %v2913
    %v3260 = vpop.f32.mrb[0].mxu0
    %v3261 = vadd.f32 0.0, %v3260
    %v3262 = vpop.f32.mrb[0].mxu0
    %3263 = vmatprep.mubr.f32.mxu0 0.0
    %3264 = vmatmul.mubr.f32.gmra.mrb[0].mxu0 %v2916
    %v3265 = vpop.f32.mrb[0].mxu0
    %v3266 = vadd.f32 0.0, %v3265
    %v3267 = vpop.f32.mrb[0].mxu0
    %3268 = vmatprep.mubr.f32.mxu0 0.0
    %3269 = vmatmul.mubr.f32.gmra.mrb[0].mxu0 %v2919
    %v3270 = vpop.f32.mrb[0].mxu0
    %v3271 = vadd.f32 0.0, %v3270
    %v3272 = vpop.f32.mrb[0].mxu0
    %3273 = vmatprep.mubr.f32.mxu0 0.0
    %3274 = vmatmul.mubr.f32.gmra.mrb[0].mxu0 %v2922
    %v3275 = vpop.f32.mrb[0].mxu0
    %v3276 = vadd.f32 0.0, %v3275
    %v3277 = vpop.f32.mrb[0].mxu0
    %3278 = vmatprep.mubr.f32.mxu0 0.0
    %3279 = vmatmul.mubr.f32.gmra.mrb[0].mxu0 %v2925
    %v3280 = vpop.f32.mrb[0].mxu0
    %v3281 = vadd.f32 0.0, %v3280
    %v3282 = vpop.f32.mrb[0].mxu0
    %3283 = vmatprep.mubr.f32.mxu0 0.0
    %3284 = vmatmul.mubr.f32.gmra.mrb[0].mxu0 %v2928
    %v3285 = vpop.f32.mrb[0].mxu0
    %v3286 = vadd.f32 0.0, %v3285
    %v3287 = vpop.f32.mrb[0].mxu0
    %3288 = vmatprep.mubr.f32.mxu0 0.0
    %3289 = vmatmul.mubr.f32.gmra.mrb[0].mxu0 %v2931
    %v3290 = vpop.f32.mrb[0].mxu0
    %v3291 = vadd.f32 0.0, %v3290
    %v3292 = vpop.f32.mrb[0].mxu0
    %3293 = vmatprep.mubr.f32.mxu0 0.0
    %3294 = vmatmul.mubr.f32.gmra.mrb[0].mxu0 %v2934
    %v3295 = vpop.f32.mrb[0].mxu0
    %v3296 = vadd.f32 0.0, %v3295
    %v3297 = vpop.f32.mrb[0].mxu0
    %3298 = vmatprep.mubr.f32.mxu0 0.0
    %3299 = vmatmul.mubr.f32.gmra.mrb[0].mxu0 %v2937
    %v3300 = vpop.f32.mrb[0].mxu0
    %v3301 = vadd.f32 0.0, %v3300
    %v3302 = vpop.f32.mrb[0].mxu0
    %3303 = vmatprep.mubr.f32.mxu0 0.0
    %3304 = vmatmul.mubr.f32.gmra.mrb[0].mxu0 %v2940
    %v3305 = vpop.f32.mrb[0].mxu0
    %v3306 = vadd.f32 0.0, %v3305
    %v3307 = vpop.f32.mrb[0].mxu0
    %3308 = vmatprep.mubr.f32.mxu0 0.0
    %3309 = vmatmul.mubr.f32.gmra.mrb[0].mxu0 %v2943
    %v3310 = vpop.f32.mrb[0].mxu0
    %v3311 = vadd.f32 0.0, %v3310
    %v3312 = vpop.f32.mrb[0].mxu0
    %3313 = vmatprep.mubr.f32.mxu0 0.0
    %3314 = vmatmul.mubr.f32.gmra.mrb[0].mxu0 %v2946
    %v3315 = vpop.f32.mrb[0].mxu0
    %v3316 = vadd.f32 0.0, %v3315
    %v3317 = vpop.f32.mrb[0].mxu0
    %3318 = vmatprep.mubr.f32.mxu0 0.0
    %3319 = vmatmul.mubr.f32.gmra.mrb[0].mxu0 %v2949
    %v3320 = vpop.f32.mrb[0].mxu0
    %v3321 = vadd.f32 0.0, %v3320
    %v3322 = vpop.f32.mrb[0].mxu0
    %3323 = vmatprep.mubr.f32.mxu0 0.0
    %3324 = vmatmul.mubr.f32.gmra.mrb[0].mxu0 %v2952
    %v3325 = vpop.f32.mrb[0].mxu0
    %v3326 = vadd.f32 0.0, %v3325
    %v3327 = vpop.f32.mrb[0].mxu0
    %3328 = vmatprep.mubr.f32.mxu0 0.0
    %3329 = vmatmul.mubr.f32.gmra.mrb[0].mxu0 %v2955
    %v3330 = vpop.f32.mrb[0].mxu0
    %v3331 = vadd.f32 0.0, %v3330
    %v3332 = vpop.f32.mrb[0].mxu0
    %3333 = vmatprep.mubr.f32.mxu0 0.0
    %3334 = vmatmul.mubr.f32.gmra.mrb[0].mxu0 %v2958
    %v3335 = vpop.f32.mrb[0].mxu0
    %v3336 = vadd.f32 0.0, %v3335
    %v3337 = vpop.f32.mrb[0].mxu0
    %3338 = vmatprep.mubr.f32.mxu0 0.0
    %3339 = vmatmul.mubr.f32.gmra.mrb[0].mxu0 %v2961
    %v3340 = vpop.f32.mrb[0].mxu0
    %v3341 = vadd.f32 0.0, %v3340
    %v3342 = vpop.f32.mrb[0].mxu0
    %3343 = vmatprep.mubr.f32.mxu0 0.0
    %3344 = vmatmul.mubr.f32.gmra.mrb[0].mxu0 %v2964
    %v3345 = vpop.f32.mrb[0].mxu0
    %v3346 = vadd.f32 0.0, %v3345
    %v3347 = vpop.f32.mrb[0].mxu0
    %3348 = vmatprep.mubr.f32.mxu0 0.0
    %3349 = vmatmul.mubr.f32.gmra.mrb[0].mxu0 %v2967
    %v3350 = vpop.f32.mrb[0].mxu0
    %v3351 = vadd.f32 0.0, %v3350
    %v3352 = vpop.f32.mrb[0].mxu0
    %3353 = vmatprep.mubr.f32.mxu0 0.0
    %3354 = vmatmul.mubr.f32.gmra.mrb[0].mxu0 %v2970
    %v3355 = vpop.f32.mrb[0].mxu0
    %v3356 = vadd.f32 0.0, %v3355
    %v3357 = vpop.f32.mrb[0].mxu0
    %3358 = vmatprep.mubr.f32.mxu0 0.0
    %3359 = vmatmul.mubr.f32.gmra.mrb[0].mxu0 %v2973
    %v3360 = vpop.f32.mrb[0].mxu0
    %v3361 = vadd.f32 0.0, %v3360
    %v3362 = vpop.f32.mrb[0].mxu0
    %3363 = vdwg.mxu0
    %vm3364 = vcmask 64512
    %3365 = vst.msk [vmem:[%s2] sm:$0xff] %vm3364, %v3046
    %3366 = vst.msk [vmem:[%s2 + $0x8] sm:$0xff] %vm3364, %v3051
    %3367 = vst.msk [vmem:[%s2 + $0x10] sm:$0xff] %vm3364, %v3056
    %3368 = vst.msk [vmem:[%s2 + $0x18] sm:$0xff] %vm3364, %v3061
    %3369 = vst.msk [vmem:[%s2 + $0x20] sm:$0xff] %vm3364, %v3066
    %3370 = vst.msk [vmem:[%s2 + $0x28] sm:$0xff] %vm3364, %v3071
    %3371 = vst.msk [vmem:[%s2 + $0x30] sm:$0xff] %vm3364, %v3076
    %3372 = vst.msk [vmem:[%s2 + $0x38] sm:$0xff] %vm3364, %v3081
    %3373 = vst.msk [vmem:[%s2 + $0x40] sm:$0xff] %vm3364, %v3086
    %3374 = vst.msk [vmem:[%s2 + $0x48] sm:$0xff] %vm3364, %v3091
    %3375 = vst.msk [vmem:[%s2 + $0x50] sm:$0xff] %vm3364, %v3096
    %3376 = vst.msk [vmem:[%s2 + $0x58] sm:$0xff] %vm3364, %v3101
    %3377 = vst.msk [vmem:[%s2 + $0x60] sm:$0xff] %vm3364, %v3106
    %3378 = vst.msk [vmem:[%s2 + $0x68] sm:$0xff] %vm3364, %v3111
    %3379 = vst.msk [vmem:[%s2 + $0x70] sm:$0xff] %vm3364, %v3116
    %3380 = vst.msk [vmem:[%s2 + $0x78] sm:$0xff] %vm3364, %v3121
    %3381 = vst.msk [vmem:[%s2 + $0x80] sm:$0xff] %vm3364, %v3126
    %3382 = vst.msk [vmem:[%s2 + $0x88] sm:$0xff] %vm3364, %v3131
    %3383 = vst.msk [vmem:[%s2 + $0x90] sm:$0xff] %vm3364, %v3136
    %3384 = vst.msk [vmem:[%s2 + $0x98] sm:$0xff] %vm3364, %v3141
    %3385 = vst.msk [vmem:[%s2 + $0xa0] sm:$0xff] %vm3364, %v3146
    %3386 = vst.msk [vmem:[%s2 + $0xa8] sm:$0xff] %vm3364, %v3151
    %3387 = vst.msk [vmem:[%s2 + $0xb0] sm:$0xff] %vm3364, %v3156
    %3388 = vst.msk [vmem:[%s2 + $0xb8] sm:$0xff] %vm3364, %v3161
    %3389 = vst.msk [vmem:[%s2 + $0xc0] sm:$0xff] %vm3364, %v3166
    %3390 = vst.msk [vmem:[%s2 + $0xc8] sm:$0xff] %vm3364, %v3171
    %3391 = vst.msk [vmem:[%s2 + $0xd0] sm:$0xff] %vm3364, %v3176
    %3392 = vst.msk [vmem:[%s2 + $0xd8] sm:$0xff] %vm3364, %v3181
    %3393 = vst.msk [vmem:[%s2 + $0xe0] sm:$0xff] %vm3364, %v3186
    %3394 = vst.msk [vmem:[%s2 + $0xe8] sm:$0xff] %vm3364, %v3191
    %3395 = vst.msk [vmem:[%s2 + $0xf0] sm:$0xff] %vm3364, %v3196
    %3396 = vst.msk [vmem:[%s2 + $0xf8] sm:$0xff] %vm3364, %v3201
    %3397 = vst.msk [vmem:[%s2 + $0x100] sm:$0xff] %vm3364, %v3206
    %3398 = vst.msk [vmem:[%s2 + $0x108] sm:$0xff] %vm3364, %v3211
    %3399 = vst.msk [vmem:[%s2 + $0x110] sm:$0xff] %vm3364, %v3216
    %3400 = vst.msk [vmem:[%s2 + $0x118] sm:$0xff] %vm3364, %v3221
    %3401 = vst.msk [vmem:[%s2 + $0x120] sm:$0xff] %vm3364, %v3226
    %3402 = vst.msk [vmem:[%s2 + $0x128] sm:$0xff] %vm3364, %v3231
    %3403 = vst.msk [vmem:[%s2 + $0x130] sm:$0xff] %vm3364, %v3236
    %3404 = vst.msk [vmem:[%s2 + $0x138] sm:$0xff] %vm3364, %v3241
    %3405 = vst.msk [vmem:[%s2 + $0x140] sm:$0xff] %vm3364, %v3246
    %3406 = vst.msk [vmem:[%s2 + $0x148] sm:$0xff] %vm3364, %v3251
    %3407 = vst.msk [vmem:[%s2 + $0x150] sm:$0xff] %vm3364, %v3256
    %3408 = vst.msk [vmem:[%s2 + $0x158] sm:$0xff] %vm3364, %v3261
    %3409 = vst.msk [vmem:[%s2 + $0x160] sm:$0xff] %vm3364, %v3266
    %3410 = vst.msk [vmem:[%s2 + $0x168] sm:$0xff] %vm3364, %v3271
    %3411 = vst.msk [vmem:[%s2 + $0x170] sm:$0xff] %vm3364, %v3276
    %3412 = vst.msk [vmem:[%s2 + $0x178] sm:$0xff] %vm3364, %v3281
    %3413 = vst.msk [vmem:[%s2 + $0x180] sm:$0xff] %vm3364, %v3286
    %3414 = vst.msk [vmem:[%s2 + $0x188] sm:$0xff] %vm3364, %v3291
    %3415 = vst.msk [vmem:[%s2 + $0x190] sm:$0xff] %vm3364, %v3296
    %3416 = vst.msk [vmem:[%s2 + $0x198] sm:$0xff] %vm3364, %v3301
    %3417 = vst.msk [vmem:[%s2 + $0x1a0] sm:$0xff] %vm3364, %v3306
    %3418 = vst.msk [vmem:[%s2 + $0x1a8] sm:$0xff] %vm3364, %v3311
    %3419 = vst.msk [vmem:[%s2 + $0x1b0] sm:$0xff] %vm3364, %v3316
    %3420 = vst.msk [vmem:[%s2 + $0x1b8] sm:$0xff] %vm3364, %v3321
    %3421 = vst.msk [vmem:[%s2 + $0x1c0] sm:$0xff] %vm3364, %v3326
    %3422 = vst.msk [vmem:[%s2 + $0x1c8] sm:$0xff] %vm3364, %v3331
    %3423 = vst.msk [vmem:[%s2 + $0x1d0] sm:$0xff] %vm3364, %v3336
    %3424 = vst.msk [vmem:[%s2 + $0x1d8] sm:$0xff] %vm3364, %v3341
    %3425 = vst.msk [vmem:[%s2 + $0x1e0] sm:$0xff] %vm3364, %v3346
    %3426 = vst.msk [vmem:[%s2 + $0x1e8] sm:$0xff] %vm3364, %v3351
    %3427 = vst.msk [vmem:[%s2 + $0x1f0] sm:$0xff] %vm3364, %v3356
    %3428 = vst.msk [vmem:[%s2 + $0x1f8] sm:$0xff] %vm3364, %v3361
    %v3429 = vsel %vm3364, %v3046, 0.0
    %v3430 = vsel %vm3364, %v3051, 0.0
    %v3431 = vadd.f32 %v3429, %v3430
    %v3432 = vsel %vm3364, %v3056, 0.0
    %v3433 = vadd.f32 %v3431, %v3432
    %v3434 = vsel %vm3364, %v3061, 0.0
    %v3435 = vadd.f32 %v3433, %v3434
    %v3436 = vsel %vm3364, %v3066, 0.0
    %v3437 = vadd.f32 %v3435, %v3436
    %v3438 = vsel %vm3364, %v3071, 0.0
    %v3439 = vadd.f32 %v3437, %v3438
    %v3440 = vsel %vm3364, %v3076, 0.0
    %v3441 = vadd.f32 %v3439, %v3440
    %v3442 = vsel %vm3364, %v3081, 0.0
    %v3443 = vadd.f32 %v3441, %v3442
    %v3444 = vsel %vm3364, %v3086, 0.0
    %v3445 = vadd.f32 %v3443, %v3444
    %v3446 = vsel %vm3364, %v3091, 0.0
    %v3447 = vadd.f32 %v3445, %v3446
    %v3448 = vsel %vm3364, %v3096, 0.0
    %v3449 = vadd.f32 %v3447, %v3448
    %v3450 = vsel %vm3364, %v3101, 0.0
    %v3451 = vadd.f32 %v3449, %v3450
    %v3452 = vsel %vm3364, %v3106, 0.0
    %v3453 = vadd.f32 %v3451, %v3452
    %v3454 = vsel %vm3364, %v3111, 0.0
    %v3455 = vadd.f32 %v3453, %v3454
    %v3456 = vsel %vm3364, %v3116, 0.0
    %v3457 = vadd.f32 %v3455, %v3456
    %v3458 = vsel %vm3364, %v3121, 0.0
    %v3459 = vadd.f32 %v3457, %v3458
    %v3460 = vsel %vm3364, %v3126, 0.0
    %v3461 = vadd.f32 %v3459, %v3460
    %v3462 = vsel %vm3364, %v3131, 0.0
    %v3463 = vadd.f32 %v3461, %v3462
    %v3464 = vsel %vm3364, %v3136, 0.0
    %v3465 = vadd.f32 %v3463, %v3464
    %v3466 = vsel %vm3364, %v3141, 0.0
    %v3467 = vadd.f32 %v3465, %v3466
    %v3468 = vsel %vm3364, %v3146, 0.0
    %v3469 = vadd.f32 %v3467, %v3468
    %v3470 = vsel %vm3364, %v3151, 0.0
    %v3471 = vadd.f32 %v3469, %v3470
    %v3472 = vsel %vm3364, %v3156, 0.0
    %v3473 = vadd.f32 %v3471, %v3472
    %v3474 = vsel %vm3364, %v3161, 0.0
    %v3475 = vadd.f32 %v3473, %v3474
    %v3476 = vsel %vm3364, %v3166, 0.0
    %v3477 = vadd.f32 %v3475, %v3476
    %v3478 = vsel %vm3364, %v3171, 0.0
    %v3479 = vadd.f32 %v3477, %v3478
    %v3480 = vsel %vm3364, %v3176, 0.0
    %v3481 = vadd.f32 %v3479, %v3480
    %v3482 = vsel %vm3364, %v3181, 0.0
    %v3483 = vadd.f32 %v3481, %v3482
    %v3484 = vsel %vm3364, %v3186, 0.0
    %v3485 = vadd.f32 %v3483, %v3484
    %v3486 = vsel %vm3364, %v3191, 0.0
    %v3487 = vadd.f32 %v3485, %v3486
    %v3488 = vsel %vm3364, %v3196, 0.0
    %v3489 = vadd.f32 %v3487, %v3488
    %v3490 = vsel %vm3364, %v3201, 0.0
    %v3491 = vadd.f32 %v3489, %v3490
    %v3492 = vsel %vm3364, %v3206, 0.0
    %v3493 = vadd.f32 %v3491, %v3492
    %v3494 = vsel %vm3364, %v3211, 0.0
    %v3495 = vadd.f32 %v3493, %v3494
    %v3496 = vsel %vm3364, %v3216, 0.0
    %v3497 = vadd.f32 %v3495, %v3496
    %v3498 = vsel %vm3364, %v3221, 0.0
    %v3499 = vadd.f32 %v3497, %v3498
    %v3500 = vsel %vm3364, %v3226, 0.0
    %v3501 = vadd.f32 %v3499, %v3500
    %v3502 = vsel %vm3364, %v3231, 0.0
    %v3503 = vadd.f32 %v3501, %v3502
    %v3504 = vsel %vm3364, %v3236, 0.0
    %v3505 = vadd.f32 %v3503, %v3504
    %v3506 = vsel %vm3364, %v3241, 0.0
    %v3507 = vadd.f32 %v3505, %v3506
    %v3508 = vsel %vm3364, %v3246, 0.0
    %v3509 = vadd.f32 %v3507, %v3508
    %v3510 = vsel %vm3364, %v3251, 0.0
    %v3511 = vadd.f32 %v3509, %v3510
    %v3512 = vsel %vm3364, %v3256, 0.0
    %v3513 = vadd.f32 %v3511, %v3512
    %v3514 = vsel %vm3364, %v3261, 0.0
    %v3515 = vadd.f32 %v3513, %v3514
    %v3516 = vsel %vm3364, %v3266, 0.0
    %v3517 = vadd.f32 %v3515, %v3516
    %v3518 = vsel %vm3364, %v3271, 0.0
    %v3519 = vadd.f32 %v3517, %v3518
    %v3520 = vsel %vm3364, %v3276, 0.0
    %v3521 = vadd.f32 %v3519, %v3520
    %v3522 = vsel %vm3364, %v3281, 0.0
    %v3523 = vadd.f32 %v3521, %v3522
    %v3524 = vsel %vm3364, %v3286, 0.0
    %v3525 = vadd.f32 %v3523, %v3524
    %v3526 = vsel %vm3364, %v3291, 0.0
    %v3527 = vadd.f32 %v3525, %v3526
    %v3528 = vsel %vm3364, %v3296, 0.0
    %v3529 = vadd.f32 %v3527, %v3528
    %v3530 = vsel %vm3364, %v3301, 0.0
    %v3531 = vadd.f32 %v3529, %v3530
    %v3532 = vsel %vm3364, %v3306, 0.0
    %v3533 = vadd.f32 %v3531, %v3532
    %v3534 = vsel %vm3364, %v3311, 0.0
    %v3535 = vadd.f32 %v3533, %v3534
    %v3536 = vsel %vm3364, %v3316, 0.0
    %v3537 = vadd.f32 %v3535, %v3536
    %v3538 = vsel %vm3364, %v3321, 0.0
    %v3539 = vadd.f32 %v3537, %v3538
    %v3540 = vsel %vm3364, %v3326, 0.0
    %v3541 = vadd.f32 %v3539, %v3540
    %v3542 = vsel %vm3364, %v3331, 0.0
    %v3543 = vadd.f32 %v3541, %v3542
    %v3544 = vsel %vm3364, %v3336, 0.0
    %v3545 = vadd.f32 %v3543, %v3544
    %v3546 = vsel %vm3364, %v3341, 0.0
    %v3547 = vadd.f32 %v3545, %v3546
    %v3548 = vsel %vm3364, %v3346, 0.0
    %v3549 = vadd.f32 %v3547, %v3548
    %v3550 = vsel %vm3364, %v3351, 0.0
    %v3551 = vadd.f32 %v3549, %v3550
    %v3552 = vsel %vm3364, %v3356, 0.0
    %v3553 = vadd.f32 %v3551, %v3552
    %v3554 = vsel %vm3364, %v3361, 0.0
    %v3555 = vadd.f32 %v3553, %v3554
    %v3556 = vrot.slane %v3555, 4
    %v3557 = vadd.f32 %v3555, %v3556
    %v3558 = vrot.slane %v3557, 2
    %v3559 = vadd.f32 %v3557, %v3558
    %v3560 = vrot.slane %v3559, 1
    %v3561 = vadd.f32 %v3559, %v3560
    %v3562 = vmul.f32 %v3046, %v3046
    %v3563 = vmul.f32 %v3051, %v3051
    %v3564 = vmul.f32 %v3056, %v3056
    %v3565 = vmul.f32 %v3061, %v3061
    %v3566 = vmul.f32 %v3066, %v3066
    %v3567 = vmul.f32 %v3071, %v3071
    %v3568 = vmul.f32 %v3076, %v3076
    %v3569 = vmul.f32 %v3081, %v3081
    %v3570 = vmul.f32 %v3086, %v3086
    %v3571 = vmul.f32 %v3091, %v3091
    %v3572 = vmul.f32 %v3096, %v3096
    %v3573 = vmul.f32 %v3101, %v3101
    %v3574 = vmul.f32 %v3106, %v3106
    %v3575 = vmul.f32 %v3111, %v3111
    %v3576 = vmul.f32 %v3116, %v3116
    %v3577 = vmul.f32 %v3121, %v3121
    %v3578 = vmul.f32 %v3126, %v3126
    %v3579 = vmul.f32 %v3131, %v3131
    %v3580 = vmul.f32 %v3136, %v3136
    %v3581 = vmul.f32 %v3141, %v3141
    %v3582 = vmul.f32 %v3146, %v3146
    %v3583 = vmul.f32 %v3151, %v3151
    %v3584 = vmul.f32 %v3156, %v3156
    %v3585 = vmul.f32 %v3161, %v3161
    %v3586 = vmul.f32 %v3166, %v3166
    %v3587 = vmul.f32 %v3171, %v3171
    %v3588 = vmul.f32 %v3176, %v3176
    %v3589 = vmul.f32 %v3181, %v3181
    %v3590 = vmul.f32 %v3186, %v3186
    %v3591 = vmul.f32 %v3191, %v3191
    %v3592 = vmul.f32 %v3196, %v3196
    %v3593 = vmul.f32 %v3201, %v3201
    %v3594 = vmul.f32 %v3206, %v3206
    %v3595 = vmul.f32 %v3211, %v3211
    %v3596 = vmul.f32 %v3216, %v3216
    %v3597 = vmul.f32 %v3221, %v3221
    %v3598 = vmul.f32 %v3226, %v3226
    %v3599 = vmul.f32 %v3231, %v3231
    %v3600 = vmul.f32 %v3236, %v3236
    %v3601 = vmul.f32 %v3241, %v3241
    %v3602 = vmul.f32 %v3246, %v3246
    %v3603 = vmul.f32 %v3251, %v3251
    %v3604 = vmul.f32 %v3256, %v3256
    %v3605 = vmul.f32 %v3261, %v3261
    %v3606 = vmul.f32 %v3266, %v3266
    %v3607 = vmul.f32 %v3271, %v3271
    %v3608 = vmul.f32 %v3276, %v3276
    %v3609 = vmul.f32 %v3281, %v3281
    %v3610 = vmul.f32 %v3286, %v3286
    %v3611 = vmul.f32 %v3291, %v3291
    %v3612 = vmul.f32 %v3296, %v3296
    %v3613 = vmul.f32 %v3301, %v3301
    %v3614 = vmul.f32 %v3306, %v3306
    %v3615 = vmul.f32 %v3311, %v3311
    %v3616 = vmul.f32 %v3316, %v3316
    %v3617 = vmul.f32 %v3321, %v3321
    %v3618 = vmul.f32 %v3326, %v3326
    %v3619 = vmul.f32 %v3331, %v3331
    %v3620 = vmul.f32 %v3336, %v3336
    %v3621 = vmul.f32 %v3341, %v3341
    %v3622 = vmul.f32 %v3346, %v3346
    %v3623 = vmul.f32 %v3351, %v3351
    %v3624 = vmul.f32 %v3356, %v3356
    %v3625 = vmul.f32 %v3361, %v3361
    %v3626 = vsel %vm3364, %v3562, 0.0
    %v3627 = vsel %vm3364, %v3563, 0.0
    %v3628 = vadd.f32 %v3626, %v3627
    %v3629 = vsel %vm3364, %v3564, 0.0
    %v3630 = vadd.f32 %v3628, %v3629
    %v3631 = vsel %vm3364, %v3565, 0.0
    %v3632 = vadd.f32 %v3630, %v3631
    %v3633 = vsel %vm3364, %v3566, 0.0
    %v3634 = vadd.f32 %v3632, %v3633
    %v3635 = vsel %vm3364, %v3567, 0.0
    %v3636 = vadd.f32 %v3634, %v3635
    %v3637 = vsel %vm3364, %v3568, 0.0
    %v3638 = vadd.f32 %v3636, %v3637
    %v3639 = vsel %vm3364, %v3569, 0.0
    %v3640 = vadd.f32 %v3638, %v3639
    %v3641 = vsel %vm3364, %v3570, 0.0
    %v3642 = vadd.f32 %v3640, %v3641
    %v3643 = vsel %vm3364, %v3571, 0.0
    %v3644 = vadd.f32 %v3642, %v3643
    %v3645 = vsel %vm3364, %v3572, 0.0
    %v3646 = vadd.f32 %v3644, %v3645
    %v3647 = vsel %vm3364, %v3573, 0.0
    %v3648 = vadd.f32 %v3646, %v3647
    %v3649 = vsel %vm3364, %v3574, 0.0
    %v3650 = vadd.f32 %v3648, %v3649
    %v3651 = vsel %vm3364, %v3575, 0.0
    %v3652 = vadd.f32 %v3650, %v3651
    %v3653 = vsel %vm3364, %v3576, 0.0
    %v3654 = vadd.f32 %v3652, %v3653
    %v3655 = vsel %vm3364, %v3577, 0.0
    %v3656 = vadd.f32 %v3654, %v3655
    %v3657 = vsel %vm3364, %v3578, 0.0
    %v3658 = vadd.f32 %v3656, %v3657
    %v3659 = vsel %vm3364, %v3579, 0.0
    %v3660 = vadd.f32 %v3658, %v3659
    %v3661 = vsel %vm3364, %v3580, 0.0
    %v3662 = vadd.f32 %v3660, %v3661
    %v3663 = vsel %vm3364, %v3581, 0.0
    %v3664 = vadd.f32 %v3662, %v3663
    %v3665 = vsel %vm3364, %v3582, 0.0
    %v3666 = vadd.f32 %v3664, %v3665
    %v3667 = vsel %vm3364, %v3583, 0.0
    %v3668 = vadd.f32 %v3666, %v3667
    %v3669 = vsel %vm3364, %v3584, 0.0
    %v3670 = vadd.f32 %v3668, %v3669
    %v3671 = vsel %vm3364, %v3585, 0.0
    %v3672 = vadd.f32 %v3670, %v3671
    %v3673 = vsel %vm3364, %v3586, 0.0
    %v3674 = vadd.f32 %v3672, %v3673
    %v3675 = vsel %vm3364, %v3587, 0.0
    %v3676 = vadd.f32 %v3674, %v3675
    %v3677 = vsel %vm3364, %v3588, 0.0
    %v3678 = vadd.f32 %v3676, %v3677
    %v3679 = vsel %vm3364, %v3589, 0.0
    %v3680 = vadd.f32 %v3678, %v3679
    %v3681 = vsel %vm3364, %v3590, 0.0
    %v3682 = vadd.f32 %v3680, %v3681
    %v3683 = vsel %vm3364, %v3591, 0.0
    %v3684 = vadd.f32 %v3682, %v3683
    %v3685 = vsel %vm3364, %v3592, 0.0
    %v3686 = vadd.f32 %v3684, %v3685
    %v3687 = vsel %vm3364, %v3593, 0.0
    %v3688 = vadd.f32 %v3686, %v3687
    %v3689 = vsel %vm3364, %v3594, 0.0
    %v3690 = vadd.f32 %v3688, %v3689
    %v3691 = vsel %vm3364, %v3595, 0.0
    %v3692 = vadd.f32 %v3690, %v3691
    %v3693 = vsel %vm3364, %v3596, 0.0
    %v3694 = vadd.f32 %v3692, %v3693
    %v3695 = vsel %vm3364, %v3597, 0.0
    %v3696 = vadd.f32 %v3694, %v3695
    %v3697 = vsel %vm3364, %v3598, 0.0
    %v3698 = vadd.f32 %v3696, %v3697
    %v3699 = vsel %vm3364, %v3599, 0.0
    %v3700 = vadd.f32 %v3698, %v3699
    %v3701 = vsel %vm3364, %v3600, 0.0
    %v3702 = vadd.f32 %v3700, %v3701
    %v3703 = vsel %vm3364, %v3601, 0.0
    %v3704 = vadd.f32 %v3702, %v3703
    %v3705 = vsel %vm3364, %v3602, 0.0
    %v3706 = vadd.f32 %v3704, %v3705
    %v3707 = vsel %vm3364, %v3603, 0.0
    %v3708 = vadd.f32 %v3706, %v3707
    %v3709 = vsel %vm3364, %v3604, 0.0
    %v3710 = vadd.f32 %v3708, %v3709
    %v3711 = vsel %vm3364, %v3605, 0.0
    %v3712 = vadd.f32 %v3710, %v3711
    %v3713 = vsel %vm3364, %v3606, 0.0
    %v3714 = vadd.f32 %v3712, %v3713
    %v3715 = vsel %vm3364, %v3607, 0.0
    %v3716 = vadd.f32 %v3714, %v3715
    %v3717 = vsel %vm3364, %v3608, 0.0
    %v3718 = vadd.f32 %v3716, %v3717
    %v3719 = vsel %vm3364, %v3609, 0.0
    %v3720 = vadd.f32 %v3718, %v3719
    %v3721 = vsel %vm3364, %v3610, 0.0
    %v3722 = vadd.f32 %v3720, %v3721
    %v3723 = vsel %vm3364, %v3611, 0.0
    %v3724 = vadd.f32 %v3722, %v3723
    %v3725 = vsel %vm3364, %v3612, 0.0
    %v3726 = vadd.f32 %v3724, %v3725
    %v3727 = vsel %vm3364, %v3613, 0.0
    %v3728 = vadd.f32 %v3726, %v3727
    %v3729 = vsel %vm3364, %v3614, 0.0
    %v3730 = vadd.f32 %v3728, %v3729
    %v3731 = vsel %vm3364, %v3615, 0.0
    %v3732 = vadd.f32 %v3730, %v3731
    %v3733 = vsel %vm3364, %v3616, 0.0
    %v3734 = vadd.f32 %v3732, %v3733
    %v3735 = vsel %vm3364, %v3617, 0.0
    %v3736 = vadd.f32 %v3734, %v3735
    %v3737 = vsel %vm3364, %v3618, 0.0
    %v3738 = vadd.f32 %v3736, %v3737
    %v3739 = vsel %vm3364, %v3619, 0.0
    %v3740 = vadd.f32 %v3738, %v3739
    %v3741 = vsel %vm3364, %v3620, 0.0
    %v3742 = vadd.f32 %v3740, %v3741
    %v3743 = vsel %vm3364, %v3621, 0.0
    %v3744 = vadd.f32 %v3742, %v3743
    %v3745 = vsel %vm3364, %v3622, 0.0
    %v3746 = vadd.f32 %v3744, %v3745
    %v3747 = vsel %vm3364, %v3623, 0.0
    %v3748 = vadd.f32 %v3746, %v3747
    %v3749 = vsel %vm3364, %v3624, 0.0
    %v3750 = vadd.f32 %v3748, %v3749
    %v3751 = vsel %vm3364, %v3625, 0.0
    %v3752 = vadd.f32 %v3750, %v3751
    %v3753 = vrot.slane %v3752, 4
    %v3754 = vadd.f32 %v3752, %v3753
    %v3755 = vrot.slane %v3754, 2
    %v3756 = vadd.f32 %v3754, %v3755
    %v3757 = vrot.slane %v3756, 1
    %v3758 = vadd.f32 %v3756, %v3757
    %vm3759 = vcmask 1040384
    %v3760 = vsel %vm3759, %v3561, %v3758
    %vm3761 = vcmask 58368
    %3762 = vst.msk [vmem:[#allocation3] sm:$0x3] %vm3761, %v3760
    // Predicated region
    $region10: #{tpu_custom_call.1} parent=1 // pred_check
      _
    $region11: #{tpu_custom_call.1} parent=1 // pred_check_branch
      %3764 = sbr.rel (0) target = $region13
    $region12: #{tpu_custom_call.1} parent=1 // pred_region
      _
    $region13: #{tpu_custom_call.1} parent=1 // pred_fallthru
      _
    // Predicated region
    $region14: #{tpu_custom_call.1} parent=1 // pred_check
      _
    $region15: #{tpu_custom_call.1} parent=1 // pred_check_branch
      %3766 = sbr.rel (0) target = $region17
    $region16: #{tpu_custom_call.1} parent=1 // pred_region
      %s3768 = ssub.s32 32, 32
      %3769 = vsyncadd [#allocation4], %s3768
      %s3771 = sshll.u32 [#allocation3], 4
      %s3772 = int_to_ptr.vmem [resolvable:$true] %s3771
      %3774 = dma.vmem_to_hbm [thread:$0]  %s3772, 32, %s3, [#allocation4]
    $region17: #{tpu_custom_call.1} parent=1 // pred_fallthru
      _
    // Predicated region
    $region18: #{tpu_custom_call.1} parent=1 // pred_check
      _
    $region19: #{tpu_custom_call.1} parent=1 // pred_check_branch
      %3776 = sbr.rel (0) target = $region21
    $region20: #{tpu_custom_call.1} parent=1 // pred_region
      _
    $region21: #{tpu_custom_call.1} parent=1 // pred_fallthru
      _
    // Predicated region
    $region22: #{tpu_custom_call.1} parent=1 // pred_check
      _
    $region23: #{tpu_custom_call.1} parent=1 // pred_check_branch
      %3778 = sbr.rel (0) target = $region25
    $region24: #{tpu_custom_call.1} parent=1 // pred_region
      %3779 = dma.done [#allocation4], 32
    $region25: #{tpu_custom_call.1} parent=1 // pred_fallthru
      _
    %3780 = vsyncpa [#allocation4], 1

</llo_original>
